<compile_context>
chip_gen: v6e
topology: v6e:2x2x1
jax: 0.10.0
libtpu: 0.0.40
codegen_flags: <defaults>
</compile_context>

<pallas_src>
import functools

import jax
import jax.numpy as jnp
from jax import lax
from jax.experimental import pallas as pl
from jax.experimental.pallas import tpu as pltpu

_LANE = 128
_EPS = 1e-5            # torch.nn.BatchNorm2d default
_TARGET_CHUNK_M = 128  # ~output pixels per accumulator chunk (keeps the f32 acc in vregs)


def _round_up(x, m):
    return (x + m - 1) // m * m


def _vmem_capacity_bytes():
    try:
        return int(pltpu.get_tpu_info().vmem_capacity_bytes)
    except Exception:
        return 64 << 20  # conservative: v7x per-TensorCore VMEM


# ----------------------------------------------------------------------------
# In-kernel building blocks
# ----------------------------------------------------------------------------
def _conv_stage(read_tap, n_taps, w_ref, b_ref, write_out, n_rows, wo, cout_p, chunk_rows):
    """One 3x3-conv(+folded-BN bias+ReLU) stage, chunked over output rows.

    read_tap(t, r0, ch) -> (ch*wo, K) bf16 operand for tap t, output rows [r0, r0+ch).
    write_out(r0, ch, y)   stores the (ch*wo, cout_p) f32 post-ReLU chunk.

    The per-chunk accumulator is initialized with the bias and sized (~_TARGET_CHUNK_M rows)
    so it stays vreg-resident across the unrolled tap matmuls (no full-size SSA chain).
    """
    bias = b_ref[...]  # (1, cout_p) f32

    def do_chunk(r0, ch):
        m = ch * wo
        acc = jnp.broadcast_to(bias, (m, cout_p))
        for t in range(n_taps):
            acc = acc + jnp.dot(read_tap(t, r0, ch), w_ref[t],
                                preferred_element_type=jnp.float32)
        write_out(r0, ch, jnp.maximum(acc, 0.0))

    n_full = n_rows // chunk_rows
    if n_full == 1:
        do_chunk(0, chunk_rows)
    elif n_full > 1:
        def body(ci, carry):
            do_chunk(ci * chunk_rows, chunk_rows)
            return carry
        lax.fori_loop(0, n_full, body, 0)
    rem = n_rows - n_full * chunk_rows
    if rem:
        do_chunk(n_full * chunk_rows, rem)


def _finish_stage1_slabs(y1s_ref):
    """Zero the 1-pixel halo of the center slab and build the two width-shifted slabs.

    y1s_ref: (3, Ho+2, Wo, C1p) bf16 with slab[dw][i, w] == y1_zeropad[i, w+dw], so a stage-2
    tap (dh, dw) for output rows [r0, r0+ch) is slab[dw][r0+dh : r0+dh+ch] — a free
    major-axis slice.  Only O(perimeter) elements are zeroed and only two misaligned
    sublane copies happen per grid step.
    """
    _, hh, wo, c1p = y1s_ref.shape
    zrow = jnp.zeros((1, wo, c1p), y1s_ref.dtype)
    y1s_ref[1, pl.ds(0, 1), :, :] = zrow
    y1s_ref[1, pl.ds(hh - 1, 1), :, :] = zrow
    zcol = jnp.zeros((hh, 1, c1p), y1s_ref.dtype)
    # slab 0: y1 shifted right by one column (zero first column)
    y1s_ref[0, :, pl.ds(1, wo - 1), :] = y1s_ref[1, :, pl.ds(0, wo - 1), :]
    y1s_ref[0, :, pl.ds(0, 1), :] = zcol
    # slab 2: y1 shifted left by one column (zero last column)
    y1s_ref[2, :, pl.ds(0, wo - 1), :] = y1s_ref[1, :, pl.ds(1, wo - 1), :]
    y1s_ref[2, :, pl.ds(wo - 1, 1), :] = zcol


def _stage2(y1s_ref, w2_ref, b2_ref, o_ref, chunk_rows):
    _, Ho, Wo, C2p = o_ref.shape
    C1p = y1s_ref.shape[-1]

    def read2(t, r0, ch):
        dh, dw = divmod(t, 3)
        return y1s_ref[dw, pl.ds(r0 + dh, ch), :, :].reshape(ch * Wo, C1p)

    def write2(r0, ch, y):
        o_ref[0, pl.ds(r0, ch), :, :] = y.reshape(ch, Wo, C2p).astype(o_ref.dtype)

    _conv_stage(read2, 9, w2_ref, b2_ref, write2, Ho, Wo, C2p, chunk_rows)


def _block_kernel_slab(x_ref, w1_ref, b1_ref, w2_ref, b2_ref, o_ref,
                       y1s_ref, *, n_taps, chunk_rows):
    """Stage-1 input arrives as n_taps row-stacked slabs: x_ref = (1, n_taps*Ho, Wo, Kp).

    Used for (a) the small-Cin im2col path (n_taps==1, K=9*Cin) and (b) stride>1, where the
    wrapper pre-decimates the taps so no strided sublane reads happen in-kernel.
    """
    _, Ho, Wo, C2p = o_ref.shape
    C1p = y1s_ref.shape[-1]
    Kp = x_ref.shape[-1]

    def read1(t, r0, ch):
        return x_ref[0, pl.ds(t * Ho + r0, ch), :, :].reshape(ch * Wo, Kp)

    def write1(r0, ch, y):
        y1s_ref[1, pl.ds(r0 + 1, ch), :, :] = y.reshape(ch, Wo, C1p).astype(y1s_ref.dtype)

    _conv_stage(read1, n_taps, w1_ref, b1_ref, write1, Ho, Wo, C1p, chunk_rows)
    _finish_stage1_slabs(y1s_ref)
    _stage2(y1s_ref, w2_ref, b2_ref, o_ref, chunk_rows)


def _block_kernel_shift(x_ref, w1_ref, b1_ref, w2_ref, b2_ref, o_ref,
                        xs_ref, y1s_ref, *, chunk_rows):
    """Stride-1 / larger-Cin path: x_ref = (1, Hp, Wp, Cinp) spatially padded image.

    The three width-shifted input slabs are built once per grid step (the only misaligned
    sublane reads of stage 1); every per-chunk tap read is then a major-axis slice.
    """
    _, Ho, Wo, C2p = o_ref.shape
    C1p = y1s_ref.shape[-1]
    Cinp = x_ref.shape[-1]

    for dw in range(3):
        xs_ref[dw, :, :, :] = x_ref[0, :, pl.ds(dw, Wo), :]

    def read1(t, r0, ch):
        dh, dw = divmod(t, 3)
        return xs_ref[dw, pl.ds(r0 + dh, ch), :, :].reshape(ch * Wo, Cinp)

    def write1(r0, ch, y):
        y1s_ref[1, pl.ds(r0 + 1, ch), :, :] = y.reshape(ch, Wo, C1p).astype(y1s_ref.dtype)

    _conv_stage(read1, 9, w1_ref, b1_ref, write1, Ho, Wo, C1p, chunk_rows)
    _finish_stage1_slabs(y1s_ref)
    _stage2(y1s_ref, w2_ref, b2_ref, o_ref, chunk_rows)


# ----------------------------------------------------------------------------
# Wrapper glue: BN folding, input layout, pallas_call
# ----------------------------------------------------------------------------
def _fold_conv_bn(w_oihw, conv_b, gamma, beta, mean, var, cout_p, *, pack_taps_into_k):
    """Fold eval-mode BN into the conv weight/bias; tap-major, channel-padded, bf16 weight."""
    cout, cin, kh, kw = w_oihw.shape
    scale = gamma / jnp.sqrt(var + _EPS)
    w = jnp.transpose(w_oihw, (2, 3, 1, 0)).reshape(kh * kw, cin, cout) * scale[None, None, :]
    if pack_taps_into_k:                       # (1, round_up(9*cin), cout_p)
        k = kh * kw * cin
        k_p = _round_up(k, _LANE)
        w = jnp.pad(w.reshape(k, cout), ((0, k_p - k), (0, cout_p - cout)))
        w = w.reshape(1, k_p, cout_p)
    else:                                      # (9, round_up(cin), cout_p)
        cin_p = _round_up(cin, _LANE)
        w = jnp.pad(w, ((0, 0), (0, cin_p - cin), (0, cout_p - cout)))
    b = (conv_b - mean) * scale + beta
    b = jnp.pad(b, (0, cout_p - cout)).reshape(1, cout_p)
    return w.astype(jnp.bfloat16), b.astype(jnp.float32)


@functools.partial(jax.jit, static_argnames=("stride",))
def plainnet_basic_block_forward(params, x_nchw, stride=1):
    """Forward pass matching the PyTorch module (eval-mode BN).  NCHW in, NCHW out."""
    N, Cin, H, W = x_nchw.shape
    C1 = params["conv1_w"].shape[0]
    C2 = params["conv2_w"].shape[0]
    C1_p = _round_up(C1, _LANE)
    C2_p = _round_up(C2, _LANE)
    Hp, Wp = H + 2, W + 2
    Ho = (H + 2 - 3) // stride + 1
    Wo = (W + 2 - 3) // stride + 1
    assert Ho >= 1 and Wo >= 2, "degenerate spatial size"
    # TODO(synk): if Wo is not a multiple of 8 the in-kernel (rows, Wo, C)->(rows*Wo, C)
    #             merges trigger relayouts; pad W in the wrapper for such shapes.

    # NCHW -> NHWC, cast to bf16 BEFORE padding, spatial pad = 1 for conv1.
    x = jnp.transpose(x_nchw, (0, 2, 3, 1)).astype(jnp.bfloat16)
    x_pad = jnp.pad(x, ((0, 0), (1, 1), (1, 1), (0, 0)))

    def tap(dh, dw):  # decimated (N, Ho, Wo, Cin) view of conv1 tap (dh, dw)
        return x_pad[:, dh:dh + (Ho - 1) * stride + 1:stride,
                     dw:dw + (Wo - 1) * stride + 1:stride, :]

    small_cin = 9 * Cin <= _LANE
    if small_cin:
        # First-layer fast path: pack the 9 taps into the contraction dim (K = 9*Cin) so
        # stage 1 is a single dense matmul per chunk instead of 9 mostly-zero ones.
        K_p = _round_up(9 * Cin, _LANE)
        x_in = jnp.concatenate([tap(dh, dw) for dh in range(3) for dw in range(3)], axis=-1)
        x_in = jnp.pad(x_in, ((0, 0), (0, 0), (0, 0), (0, K_p - 9 * Cin)))
        mode, n_taps = "slab", 1
    elif stride == 1:
        K_p = _round_up(Cin, _LANE)
        x_in = jnp.pad(x_pad, ((0, 0), (0, 0), (0, 0), (0, K_p - Cin)))
        mode, n_taps = "shift", 9
    else:
        # Downsampling block: pre-decimate the 9 taps in the wrapper so every in-kernel read
        # is a dense aligned slab (no strided sublane reads); ~9/stride^2 x the input bytes.
        K_p = _round_up(Cin, _LANE)
        x_in = jnp.concatenate([tap(dh, dw) for dh in range(3) for dw in range(3)], axis=1)
        x_in = jnp.pad(x_in, ((0, 0), (0, 0), (0, 0), (0, K_p - Cin)))
        mode, n_taps = "slab", 9

    w1, b1 = _fold_conv_bn(params["conv1_w"], params["conv1_b"],
                           params["bn1_gamma"], params["bn1_beta"],
                           params["bn1_mean"], params["bn1_var"],
                           C1_p, pack_taps_into_k=small_cin)
    w2, b2 = _fold_conv_bn(params["conv2_w"], params["conv2_b"],
                           params["bn2_gamma"], params["bn2_beta"],
                           params["bn2_mean"], params["bn2_var"],
                           C2_p, pack_taps_into_k=False)

    chunk_rows = max(1, _TARGET_CHUNK_M // Wo)

    if mode == "shift":
        kernel = functools.partial(_block_kernel_shift, chunk_rows=chunk_rows)
        x_spec = pl.BlockSpec((1, Hp, Wp, K_p), lambda n: (n, 0, 0, 0))
        scratch = [pltpu.VMEM((3, Hp, Wo, K_p), jnp.bfloat16),
                   pltpu.VMEM((3, Ho + 2, Wo, C1_p), jnp.bfloat16)]
        xs_bytes = 3 * Hp * Wo * K_p * 2
    else:
        kernel = functools.partial(_block_kernel_slab, n_taps=n_taps, chunk_rows=chunk_rows)
        x_spec = pl.BlockSpec((1, n_taps * Ho, Wo, K_p), lambda n: (n, 0, 0, 0))
        scratch = [pltpu.VMEM((3, Ho + 2, Wo, C1_p), jnp.bfloat16)]
        xs_bytes = 0

    # ---- VMEM budget: double-buffered streams + resident weights + scratch + temporaries ----
    in_block_b = x_in.shape[1] * x_in.shape[2] * x_in.shape[3] * 2
    out_block_b = Ho * Wo * C2_p * 4
    w_b = (w1.size + w2.size) * 2 + (b1.size + b2.size) * 4
    y1s_b = 3 * (Ho + 2) * Wo * C1_p * 2
    tmp_b = 4 * chunk_rows * Wo * max(C1_p, C2_p, K_p) * 4       # acc / relu / cast temps
    relayout_b = 2 * max(in_block_b, y1s_b)                      # slab-build copies
    est = 2 * (in_block_b + out_block_b) + 2 * w_b + xs_bytes + y1s_b + tmp_b + relayout_b
    # TODO(synk): w1/b1/w2/b2 are grid-invariant; pipeline_mode=pl.Buffered(1) on their
    #             BlockSpecs would halve their resident VMEM once verified on this toolchain.
    vmem_limit = None
    headroom = max(est // 4, 8 << 20)
    if est + headroom > (14 << 20):          # beyond the smallest default scoped limit (v5e)
        cap = _vmem_capacity_bytes()
        vmem_limit = max(32 << 20, min(est + headroom, int(cap * 0.9)))
    # TODO(synk): for per-sample tiles that still exceed the cap, add an output-row grid axis
    #             with a 1-row halo (manual DMA) instead of one-image-per-step.

    out = pl.pallas_call(
        kernel,
        out_shape=jax.ShapeDtypeStruct((N, Ho, Wo, C2_p), jnp.float32),
        grid_spec=pltpu.PrefetchScalarGridSpec(
            num_scalar_prefetch=0,
            grid=(N,),
            in_specs=[
                x_spec,
                pl.BlockSpec(w1.shape, lambda n: (0, 0, 0)),   # folded conv1 weight
                pl.BlockSpec((1, C1_p), lambda n: (0, 0)),     # folded bias 1
                pl.BlockSpec((9, C1_p, C2_p), lambda n: (0, 0, 0)),  # folded conv2 weight
                pl.BlockSpec((1, C2_p), lambda n: (0, 0)),     # folded bias 2
            ],
            out_specs=pl.BlockSpec((1, Ho, Wo, C2_p), lambda n: (n, 0, 0, 0)),
            scratch_shapes=scratch,
        ),
        compiler_params=pltpu.CompilerParams(
            dimension_semantics=("parallel",),
            vmem_limit_bytes=vmem_limit),
    )(x_in, w1, b1, w2, b2)

    # TODO(synk): emit bf16 / NHWC directly when the consumer allows it (halves writeback).
    out = out[..., :C2]                       # drop lane padding
    return jnp.transpose(out, (0, 3, 1, 2))   # NHWC -> NCHW (PyTorch convention)


# ----------------------------------------------------------------------------
# Parameters + pure-JAX reference (same bf16 quantization points as the kernel)
# ----------------------------------------------------------------------------
def init_plainnet_basic_block(key, in_channels, out_channels):
    c1, c2 = out_channels
    ks = jax.random.split(key, 8)
    return {
        "conv1_w": 0.1 * jax.random.normal(ks[0], (c1, in_channels, 3, 3), jnp.float32),
        "conv1_b": 0.05 * jax.random.normal(ks[1], (c1,), jnp.float32),
        "bn1_gamma": 1.0 + 0.1 * jax.random.normal(ks[2], (c1,), jnp.float32),
        "bn1_beta": 0.1 * jax.random.normal(ks[3], (c1,), jnp.float32),
        "bn1_mean": 0.1 * jax.random.normal(ks[2], (c1,), jnp.float32),
        "bn1_var": 1.0 + 0.1 * jnp.abs(jax.random.normal(ks[3], (c1,), jnp.float32)),
        "conv2_w": 0.1 * jax.random.normal(ks[4], (c2, c1, 3, 3), jnp.float32),
        "conv2_b": 0.05 * jax.random.normal(ks[5], (c2,), jnp.float32),
        "bn2_gamma": 1.0 + 0.1 * jax.random.normal(ks[6], (c2,), jnp.float32),
        "bn2_beta": 0.1 * jax.random.normal(ks[7], (c2,), jnp.float32),
        "bn2_mean": 0.1 * jax.random.normal(ks[6], (c2,), jnp.float32),
        "bn2_var": 1.0 + 0.1 * jnp.abs(jax.random.normal(ks[7], (c2,), jnp.float32)),
    }


def _reference_forward(params, x_nchw, stride=1):
    def q(a):  # mimic the kernel's bf16 rounding of matmul operands
        return a.astype(jnp.bfloat16).astype(jnp.float32)

    def stage(x, w_oihw, b, g, bt, m, v, s, pad):
        scale = g / jnp.sqrt(v + _EPS)
        wf = q(w_oihw * scale[:, None, None, None])
        bf = (b - m) * scale + bt
        y = lax.conv_general_dilated(
            q(x), wf, window_strides=(s, s), padding=pad,
            dimension_numbers=("NCHW", "OIHW", "NCHW"),
            preferred_element_type=jnp.float32,
            precision=lax.Precision.HIGHEST)
        y = y + bf[None, :, None, None]
        return jnp.maximum(y, 0.0)

    y = stage(x_nchw, params["conv1_w"], params["conv1_b"],
              params["bn1_gamma"], params["bn1_beta"],
              params["bn1_mean"], params["bn1_var"], stride, [(1, 1), (1, 1)])
    y = stage(y, params["conv2_w"], params["conv2_b"],
              params["bn2_gamma"], params["bn2_beta"],
              params["bn2_mean"], params["bn2_var"], 1, "SAME")
    return y


if __name__ == "__main__":
    key = jax.random.PRNGKey(0)
    batch = 2
    configs = [
        # (in_channels, out_channels, spatial, stride) — exercises every kernel path:
        (4,  (8, 8),   16, 1),   # small-Cin K-packed im2col path, stride 1
        (4,  (8, 8),   16, 2),   # small-Cin K-packed im2col path, stride 2
        (32, (16, 24), 16, 1),   # in-kernel width-shift path, stride 1
        (32, (16, 24), 16, 2),   # wrapper-decimated 9-slab path, stride 2
    ]
    for i, (cin, cout, spatial, stride) in enumerate(configs):
        k_param, k_x = jax.random.split(jax.random.fold_in(key, i))
        params = init_plainnet_basic_block(k_param, cin, cout)
        x = jax.random.normal(k_x, (batch, cin, spatial, spatial), jnp.float32)

        out = jax.block_until_ready(plainnet_basic_block_forward(params, x, stride=stride))

        ho = (spatial + 2 - 3) // stride + 1
        expected_shape = (batch, cout[1], ho, ho)
        assert out.shape == expected_shape, (i, out.shape, expected_shape)

        ref = _reference_forward(params, x, stride=stride)
        max_err = float(jnp.max(jnp.abs(out - ref)))
        assert jnp.allclose(out, ref, atol=2e-3, rtol=2e-3), (i, max_err)

    print("KERNEL_OK")
</pallas_src>

<mosaic_0001>
module attributes {stable_mosaic.version = 11 : i64} {
  func.func @_block_kernel_slab(%arg0: i32, %arg1: memref<1x16x16x128xbf16, #tpu.memory_space<vmem>>, %arg2: memref<1x128x128xbf16, #tpu.memory_space<vmem>>, %arg3: memref<1x128xf32, #tpu.memory_space<vmem>>, %arg4: memref<9x128x128xbf16, #tpu.memory_space<vmem>>, %arg5: memref<1x128xf32, #tpu.memory_space<vmem>>, %arg6: memref<1x16x16x128xf32, #tpu.memory_space<vmem>>, %arg7: memref<3x18x16x128xbf16, #tpu.memory_space<vmem>>) attributes {dimension_semantics = [#tpu.dimension_semantics<parallel>], iteration_bounds = array<i64: 2>, scalar_prefetch = 0 : i64, scratch_operands = 1 : i64, tpu.core_type = #tpu.core_type<tc>, window_params = [{transform_indices = @transform_0, window_bounds = array<i64: 1, 16, 16, 128>}, {pipeline_mode = #tpu.pipeline_mode<synchronous>, transform_indices = @transform_1, window_bounds = array<i64: 1, 128, 128>}, {pipeline_mode = #tpu.pipeline_mode<synchronous>, transform_indices = @transform_2, window_bounds = array<i64: 1, 128>}, {pipeline_mode = #tpu.pipeline_mode<synchronous>, transform_indices = @transform_3, window_bounds = array<i64: 9, 128, 128>}, {pipeline_mode = #tpu.pipeline_mode<synchronous>, transform_indices = @transform_4, window_bounds = array<i64: 1, 128>}, {transform_indices = @transform_5, window_bounds = array<i64: 1, 16, 16, 128>}]} {
    %c0 = arith.constant 0 : index
    %c0_0 = arith.constant 0 : index
    %0 = vector.load %arg3[%c0, %c0_0] : memref<1x128xf32, #tpu.memory_space<vmem>>, vector<1x128xf32>
    %c0_i32 = arith.constant 0 : i32
    %c2_i32 = arith.constant 2 : i32
    %1 = arith.addi %c0_i32, %c2_i32 : i32
    %c1_i32 = arith.constant 1 : i32
    scf.for %arg8 = %c0_i32 to %1 step %c1_i32  : i32 {
      %c8_i32 = arith.constant 8 : i32
      %28 = arith.muli %arg8, %c8_i32 : i32
      %29 = vector.shape_cast %0 : vector<1x128xf32> to vector<1x128xf32>
      %30 = vector.broadcast %29 : vector<1x128xf32> to vector<128x128xf32>
      %c0_i32_37 = arith.constant 0 : i32
      %31 = arith.addi %c0_i32_37, %28 : i32
      %c0_38 = arith.constant 0 : index
      %32 = arith.index_cast %31 : i32 to index
      %c0_39 = arith.constant 0 : index
      %c0_40 = arith.constant 0 : index
      %33 = vector.load %arg1[%c0_38, %32, %c0_39, %c0_40] : memref<1x16x16x128xbf16, #tpu.memory_space<vmem>>, vector<1x8x16x128xbf16>
      %34 = vector.shape_cast %33 : vector<1x8x16x128xbf16> to vector<8x16x128xbf16>
      %35 = vector.shape_cast %34 : vector<8x16x128xbf16> to vector<128x128xbf16>
      %c0_41 = arith.constant 0 : index
      %c0_42 = arith.constant 0 : index
      %c0_43 = arith.constant 0 : index
      %36 = vector.load %arg2[%c0_41, %c0_42, %c0_43] : memref<1x128x128xbf16, #tpu.memory_space<vmem>>, vector<1x128x128xbf16>
      %37 = vector.shape_cast %36 : vector<1x128x128xbf16> to vector<128x128xbf16>
      %cst_44 = arith.constant dense<0.000000e+00> : vector<128x128xf32>
      %38 = tpu.matmul %35, %37, %cst_44 {dimension_numbers = #tpu.dot_dimension_numbers<[1], [0], [0], [1], [0, 0, 1, 1], [], []>} : vector<128x128xbf16>, vector<128x128xbf16>, vector<128x128xf32> -> vector<128x128xf32>
      %39 = arith.addf %30, %38 : vector<128x128xf32>
      %cst_45 = arith.constant 0.000000e+00 : f32
      %40 = vector.broadcast %cst_45 : f32 to vector<128x128xf32>
      %41 = arith.maximumf %39, %40 : vector<128x128xf32>
      %42 = vector.shape_cast %41 : vector<128x128xf32> to vector<8x16x128xf32>
      %43 = arith.truncf %42 : vector<8x16x128xf32> to vector<8x16x128xbf16>
      %c1_i32_46 = arith.constant 1 : i32
      %44 = arith.addi %28, %c1_i32_46 : i32
      %c1_47 = arith.constant 1 : index
      %45 = arith.index_cast %44 : i32 to index
      %c0_48 = arith.constant 0 : index
      %c0_49 = arith.constant 0 : index
      %46 = vector.load %arg7[%c1_47, %45, %c0_48, %c0_49] : memref<3x18x16x128xbf16, #tpu.memory_space<vmem>>, vector<1x8x16x128xbf16>
      %47 = vector.shape_cast %46 : vector<1x8x16x128xbf16> to vector<8x16x128xbf16>
      %48 = vector.shape_cast %43 : vector<8x16x128xbf16> to vector<1x8x16x128xbf16>
      tpu.vector_store %arg7[%c1_47, %45, %c0_48, %c0_49], %48 {strides = array<i32>} : memref<3x18x16x128xbf16, #tpu.memory_space<vmem>>, vector<1x8x16x128xbf16>,
    }
    %c2_i32_1 = arith.constant 2 : i32
    %cst = arith.constant 0.000000e+00 : bf16
    %2 = vector.broadcast %cst : bf16 to vector<1x16x128xbf16>
    %c1 = arith.constant 1 : index
    %c0_2 = arith.constant 0 : index
    %c0_3 = arith.constant 0 : index
    %c0_4 = arith.constant 0 : index
    %3 = vector.load %arg7[%c1, %c0_2, %c0_3, %c0_4] : memref<3x18x16x128xbf16, #tpu.memory_space<vmem>>, vector<1x1x16x128xbf16>
    %4 = vector.shape_cast %3 : vector<1x1x16x128xbf16> to vector<1x16x128xbf16>
    %5 = vector.shape_cast %2 : vector<1x16x128xbf16> to vector<1x1x16x128xbf16>
    tpu.vector_store %arg7[%c1, %c0_2, %c0_3, %c0_4], %5 {strides = array<i32>} : memref<3x18x16x128xbf16, #tpu.memory_space<vmem>>, vector<1x1x16x128xbf16>,
    %c1_5 = arith.constant 1 : index
    %c17 = arith.constant 17 : index
    %c0_6 = arith.constant 0 : index
    %c0_7 = arith.constant 0 : index
    %6 = vector.load %arg7[%c1_5, %c17, %c0_6, %c0_7] : memref<3x18x16x128xbf16, #tpu.memory_space<vmem>>, vector<1x1x16x128xbf16>
    %7 = vector.shape_cast %6 : vector<1x1x16x128xbf16> to vector<1x16x128xbf16>
    %8 = vector.shape_cast %2 : vector<1x16x128xbf16> to vector<1x1x16x128xbf16>
    tpu.vector_store %arg7[%c1_5, %c17, %c0_6, %c0_7], %8 {strides = array<i32>} : memref<3x18x16x128xbf16, #tpu.memory_space<vmem>>, vector<1x1x16x128xbf16>,
    %cst_8 = arith.constant 0.000000e+00 : bf16
    %9 = vector.broadcast %cst_8 : bf16 to vector<18x1x128xbf16>
    %c1_9 = arith.constant 1 : index
    %c0_10 = arith.constant 0 : index
    %c0_11 = arith.constant 0 : index
    %c0_12 = arith.constant 0 : index
    %10 = vector.load %arg7[%c1_9, %c0_10, %c0_11, %c0_12] : memref<3x18x16x128xbf16, #tpu.memory_space<vmem>>, vector<1x18x15x128xbf16>
    %11 = vector.shape_cast %10 : vector<1x18x15x128xbf16> to vector<18x15x128xbf16>
    %c0_13 = arith.constant 0 : index
    %c0_14 = arith.constant 0 : index
    %c1_15 = arith.constant 1 : index
    %c0_16 = arith.constant 0 : index
    %12 = vector.load %arg7[%c0_13, %c0_14, %c1_15, %c0_16] : memref<3x18x16x128xbf16, #tpu.memory_space<vmem>>, vector<1x18x15x128xbf16>
    %13 = vector.shape_cast %12 : vector<1x18x15x128xbf16> to vector<18x15x128xbf16>
    %14 = vector.shape_cast %11 : vector<18x15x128xbf16> to vector<1x18x15x128xbf16>
    tpu.vector_store %arg7[%c0_13, %c0_14, %c1_15, %c0_16], %14 {strides = array<i32>} : memref<3x18x16x128xbf16, #tpu.memory_space<vmem>>, vector<1x18x15x128xbf16>,
    %c0_17 = arith.constant 0 : index
    %c0_18 = arith.constant 0 : index
    %c0_19 = arith.constant 0 : index
    %c0_20 = arith.constant 0 : index
    %15 = vector.load %arg7[%c0_17, %c0_18, %c0_19, %c0_20] : memref<3x18x16x128xbf16, #tpu.memory_space<vmem>>, vector<1x18x1x128xbf16>
    %16 = vector.shape_cast %15 : vector<1x18x1x128xbf16> to vector<18x1x128xbf16>
    %17 = vector.shape_cast %9 : vector<18x1x128xbf16> to vector<1x18x1x128xbf16>
    tpu.vector_store %arg7[%c0_17, %c0_18, %c0_19, %c0_20], %17 {strides = array<i32>} : memref<3x18x16x128xbf16, #tpu.memory_space<vmem>>, vector<1x18x1x128xbf16>,
    %c1_21 = arith.constant 1 : index
    %c0_22 = arith.constant 0 : index
    %c1_23 = arith.constant 1 : index
    %c0_24 = arith.constant 0 : index
    %18 = vector.load %arg7[%c1_21, %c0_22, %c1_23, %c0_24] : memref<3x18x16x128xbf16, #tpu.memory_space<vmem>>, vector<1x18x15x128xbf16>
    %19 = vector.shape_cast %18 : vector<1x18x15x128xbf16> to vector<18x15x128xbf16>
    %c2 = arith.constant 2 : index
    %c0_25 = arith.constant 0 : index
    %c0_26 = arith.constant 0 : index
    %c0_27 = arith.constant 0 : index
    %20 = vector.load %arg7[%c2, %c0_25, %c0_26, %c0_27] : memref<3x18x16x128xbf16, #tpu.memory_space<vmem>>, vector<1x18x15x128xbf16>
    %21 = vector.shape_cast %20 : vector<1x18x15x128xbf16> to vector<18x15x128xbf16>
    %22 = vector.shape_cast %19 : vector<18x15x128xbf16> to vector<1x18x15x128xbf16>
    tpu.vector_store %arg7[%c2, %c0_25, %c0_26, %c0_27], %22 {strides = array<i32>} : memref<3x18x16x128xbf16, #tpu.memory_space<vmem>>, vector<1x18x15x128xbf16>,
    %c2_28 = arith.constant 2 : index
    %c0_29 = arith.constant 0 : index
    %c15 = arith.constant 15 : index
    %c0_30 = arith.constant 0 : index
    %23 = vector.load %arg7[%c2_28, %c0_29, %c15, %c0_30] : memref<3x18x16x128xbf16, #tpu.memory_space<vmem>>, vector<1x18x1x128xbf16>
    %24 = vector.shape_cast %23 : vector<1x18x1x128xbf16> to vector<18x1x128xbf16>
    %25 = vector.shape_cast %9 : vector<18x1x128xbf16> to vector<1x18x1x128xbf16>
    tpu.vector_store %arg7[%c2_28, %c0_29, %c15, %c0_30], %25 {strides = array<i32>} : memref<3x18x16x128xbf16, #tpu.memory_space<vmem>>, vector<1x18x1x128xbf16>,
    %c0_31 = arith.constant 0 : index
    %c0_32 = arith.constant 0 : index
    %26 = vector.load %arg5[%c0_31, %c0_32] : memref<1x128xf32, #tpu.memory_space<vmem>>, vector<1x128xf32>
    %c0_i32_33 = arith.constant 0 : i32
    %c2_i32_34 = arith.constant 2 : i32
    %27 = arith.addi %c0_i32_33, %c2_i32_34 : i32
    %c1_i32_35 = arith.constant 1 : i32
    scf.for %arg8 = %c0_i32_33 to %27 step %c1_i32_35  : i32 {
      %c8_i32 = arith.constant 8 : i32
      %28 = arith.muli %arg8, %c8_i32 : i32
      %29 = vector.shape_cast %26 : vector<1x128xf32> to vector<1x128xf32>
      %30 = vector.broadcast %29 : vector<1x128xf32> to vector<128x128xf32>
      %c0_i32_37 = arith.constant 0 : i32
      %31 = arith.addi %28, %c0_i32_37 : i32
      %c0_38 = arith.constant 0 : index
      %32 = arith.index_cast %31 : i32 to index
      %c0_39 = arith.constant 0 : index
      %c0_40 = arith.constant 0 : index
      %33 = vector.load %arg7[%c0_38, %32, %c0_39, %c0_40] : memref<3x18x16x128xbf16, #tpu.memory_space<vmem>>, vector<1x8x16x128xbf16>
      %34 = vector.shape_cast %33 : vector<1x8x16x128xbf16> to vector<8x16x128xbf16>
      %35 = vector.shape_cast %34 : vector<8x16x128xbf16> to vector<128x128xbf16>
      %c0_41 = arith.constant 0 : index
      %c0_42 = arith.constant 0 : index
      %c0_43 = arith.constant 0 : index
      %36 = vector.load %arg4[%c0_41, %c0_42, %c0_43] : memref<9x128x128xbf16, #tpu.memory_space<vmem>>, vector<1x128x128xbf16>
      %37 = vector.shape_cast %36 : vector<1x128x128xbf16> to vector<128x128xbf16>
      %cst_44 = arith.constant dense<0.000000e+00> : vector<128x128xf32>
      %38 = tpu.matmul %35, %37, %cst_44 {dimension_numbers = #tpu.dot_dimension_numbers<[1], [0], [0], [1], [0, 0, 1, 1], [], []>} : vector<128x128xbf16>, vector<128x128xbf16>, vector<128x128xf32> -> vector<128x128xf32>
      %39 = arith.addf %30, %38 : vector<128x128xf32>
      %c0_i32_45 = arith.constant 0 : i32
      %40 = arith.addi %28, %c0_i32_45 : i32
      %c1_46 = arith.constant 1 : index
      %41 = arith.index_cast %40 : i32 to index
      %c0_47 = arith.constant 0 : index
      %c0_48 = arith.constant 0 : index
      %42 = vector.load %arg7[%c1_46, %41, %c0_47, %c0_48] : memref<3x18x16x128xbf16, #tpu.memory_space<vmem>>, vector<1x8x16x128xbf16>
      %43 = vector.shape_cast %42 : vector<1x8x16x128xbf16> to vector<8x16x128xbf16>
      %44 = vector.shape_cast %43 : vector<8x16x128xbf16> to vector<128x128xbf16>
      %c1_49 = arith.constant 1 : index
      %c0_50 = arith.constant 0 : index
      %c0_51 = arith.constant 0 : index
      %45 = vector.load %arg4[%c1_49, %c0_50, %c0_51] : memref<9x128x128xbf16, #tpu.memory_space<vmem>>, vector<1x128x128xbf16>
      %46 = vector.shape_cast %45 : vector<1x128x128xbf16> to vector<128x128xbf16>
      %cst_52 = arith.constant dense<0.000000e+00> : vector<128x128xf32>
      %47 = tpu.matmul %44, %46, %cst_52 {dimension_numbers = #tpu.dot_dimension_numbers<[1], [0], [0], [1], [0, 0, 1, 1], [], []>} : vector<128x128xbf16>, vector<128x128xbf16>, vector<128x128xf32> -> vector<128x128xf32>
      %48 = arith.addf %39, %47 : vector<128x128xf32>
      %c0_i32_53 = arith.constant 0 : i32
      %49 = arith.addi %28, %c0_i32_53 : i32
      %c2_54 = arith.constant 2 : index
      %50 = arith.index_cast %49 : i32 to index
      %c0_55 = arith.constant 0 : index
      %c0_56 = arith.constant 0 : index
      %51 = vector.load %arg7[%c2_54, %50, %c0_55, %c0_56] : memref<3x18x16x128xbf16, #tpu.memory_space<vmem>>, vector<1x8x16x128xbf16>
      %52 = vector.shape_cast %51 : vector<1x8x16x128xbf16> to vector<8x16x128xbf16>
      %53 = vector.shape_cast %52 : vector<8x16x128xbf16> to vector<128x128xbf16>
      %c2_57 = arith.constant 2 : index
      %c0_58 = arith.constant 0 : index
      %c0_59 = arith.constant 0 : index
      %54 = vector.load %arg4[%c2_57, %c0_58, %c0_59] : memref<9x128x128xbf16, #tpu.memory_space<vmem>>, vector<1x128x128xbf16>
      %55 = vector.shape_cast %54 : vector<1x128x128xbf16> to vector<128x128xbf16>
      %cst_60 = arith.constant dense<0.000000e+00> : vector<128x128xf32>
      %56 = tpu.matmul %53, %55, %cst_60 {dimension_numbers = #tpu.dot_dimension_numbers<[1], [0], [0], [1], [0, 0, 1, 1], [], []>} : vector<128x128xbf16>, vector<128x128xbf16>, vector<128x128xf32> -> vector<128x128xf32>
      %57 = arith.addf %48, %56 : vector<128x128xf32>
      %c1_i32_61 = arith.constant 1 : i32
      %58 = arith.addi %28, %c1_i32_61 : i32
      %c0_62 = arith.constant 0 : index
      %59 = arith.index_cast %58 : i32 to index
      %c0_63 = arith.constant 0 : index
      %c0_64 = arith.constant 0 : index
      %60 = vector.load %arg7[%c0_62, %59, %c0_63, %c0_64] : memref<3x18x16x128xbf16, #tpu.memory_space<vmem>>, vector<1x8x16x128xbf16>
      %61 = vector.shape_cast %60 : vector<1x8x16x128xbf16> to vector<8x16x128xbf16>
      %62 = vector.shape_cast %61 : vector<8x16x128xbf16> to vector<128x128xbf16>
      %c3 = arith.constant 3 : index
      %c0_65 = arith.constant 0 : index
      %c0_66 = arith.constant 0 : index
      %63 = vector.load %arg4[%c3, %c0_65, %c0_66] : memref<9x128x128xbf16, #tpu.memory_space<vmem>>, vector<1x128x128xbf16>
      %64 = vector.shape_cast %63 : vector<1x128x128xbf16> to vector<128x128xbf16>
      %cst_67 = arith.constant dense<0.000000e+00> : vector<128x128xf32>
      %65 = tpu.matmul %62, %64, %cst_67 {dimension_numbers = #tpu.dot_dimension_numbers<[1], [0], [0], [1], [0, 0, 1, 1], [], []>} : vector<128x128xbf16>, vector<128x128xbf16>, vector<128x128xf32> -> vector<128x128xf32>
      %66 = arith.addf %57, %65 : vector<128x128xf32>
      %c1_i32_68 = arith.constant 1 : i32
      %67 = arith.addi %28, %c1_i32_68 : i32
      %c1_69 = arith.constant 1 : index
      %68 = arith.index_cast %67 : i32 to index
      %c0_70 = arith.constant 0 : index
      %c0_71 = arith.constant 0 : index
      %69 = vector.load %arg7[%c1_69, %68, %c0_70, %c0_71] : memref<3x18x16x128xbf16, #tpu.memory_space<vmem>>, vector<1x8x16x128xbf16>
      %70 = vector.shape_cast %69 : vector<1x8x16x128xbf16> to vector<8x16x128xbf16>
      %71 = vector.shape_cast %70 : vector<8x16x128xbf16> to vector<128x128xbf16>
      %c4 = arith.constant 4 : index
      %c0_72 = arith.constant 0 : index
      %c0_73 = arith.constant 0 : index
      %72 = vector.load %arg4[%c4, %c0_72, %c0_73] : memref<9x128x128xbf16, #tpu.memory_space<vmem>>, vector<1x128x128xbf16>
      %73 = vector.shape_cast %72 : vector<1x128x128xbf16> to vector<128x128xbf16>
      %cst_74 = arith.constant dense<0.000000e+00> : vector<128x128xf32>
      %74 = tpu.matmul %71, %73, %cst_74 {dimension_numbers = #tpu.dot_dimension_numbers<[1], [0], [0], [1], [0, 0, 1, 1], [], []>} : vector<128x128xbf16>, vector<128x128xbf16>, vector<128x128xf32> -> vector<128x128xf32>
      %75 = arith.addf %66, %74 : vector<128x128xf32>
      %c1_i32_75 = arith.constant 1 : i32
      %76 = arith.addi %28, %c1_i32_75 : i32
      %c2_76 = arith.constant 2 : index
      %77 = arith.index_cast %76 : i32 to index
      %c0_77 = arith.constant 0 : index
      %c0_78 = arith.constant 0 : index
      %78 = vector.load %arg7[%c2_76, %77, %c0_77, %c0_78] : memref<3x18x16x128xbf16, #tpu.memory_space<vmem>>, vector<1x8x16x128xbf16>
      %79 = vector.shape_cast %78 : vector<1x8x16x128xbf16> to vector<8x16x128xbf16>
      %80 = vector.shape_cast %79 : vector<8x16x128xbf16> to vector<128x128xbf16>
      %c5 = arith.constant 5 : index
      %c0_79 = arith.constant 0 : index
      %c0_80 = arith.constant 0 : index
      %81 = vector.load %arg4[%c5, %c0_79, %c0_80] : memref<9x128x128xbf16, #tpu.memory_space<vmem>>, vector<1x128x128xbf16>
      %82 = vector.shape_cast %81 : vector<1x128x128xbf16> to vector<128x128xbf16>
      %cst_81 = arith.constant dense<0.000000e+00> : vector<128x128xf32>
      %83 = tpu.matmul %80, %82, %cst_81 {dimension_numbers = #tpu.dot_dimension_numbers<[1], [0], [0], [1], [0, 0, 1, 1], [], []>} : vector<128x128xbf16>, vector<128x128xbf16>, vector<128x128xf32> -> vector<128x128xf32>
      %84 = arith.addf %75, %83 : vector<128x128xf32>
      %c2_i32_82 = arith.constant 2 : i32
      %85 = arith.addi %28, %c2_i32_82 : i32
      %c0_83 = arith.constant 0 : index
      %86 = arith.index_cast %85 : i32 to index
      %c0_84 = arith.constant 0 : index
      %c0_85 = arith.constant 0 : index
      %87 = vector.load %arg7[%c0_83, %86, %c0_84, %c0_85] : memref<3x18x16x128xbf16, #tpu.memory_space<vmem>>, vector<1x8x16x128xbf16>
      %88 = vector.shape_cast %87 : vector<1x8x16x128xbf16> to vector<8x16x128xbf16>
      %89 = vector.shape_cast %88 : vector<8x16x128xbf16> to vector<128x128xbf16>
      %c6 = arith.constant 6 : index
      %c0_86 = arith.constant 0 : index
      %c0_87 = arith.constant 0 : index
      %90 = vector.load %arg4[%c6, %c0_86, %c0_87] : memref<9x128x128xbf16, #tpu.memory_space<vmem>>, vector<1x128x128xbf16>
      %91 = vector.shape_cast %90 : vector<1x128x128xbf16> to vector<128x128xbf16>
      %cst_88 = arith.constant dense<0.000000e+00> : vector<128x128xf32>
      %92 = tpu.matmul %89, %91, %cst_88 {dimension_numbers = #tpu.dot_dimension_numbers<[1], [0], [0], [1], [0, 0, 1, 1], [], []>} : vector<128x128xbf16>, vector<128x128xbf16>, vector<128x128xf32> -> vector<128x128xf32>
      %93 = arith.addf %84, %92 : vector<128x128xf32>
      %c2_i32_89 = arith.constant 2 : i32
      %94 = arith.addi %28, %c2_i32_89 : i32
      %c1_90 = arith.constant 1 : index
      %95 = arith.index_cast %94 : i32 to index
      %c0_91 = arith.constant 0 : index
      %c0_92 = arith.constant 0 : index
      %96 = vector.load %arg7[%c1_90, %95, %c0_91, %c0_92] : memref<3x18x16x128xbf16, #tpu.memory_space<vmem>>, vector<1x8x16x128xbf16>
      %97 = vector.shape_cast %96 : vector<1x8x16x128xbf16> to vector<8x16x128xbf16>
      %98 = vector.shape_cast %97 : vector<8x16x128xbf16> to vector<128x128xbf16>
      %c7 = arith.constant 7 : index
      %c0_93 = arith.constant 0 : index
      %c0_94 = arith.constant 0 : index
      %99 = vector.load %arg4[%c7, %c0_93, %c0_94] : memref<9x128x128xbf16, #tpu.memory_space<vmem>>, vector<1x128x128xbf16>
      %100 = vector.shape_cast %99 : vector<1x128x128xbf16> to vector<128x128xbf16>
      %cst_95 = arith.constant dense<0.000000e+00> : vector<128x128xf32>
      %101 = tpu.matmul %98, %100, %cst_95 {dimension_numbers = #tpu.dot_dimension_numbers<[1], [0], [0], [1], [0, 0, 1, 1], [], []>} : vector<128x128xbf16>, vector<128x128xbf16>, vector<128x128xf32> -> vector<128x128xf32>
      %102 = arith.addf %93, %101 : vector<128x128xf32>
      %c2_i32_96 = arith.constant 2 : i32
      %103 = arith.addi %28, %c2_i32_96 : i32
      %c2_97 = arith.constant 2 : index
      %104 = arith.index_cast %103 : i32 to index
      %c0_98 = arith.constant 0 : index
      %c0_99 = arith.constant 0 : index
      %105 = vector.load %arg7[%c2_97, %104, %c0_98, %c0_99] : memref<3x18x16x128xbf16, #tpu.memory_space<vmem>>, vector<1x8x16x128xbf16>
      %106 = vector.shape_cast %105 : vector<1x8x16x128xbf16> to vector<8x16x128xbf16>
      %107 = vector.shape_cast %106 : vector<8x16x128xbf16> to vector<128x128xbf16>
      %c8 = arith.constant 8 : index
      %c0_100 = arith.constant 0 : index
      %c0_101 = arith.constant 0 : index
      %108 = vector.load %arg4[%c8, %c0_100, %c0_101] : memref<9x128x128xbf16, #tpu.memory_space<vmem>>, vector<1x128x128xbf16>
      %109 = vector.shape_cast %108 : vector<1x128x128xbf16> to vector<128x128xbf16>
      %cst_102 = arith.constant dense<0.000000e+00> : vector<128x128xf32>
      %110 = tpu.matmul %107, %109, %cst_102 {dimension_numbers = #tpu.dot_dimension_numbers<[1], [0], [0], [1], [0, 0, 1, 1], [], []>} : vector<128x128xbf16>, vector<128x128xbf16>, vector<128x128xf32> -> vector<128x128xf32>
      %111 = arith.addf %102, %110 : vector<128x128xf32>
      %cst_103 = arith.constant 0.000000e+00 : f32
      %112 = vector.broadcast %cst_103 : f32 to vector<128x128xf32>
      %113 = arith.maximumf %111, %112 : vector<128x128xf32>
      %114 = vector.shape_cast %113 : vector<128x128xf32> to vector<8x16x128xf32>
      %c0_104 = arith.constant 0 : index
      %115 = arith.index_cast %28 : i32 to index
      %c0_105 = arith.constant 0 : index
      %c0_106 = arith.constant 0 : index
      %116 = vector.load %arg6[%c0_104, %115, %c0_105, %c0_106] : memref<1x16x16x128xf32, #tpu.memory_space<vmem>>, vector<1x8x16x128xf32>
      %117 = vector.shape_cast %116 : vector<1x8x16x128xf32> to vector<8x16x128xf32>
      %118 = vector.shape_cast %114 : vector<8x16x128xf32> to vector<1x8x16x128xf32>
      tpu.vector_store %arg6[%c0_104, %115, %c0_105, %c0_106], %118 {strides = array<i32>} : memref<1x16x16x128xf32, #tpu.memory_space<vmem>>, vector<1x8x16x128xf32>,
    }
    %c2_i32_36 = arith.constant 2 : i32
    return
  }
  func.func @transform_0(%arg0: i32) -> (i32, i32, i32, i32) {
    %c0_i32 = arith.constant 0 : i32
    %c0_i32_0 = arith.constant 0 : i32
    %c0_i32_1 = arith.constant 0 : i32
    %c0_i32_2 = arith.constant 0 : i32
    return %arg0, %c0_i32, %c0_i32_0, %c0_i32_1 : i32, i32, i32, i32
  }
  func.func @transform_1(%arg0: i32) -> (i32, i32, i32) {
    %c0_i32 = arith.constant 0 : i32
    %c0_i32_0 = arith.constant 0 : i32
    %c0_i32_1 = arith.constant 0 : i32
    %c0_i32_2 = arith.constant 0 : i32
    return %c0_i32, %c0_i32_0, %c0_i32_1 : i32, i32, i32
  }
  func.func @transform_2(%arg0: i32) -> (i32, i32) {
    %c0_i32 = arith.constant 0 : i32
    %c0_i32_0 = arith.constant 0 : i32
    %c0_i32_1 = arith.constant 0 : i32
    return %c0_i32, %c0_i32_0 : i32, i32
  }
  func.func @transform_3(%arg0: i32) -> (i32, i32, i32) {
    %c0_i32 = arith.constant 0 : i32
    %c0_i32_0 = arith.constant 0 : i32
    %c0_i32_1 = arith.constant 0 : i32
    %c0_i32_2 = arith.constant 0 : i32
    return %c0_i32, %c0_i32_0, %c0_i32_1 : i32, i32, i32
  }
  func.func @transform_4(%arg0: i32) -> (i32, i32) {
    %c0_i32 = arith.constant 0 : i32
    %c0_i32_0 = arith.constant 0 : i32
    %c0_i32_1 = arith.constant 0 : i32
    return %c0_i32, %c0_i32_0 : i32, i32
  }
  func.func @transform_5(%arg0: i32) -> (i32, i32, i32, i32) {
    %c0_i32 = arith.constant 0 : i32
    %c0_i32_0 = arith.constant 0 : i32
    %c0_i32_1 = arith.constant 0 : i32
    %c0_i32_2 = arith.constant 0 : i32
    return %arg0, %c0_i32, %c0_i32_0, %c0_i32_1 : i32, i32, i32, i32
  }
}

</mosaic_0001>

<llo_original>
// kernel: plainnet_basic_block_forward.1
$region0: #{plainnet_basic_block_forward.1}
  #allocation0 [shape = 'u32[]', space=smem, size = 0x4, offset = 0x4, fixed_abs, tag = 'smem constant byte address 0x4 - core index']
  #allocation1 [shape = 'u32[144,128]{1,0:T(1,128)}', space=vmem, size = 0x12000, scoped, tag = 'internal scratch']
  #allocation2 [shape = 'bf16[3,18,16,128]{3,2,1,0:T(8,128)(2,1)}', space=vmem, size = 0x36000, scoped, tag = 'scratch operand']
  %s0 = inlined_call_operand.vmem [shape: bf16[2,16,16,128], index: 0, kind: input, shape index: {}]
  %s1 = inlined_call_operand.vmem [shape: bf16[1,128,128], index: 1, kind: input, shape index: {}]
  %s2 = inlined_call_operand.vmem [shape: f32[1,128], index: 2, kind: input, shape index: {}]
  %s3 = inlined_call_operand.vmem [shape: bf16[9,128,128], index: 3, kind: input, shape index: {}]
  %s4 = inlined_call_operand.vmem [shape: f32[1,128], index: 4, kind: input, shape index: {}]
  %s5 = inlined_call_operand.vmem [shape: f32[2,16,16,128], index: 5, kind: output, shape index: {}]
  %s6 = sld [smem:[#allocation0]]
  $region67: #{plainnet_basic_block_forward.1} parent=0
    _
  %s8 = ssub.s32 1, %s6
  %s9 = scalar_select 0, %s8, %s6
  loop: start=0, step=1, limit=4
  $region2: #{plainnet_basic_block_forward.1} parent=0 // loop_pre_header
    _
  $region3: #{plainnet_basic_block_forward.1} parent=0 // loop_header
    %s11 = sphi 0, %s15
    %p12 = scmp.ge.s32.totalorder %s11, 4
    %s21 = sphi 0, %s23
    %s24 = sphi 0, %s21
    %s25 = sphi 0, %s24
    %s41 = sphi 0, %s25
    %s45 = sphi 0, %s45
    %s47 = sphi 0, %s45
    %s48 = sphi 0, %s47
    %s62 = sphi 0, %s48
    %s66 = sphi 0, %s66
    %s68 = sphi 0, %s66
    %s69 = sphi 0, %s68
    %s83 = sphi 0, %s69
    %s87 = sphi 0, %s87
    %s89 = sphi 0, %s87
    %s90 = sphi 0, %s89
    %s104 = sphi 0, %s90
    %s108 = sphi 0, %s108
    %s110 = sphi 0, %s108
    %s111 = sphi 0, %s110
    %s125 = sphi 0, %s111
    %s131 = sphi 0, %s133
    %s134 = sphi 0, %s131
    %s135 = sphi 0, %s134
    %s151 = sphi 0, %s135
  $region4: #{plainnet_basic_block_forward.1} parent=0 // loop_header_branch
    %14 = sbr.rel (%p12) target = $region8
  $region5: #{plainnet_basic_block_forward.1} parent=0 // loop_body
    %s16 = ssub.s32 %s11, 1
    %s17 = ssub.s32 %s11, 2
    %s18 = sadd.s32 %s11, 1
    %s19 = ssub.s32 %s11, %s18
    %p20 = scmp.eq.s32.totalorder %s19, 0
    %s22 = sadd.s32 %s21, 1
    %s23 = scalar_select %p20, %s21, %s22
    %p26 = pneg %p20
    %p27 = scmp.eq.s32.totalorder %s11, 1
    %p28 = por %p26, %p27
    %p29 = scmp.ne.s32.totalorder %s21, %s24
    %p30 = scmp.eq.s32.totalorder %s11, 0
    %p31 = por %p29, %p30
    %p32 = scmp.ne.s32.totalorder %s21, %s24
    %p33 = scmp.eq.s32.totalorder %s16, 1
    %p34 = por %p32, %p33
    %p35 = scmp.ne.s32.totalorder %s24, %s25
    %p36 = scmp.eq.s32.totalorder %s16, 0
    %p37 = por %p35, %p36
    %p38 = scmp.ne.s32.totalorder %s24, %s25
    %p39 = scmp.eq.s32.totalorder %s17, 1
    %p40 = por %p38, %p39
    %p42 = scmp.ne.s32.totalorder %s25, %s41
    %p43 = scmp.eq.s32.totalorder %s17, 0
    %p44 = por %p42, %p43
    %s46 = sadd.s32 %s45, 1
    %p49 = scmp.eq.s32.totalorder %s11, 1
    %p50 = scmp.ne.s32.totalorder %s45, %s47
    %p51 = scmp.eq.s32.totalorder %s11, 0
    %p52 = por %p50, %p51
    %p53 = scmp.ne.s32.totalorder %s45, %s47
    %p54 = scmp.eq.s32.totalorder %s16, 1
    %p55 = por %p53, %p54
    %p56 = scmp.ne.s32.totalorder %s47, %s48
    %p57 = scmp.eq.s32.totalorder %s16, 0
    %p58 = por %p56, %p57
    %p59 = scmp.ne.s32.totalorder %s47, %s48
    %p60 = scmp.eq.s32.totalorder %s17, 1
    %p61 = por %p59, %p60
    %p63 = scmp.ne.s32.totalorder %s48, %s62
    %p64 = scmp.eq.s32.totalorder %s17, 0
    %p65 = por %p63, %p64
    %s67 = sadd.s32 %s66, 1
    %p70 = scmp.eq.s32.totalorder %s11, 1
    %p71 = scmp.ne.s32.totalorder %s66, %s68
    %p72 = scmp.eq.s32.totalorder %s11, 0
    %p73 = por %p71, %p72
    %p74 = scmp.ne.s32.totalorder %s66, %s68
    %p75 = scmp.eq.s32.totalorder %s16, 1
    %p76 = por %p74, %p75
    %p77 = scmp.ne.s32.totalorder %s68, %s69
    %p78 = scmp.eq.s32.totalorder %s16, 0
    %p79 = por %p77, %p78
    %p80 = scmp.ne.s32.totalorder %s68, %s69
    %p81 = scmp.eq.s32.totalorder %s17, 1
    %p82 = por %p80, %p81
    %p84 = scmp.ne.s32.totalorder %s69, %s83
    %p85 = scmp.eq.s32.totalorder %s17, 0
    %p86 = por %p84, %p85
    %s88 = sadd.s32 %s87, 1
    %p91 = scmp.eq.s32.totalorder %s11, 1
    %p92 = scmp.ne.s32.totalorder %s87, %s89
    %p93 = scmp.eq.s32.totalorder %s11, 0
    %p94 = por %p92, %p93
    %p95 = scmp.ne.s32.totalorder %s87, %s89
    %p96 = scmp.eq.s32.totalorder %s16, 1
    %p97 = por %p95, %p96
    %p98 = scmp.ne.s32.totalorder %s89, %s90
    %p99 = scmp.eq.s32.totalorder %s16, 0
    %p100 = por %p98, %p99
    %p101 = scmp.ne.s32.totalorder %s89, %s90
    %p102 = scmp.eq.s32.totalorder %s17, 1
    %p103 = por %p101, %p102
    %p105 = scmp.ne.s32.totalorder %s90, %s104
    %p106 = scmp.eq.s32.totalorder %s17, 0
    %p107 = por %p105, %p106
    %s109 = sadd.s32 %s108, 1
    %p112 = scmp.eq.s32.totalorder %s11, 1
    %p113 = scmp.ne.s32.totalorder %s108, %s110
    %p114 = scmp.eq.s32.totalorder %s11, 0
    %p115 = por %p113, %p114
    %p116 = scmp.ne.s32.totalorder %s108, %s110
    %p117 = scmp.eq.s32.totalorder %s16, 1
    %p118 = por %p116, %p117
    %p119 = scmp.ne.s32.totalorder %s110, %s111
    %p120 = scmp.eq.s32.totalorder %s16, 0
    %p121 = por %p119, %p120
    %p122 = scmp.ne.s32.totalorder %s110, %s111
    %p123 = scmp.eq.s32.totalorder %s17, 1
    %p124 = por %p122, %p123
    %p126 = scmp.ne.s32.totalorder %s111, %s125
    %p127 = scmp.eq.s32.totalorder %s17, 0
    %p128 = por %p126, %p127
    %s129 = ssub.s32 %s11, %s18
    %p130 = scmp.eq.s32.totalorder %s129, 0
    %s132 = sadd.s32 %s131, 1
    %s133 = scalar_select %p130, %s131, %s132
    %p136 = pneg %p130
    %p137 = scmp.eq.s32.totalorder %s11, 1
    %p138 = por %p136, %p137
    %p139 = scmp.ne.s32.totalorder %s131, %s134
    %p140 = scmp.eq.s32.totalorder %s11, 0
    %p141 = por %p139, %p140
    %p142 = scmp.ne.s32.totalorder %s131, %s134
    %p143 = scmp.eq.s32.totalorder %s16, 1
    %p144 = por %p142, %p143
    %p145 = scmp.ne.s32.totalorder %s134, %s135
    %p146 = scmp.eq.s32.totalorder %s16, 0
    %p147 = por %p145, %p146
    %p148 = scmp.ne.s32.totalorder %s134, %s135
    %p149 = scmp.eq.s32.totalorder %s17, 1
    %p150 = por %p148, %p149
    %p152 = scmp.ne.s32.totalorder %s135, %s151
    %p153 = scmp.eq.s32.totalorder %s17, 0
    %p154 = por %p152, %p153
    %p155 = scmp.le.s32.totalorder 1, %s11
    %p156 = scmp.lt.s32.totalorder %s11, 3
    %p157 = pnand %p155, %p156
    %p158 = pneg %p157
    // Predicated region
    $region9: #{plainnet_basic_block_forward.1} parent=5 // pred_check
      _
    $region10: #{plainnet_basic_block_forward.1} parent=5 // pred_check_branch
      %160 = sbr.rel (%p157) target = $region12
    $region11: #{plainnet_basic_block_forward.1} parent=5 // pred_region
      %s161 = ssub.s32 %s11, 1
      // Predicated region
      $region13: #{plainnet_basic_block_forward.1} parent=11 // pred_check
        %p162 = pneg %p58
      $region14: #{plainnet_basic_block_forward.1} parent=11 // pred_check_branch
        %164 = sbr.rel (%p162) target = $region16
      $region15: #{plainnet_basic_block_forward.1} parent=11 // pred_region
        _
      $region16: #{plainnet_basic_block_forward.1} parent=11 // pred_fallthru
        _
      // Predicated region
      $region17: #{plainnet_basic_block_forward.1} parent=11 // pred_check
        %p165 = pneg %p79
      $region18: #{plainnet_basic_block_forward.1} parent=11 // pred_check_branch
        %167 = sbr.rel (%p165) target = $region20
      $region19: #{plainnet_basic_block_forward.1} parent=11 // pred_region
        _
      $region20: #{plainnet_basic_block_forward.1} parent=11 // pred_fallthru
        _
      // Predicated region
      $region21: #{plainnet_basic_block_forward.1} parent=11 // pred_check
        %p168 = pneg %p100
      $region22: #{plainnet_basic_block_forward.1} parent=11 // pred_check_branch
        %170 = sbr.rel (%p168) target = $region24
      $region23: #{plainnet_basic_block_forward.1} parent=11 // pred_region
        _
      $region24: #{plainnet_basic_block_forward.1} parent=11 // pred_fallthru
        _
      // Predicated region
      $region25: #{plainnet_basic_block_forward.1} parent=11 // pred_check
        %p171 = pneg %p121
      $region26: #{plainnet_basic_block_forward.1} parent=11 // pred_check_branch
        %173 = sbr.rel (%p171) target = $region28
      $region27: #{plainnet_basic_block_forward.1} parent=11 // pred_region
        _
      $region28: #{plainnet_basic_block_forward.1} parent=11 // pred_fallthru
        _
    $region12: #{plainnet_basic_block_forward.1} parent=5 // pred_fallthru
      _
    %p174 = scmp.lt.s32.totalorder %s11, 2
    // Predicated region
    $region29: #{plainnet_basic_block_forward.1} parent=5 // pred_check
      %p175 = pneg %p174
    $region30: #{plainnet_basic_block_forward.1} parent=5 // pred_check_branch
      %177 = sbr.rel (%p175) target = $region32
    $region31: #{plainnet_basic_block_forward.1} parent=5 // pred_region
      // Predicated region
      $region33: #{plainnet_basic_block_forward.1} parent=31 // pred_check
        %p178 = pneg %p31
      $region34: #{plainnet_basic_block_forward.1} parent=31 // pred_check_branch
        %180 = sbr.rel (%p178) target = $region36
      $region35: #{plainnet_basic_block_forward.1} parent=31 // pred_region
        %p181 = scmp.lt.s32.totalorder %s11, 1
        %s182 = scalar_select %p181, %s11, 1
        %s183 = smul.addr %s182, 32
        %s184 = smul.addr %s183, 4
        %s185 = scalar_lea.vmem %s0, %s184
      $region36: #{plainnet_basic_block_forward.1} parent=31 // pred_fallthru
        _
    $region32: #{plainnet_basic_block_forward.1} parent=5 // pred_fallthru
      _
    %p186 = scmp.le.s32.totalorder 1, %s11
    %p187 = scmp.lt.s32.totalorder %s11, 3
    %p188 = pnand %p186, %p187
    %p189 = pneg %p188
    // Predicated region
    $region37: #{plainnet_basic_block_forward.1} parent=5 // pred_check
      _
    $region38: #{plainnet_basic_block_forward.1} parent=5 // pred_check_branch
      %191 = sbr.rel (%p188) target = $region40
    $region39: #{plainnet_basic_block_forward.1} parent=5 // pred_region
      %s192 = ssub.s32 %s11, 1
      %p193 = scmp.lt.s32.totalorder %s16, 1
      %s194 = scalar_select %p193, %s16, 1
      %s195 = smul.addr %s194, 32
      %s196 = smul.addr %s195, 4
      %s197 = scalar_lea.vmem %s0, %s196
      %p198 = pneg %p37
      %p199 = pneg %p34
      %p200 = pneg %p58
      %p201 = pneg %p55
      %p202 = pneg %p79
      %p203 = pneg %p76
      %p204 = pneg %p100
      %p205 = pneg %p97
      %p206 = pneg %p121
      %p207 = pneg %p118
      %p208 = pneg %p147
      %p209 = pneg %p144
      %p210 = scmp.lt.s32.totalorder %s16, 1
      %s211 = scalar_select %p210, %s16, 1
      %s212 = smul.addr %s211, 32
      %s213 = smul.addr %s212, 8
      %s214 = scalar_lea.vmem %s5, %s213
      %p215 = scmp.lt.s32.totalorder %s16, 1
      %s216 = scalar_select %p215, %s16, 1
      %s217 = smul.addr %s216, 32
      %s218 = smul.addr %s217, 4
      %s219 = scalar_lea.vmem %s0, %s218
      %p220 = scmp.lt.s32.totalorder %s16, 1
      %s221 = scalar_select %p220, %s16, 1
      %s222 = smul.addr %s221, 32
      %s223 = smul.addr %s222, 8
      %s224 = scalar_lea.vmem %s5, %s223
      %v226 = vld [vmem:[%s2] sm:$0x1]
      loop: start=0, step=1, limit=2
      $region41: #{plainnet_basic_block_forward.1} parent=39 // loop_pre_header
        _
      $region42: #{plainnet_basic_block_forward.1} parent=39 // loop_header
        %s228 = sphi 0, %s232
        %p229 = scmp.ge.s32.totalorder %s228, 2
      $region43: #{plainnet_basic_block_forward.1} parent=39 // loop_header_branch
        %231 = sbr.rel (%p229) target = $region47
      $region44: #{plainnet_basic_block_forward.1} parent=39 // loop_body
        %s233 = smul.u32 %s228, 8
        %v235 = vlaneseq
        %v236 = vshrl.u32 %v235, 7
        %v237 = vsub.s32 0, %v236
        %v238 = vrot.slane %v226, %v237
        %s240 = smul.u32 %s233, 2
        %s241 = smul.addr %s240, 4
        %s242 = scalar_lea.vmem %s219, %s241
        %v243 = vld [vmem:[%s242] sm:$0xf]
        %v244 = vld [vmem:[%s242 + $0x4] sm:$0xf]
        %v245 = vld [vmem:[%s242 + $0x8] sm:$0xf]
        %v246 = vld [vmem:[%s242 + $0xc] sm:$0xf]
        %v247 = vld [vmem:[%s242 + $0x10] sm:$0xf]
        %v248 = vld [vmem:[%s242 + $0x14] sm:$0xf]
        %v249 = vld [vmem:[%s242 + $0x18] sm:$0xf]
        %v250 = vld [vmem:[%s242 + $0x1c] sm:$0xf]
        %v251 = vld [vmem:[%s242 + $0x20] sm:$0xf]
        %v252 = vld [vmem:[%s242 + $0x24] sm:$0xf]
        %v253 = vld [vmem:[%s242 + $0x28] sm:$0xf]
        %v254 = vld [vmem:[%s242 + $0x2c] sm:$0xf]
        %v255 = vld [vmem:[%s242 + $0x30] sm:$0xf]
        %v256 = vld [vmem:[%s242 + $0x34] sm:$0xf]
        %v257 = vld [vmem:[%s242 + $0x38] sm:$0xf]
        %v258 = vld [vmem:[%s242 + $0x3c] sm:$0xf]
        %v259 = vld [vmem:[%s1] sm:$0xf]
        %v260 = vld [vmem:[%s1 + $0x4] sm:$0xf]
        %v261 = vld [vmem:[%s1 + $0x8] sm:$0xf]
        %v262 = vld [vmem:[%s1 + $0xc] sm:$0xf]
        %v263 = vld [vmem:[%s1 + $0x10] sm:$0xf]
        %v264 = vld [vmem:[%s1 + $0x14] sm:$0xf]
        %v265 = vld [vmem:[%s1 + $0x18] sm:$0xf]
        %v266 = vld [vmem:[%s1 + $0x1c] sm:$0xf]
        %v267 = vld [vmem:[%s1 + $0x20] sm:$0xf]
        %v268 = vld [vmem:[%s1 + $0x24] sm:$0xf]
        %v269 = vld [vmem:[%s1 + $0x28] sm:$0xf]
        %v270 = vld [vmem:[%s1 + $0x2c] sm:$0xf]
        %v271 = vld [vmem:[%s1 + $0x30] sm:$0xf]
        %v272 = vld [vmem:[%s1 + $0x34] sm:$0xf]
        %v273 = vld [vmem:[%s1 + $0x38] sm:$0xf]
        %v274 = vld [vmem:[%s1 + $0x3c] sm:$0xf]
        %v291 = vunpack.c.l.b16 %v243
        %v292 = vunpack.c.l.b16 %v244
        %v293 = vunpack.c.l.b16 %v245
        %v294 = vunpack.c.l.b16 %v246
        %v295 = vunpack.c.l.b16 %v247
        %v296 = vunpack.c.l.b16 %v248
        %v297 = vunpack.c.l.b16 %v249
        %v298 = vunpack.c.l.b16 %v250
        %v299 = vunpack.c.l.b16 %v251
        %v300 = vunpack.c.l.b16 %v252
        %v301 = vunpack.c.l.b16 %v253
        %v302 = vunpack.c.l.b16 %v254
        %v303 = vunpack.c.l.b16 %v255
        %v304 = vunpack.c.l.b16 %v256
        %v305 = vunpack.c.l.b16 %v257
        %v306 = vunpack.c.l.b16 %v258
        %v307 = vpack.c.b16 %v292, %v291
        %v308 = vpack.c.b16 %v294, %v293
        %v309 = vpack.c.b16 %v296, %v295
        %v310 = vpack.c.b16 %v298, %v297
        %v311 = vpack.c.b16 %v300, %v299
        %v312 = vpack.c.b16 %v302, %v301
        %v313 = vpack.c.b16 %v304, %v303
        %v314 = vpack.c.b16 %v306, %v305
        %v339 = vunpack.c.l.b16 %v259
        %v340 = vunpack.c.l.b16 %v260
        %v341 = vunpack.c.l.b16 %v261
        %v342 = vunpack.c.l.b16 %v262
        %v343 = vunpack.c.l.b16 %v263
        %v344 = vunpack.c.l.b16 %v264
        %v345 = vunpack.c.l.b16 %v265
        %v346 = vunpack.c.l.b16 %v266
        %v347 = vunpack.c.l.b16 %v267
        %v348 = vunpack.c.l.b16 %v268
        %v349 = vunpack.c.l.b16 %v269
        %v350 = vunpack.c.l.b16 %v270
        %v351 = vunpack.c.l.b16 %v271
        %v352 = vunpack.c.l.b16 %v272
        %v353 = vunpack.c.l.b16 %v273
        %v354 = vunpack.c.l.b16 %v274
        %v355 = vpack.c.b16 %v340, %v339
        %v356 = vpack.c.b16 %v342, %v341
        %v357 = vpack.c.b16 %v344, %v343
        %v358 = vpack.c.b16 %v346, %v345
        %v359 = vpack.c.b16 %v348, %v347
        %v360 = vpack.c.b16 %v350, %v349
        %v361 = vpack.c.b16 %v352, %v351
        %v362 = vpack.c.b16 %v354, %v353
        %371 = vmatprep.subr.bf16.mxu0 0
        %372 = vmatpush1.bf16.msra.mxu0 %v362
        %373 = vmatprep.subr.bf16.mxu0 0
        %374 = vmatpush1.bf16.msra.mxu0 %v361
        %375 = vmatprep.subr.bf16.mxu0 0
        %376 = vmatpush1.bf16.msra.mxu0 %v360
        %377 = vmatprep.subr.bf16.mxu0 0
        %378 = vmatpush1.bf16.msra.mxu0 %v359
        %379 = vmatprep.subr.bf16.mxu0 0
        %380 = vmatpush1.bf16.msra.mxu0 %v358
        %381 = vmatprep.subr.bf16.mxu0 0
        %382 = vmatpush1.bf16.msra.mxu0 %v357
        %383 = vmatprep.subr.bf16.mxu0 0
        %384 = vmatpush1.bf16.msra.mxu0 %v356
        %385 = vmatprep.subr.bf16.mxu0 0
        %386 = vmatpush1.bf16.msra.mxu0 %v355
        %387 = vmatprep.subr.bf16.mxu0 0
        %388 = vmatpush2.bf16.msra.mxu0 0
        %389 = vmatprep.subr.bf16.mxu0 0
        %390 = vmatpush2.bf16.msra.mxu0 0
        %391 = vmatprep.subr.bf16.mxu0 0
        %392 = vmatpush2.bf16.msra.mxu0 0
        %393 = vmatprep.subr.bf16.mxu0 0
        %394 = vmatpush2.bf16.msra.mxu0 0
        %395 = vmatprep.subr.bf16.mxu0 0
        %396 = vmatpush2.bf16.msra.mxu0 0
        %397 = vmatprep.subr.bf16.mxu0 0
        %398 = vmatpush2.bf16.msra.mxu0 0
        %399 = vmatprep.subr.bf16.mxu0 0
        %400 = vmatpush2.bf16.msra.mxu0 0
        %401 = vmatprep.subr.bf16.mxu0 0
        %402 = vmatpush2.bf16.msra.mxu0 0
        %403 = vmatprep.mubr.bf16.mxu0 0
        %404 = vmatmul.mubr.bf16.gmra.mxu0 %v307
        %v405 = vpop.f32.mrf.mxu0
        %v406 = vadd.f32 0.0, %v405
        %v407 = vpop.f32.mrf.mxu0
        %v408 = vpop.f32.mrf.mxu0
        %v409 = vadd.f32 0.0, %v408
        %v410 = vpop.f32.mrf.mxu0
        %411 = vmatprep.mubr.bf16.mxu0 0
        %412 = vmatmul.mubr.bf16.gmra.mxu0 %v308
        %v413 = vpop.f32.mrf.mxu0
        %v414 = vadd.f32 0.0, %v413
        %v415 = vpop.f32.mrf.mxu0
        %v416 = vpop.f32.mrf.mxu0
        %v417 = vadd.f32 0.0, %v416
        %v418 = vpop.f32.mrf.mxu0
        %419 = vmatprep.mubr.bf16.mxu0 0
        %420 = vmatmul.mubr.bf16.gmra.mxu0 %v309
        %v421 = vpop.f32.mrf.mxu0
        %v422 = vadd.f32 0.0, %v421
        %v423 = vpop.f32.mrf.mxu0
        %v424 = vpop.f32.mrf.mxu0
        %v425 = vadd.f32 0.0, %v424
        %v426 = vpop.f32.mrf.mxu0
        %427 = vmatprep.mubr.bf16.mxu0 0
        %428 = vmatmul.mubr.bf16.gmra.mxu0 %v310
        %v429 = vpop.f32.mrf.mxu0
        %v430 = vadd.f32 0.0, %v429
        %v431 = vpop.f32.mrf.mxu0
        %v432 = vpop.f32.mrf.mxu0
        %v433 = vadd.f32 0.0, %v432
        %v434 = vpop.f32.mrf.mxu0
        %435 = vmatprep.mubr.bf16.mxu0 0
        %436 = vmatmul.mubr.bf16.gmra.mxu0 %v311
        %v437 = vpop.f32.mrf.mxu0
        %v438 = vadd.f32 0.0, %v437
        %v439 = vpop.f32.mrf.mxu0
        %v440 = vpop.f32.mrf.mxu0
        %v441 = vadd.f32 0.0, %v440
        %v442 = vpop.f32.mrf.mxu0
        %443 = vmatprep.mubr.bf16.mxu0 0
        %444 = vmatmul.mubr.bf16.gmra.mxu0 %v312
        %v445 = vpop.f32.mrf.mxu0
        %v446 = vadd.f32 0.0, %v445
        %v447 = vpop.f32.mrf.mxu0
        %v448 = vpop.f32.mrf.mxu0
        %v449 = vadd.f32 0.0, %v448
        %v450 = vpop.f32.mrf.mxu0
        %451 = vmatprep.mubr.bf16.mxu0 0
        %452 = vmatmul.mubr.bf16.gmra.mxu0 %v313
        %v453 = vpop.f32.mrf.mxu0
        %v454 = vadd.f32 0.0, %v453
        %v455 = vpop.f32.mrf.mxu0
        %v456 = vpop.f32.mrf.mxu0
        %v457 = vadd.f32 0.0, %v456
        %v458 = vpop.f32.mrf.mxu0
        %459 = vmatprep.mubr.bf16.mxu0 0
        %460 = vmatmul.mubr.bf16.gmra.mxu0 %v314
        %v461 = vpop.f32.mrf.mxu0
        %v462 = vadd.f32 0.0, %v461
        %v463 = vpop.f32.mrf.mxu0
        %v464 = vpop.f32.mrf.mxu0
        %v465 = vadd.f32 0.0, %v464
        %v466 = vpop.f32.mrf.mxu0
        %467 = vdwg.mxu0
        %v468 = vadd.f32 %v238, %v406
        %v469 = vadd.f32 %v238, %v409
        %v470 = vadd.f32 %v238, %v414
        %v471 = vadd.f32 %v238, %v417
        %v472 = vadd.f32 %v238, %v422
        %v473 = vadd.f32 %v238, %v425
        %v474 = vadd.f32 %v238, %v430
        %v475 = vadd.f32 %v238, %v433
        %v476 = vadd.f32 %v238, %v438
        %v477 = vadd.f32 %v238, %v441
        %v478 = vadd.f32 %v238, %v446
        %v479 = vadd.f32 %v238, %v449
        %v480 = vadd.f32 %v238, %v454
        %v481 = vadd.f32 %v238, %v457
        %v482 = vadd.f32 %v238, %v462
        %v483 = vadd.f32 %v238, %v465
        %v484 = vmax.f32 %v468, 0.0
        %v485 = vmax.f32 %v469, 0.0
        %v486 = vmax.f32 %v470, 0.0
        %v487 = vmax.f32 %v471, 0.0
        %v488 = vmax.f32 %v472, 0.0
        %v489 = vmax.f32 %v473, 0.0
        %v490 = vmax.f32 %v474, 0.0
        %v491 = vmax.f32 %v475, 0.0
        %v492 = vmax.f32 %v476, 0.0
        %v493 = vmax.f32 %v477, 0.0
        %v494 = vmax.f32 %v478, 0.0
        %v495 = vmax.f32 %v479, 0.0
        %v496 = vmax.f32 %v480, 0.0
        %v497 = vmax.f32 %v481, 0.0
        %v498 = vmax.f32 %v482, 0.0
        %v499 = vmax.f32 %v483, 0.0
        %v500 = vpack.c.bf16 %v485, %v484
        %v501 = vpack.c.bf16 %v487, %v486
        %v502 = vpack.c.bf16 %v489, %v488
        %v503 = vpack.c.bf16 %v491, %v490
        %v504 = vpack.c.bf16 %v493, %v492
        %v505 = vpack.c.bf16 %v495, %v494
        %v506 = vpack.c.bf16 %v497, %v496
        %v507 = vpack.c.bf16 %v499, %v498
        %s508 = sadd.s32 %s233, 1
        %v517 = vunpack.c.l.b16 %v500
        %v518 = vunpack.c.h.b16 %v500
        %v519 = vunpack.c.l.b16 %v501
        %v520 = vunpack.c.h.b16 %v501
        %v521 = vunpack.c.l.b16 %v502
        %v522 = vunpack.c.h.b16 %v502
        %v523 = vunpack.c.l.b16 %v503
        %v524 = vunpack.c.h.b16 %v503
        %v525 = vunpack.c.l.b16 %v504
        %v526 = vunpack.c.h.b16 %v504
        %v527 = vunpack.c.l.b16 %v505
        %v528 = vunpack.c.h.b16 %v505
        %v529 = vunpack.c.l.b16 %v506
        %v530 = vunpack.c.h.b16 %v506
        %v531 = vunpack.c.l.b16 %v507
        %v532 = vunpack.c.h.b16 %v507
        %v533 = vpack.c.b16 %v517, %v517
        %v534 = vpack.c.b16 %v518, %v518
        %v535 = vpack.c.b16 %v519, %v519
        %v536 = vpack.c.b16 %v520, %v520
        %v537 = vpack.c.b16 %v521, %v521
        %v538 = vpack.c.b16 %v522, %v522
        %v539 = vpack.c.b16 %v523, %v523
        %v540 = vpack.c.b16 %v524, %v524
        %v541 = vpack.c.b16 %v525, %v525
        %v542 = vpack.c.b16 %v526, %v526
        %v543 = vpack.c.b16 %v527, %v527
        %v544 = vpack.c.b16 %v528, %v528
        %v545 = vpack.c.b16 %v529, %v529
        %v546 = vpack.c.b16 %v530, %v530
        %v547 = vpack.c.b16 %v531, %v531
        %v548 = vpack.c.b16 %v532, %v532
        %s565 = smul.u32 %s508, 2
        %s566 = sadd.s32 %s565, 36
        %s567 = smul.addr %s566, 4
        %s568 = scalar_lea.vmem [#allocation2], %s567
        %569 = vst [vmem:[%s568] sm:$0xf] %v533
        %570 = vst [vmem:[%s568 + $0x4] sm:$0xf] %v534
        %571 = vst [vmem:[%s568 + $0x8] sm:$0xf] %v535
        %572 = vst [vmem:[%s568 + $0xc] sm:$0xf] %v536
        %573 = vst [vmem:[%s568 + $0x10] sm:$0xf] %v537
        %574 = vst [vmem:[%s568 + $0x14] sm:$0xf] %v538
        %575 = vst [vmem:[%s568 + $0x18] sm:$0xf] %v539
        %576 = vst [vmem:[%s568 + $0x1c] sm:$0xf] %v540
        %577 = vst [vmem:[%s568 + $0x20] sm:$0xf] %v541
        %578 = vst [vmem:[%s568 + $0x24] sm:$0xf] %v542
        %579 = vst [vmem:[%s568 + $0x28] sm:$0xf] %v543
        %580 = vst [vmem:[%s568 + $0x2c] sm:$0xf] %v544
        %581 = vst [vmem:[%s568 + $0x30] sm:$0xf] %v545
        %582 = vst [vmem:[%s568 + $0x34] sm:$0xf] %v546
        %583 = vst [vmem:[%s568 + $0x38] sm:$0xf] %v547
        %584 = vst [vmem:[%s568 + $0x3c] sm:$0xf] %v548
      $region45: #{plainnet_basic_block_forward.1} parent=39 // loop_footer
        %s232 = sadd.s32 1, %s228
      $region46: #{plainnet_basic_block_forward.1} parent=39 // loop_footer_branch
        %227 = sbr.rel target = $region42
      $region47: #{plainnet_basic_block_forward.1} parent=39 // loop_exit
        _
      %s585 = scalar_lea.vmem [#allocation2], 144
      %586 = vst [vmem:[%s585] sm:$0xf] 0
      %587 = vst [vmem:[%s585 + $0x4] sm:$0xf] 0
      %s588 = scalar_lea.vmem [#allocation2], 280
      %589 = vst [vmem:[%s588] sm:$0xf] 0
      %590 = vst [vmem:[%s588 + $0x4] sm:$0xf] 0
      %v591 = vld [vmem:[%s585] sm:$0xf]
      %v592 = vld [vmem:[%s585 + $0x4] sm:$0xf]
      %v593 = vld [vmem:[%s585 + $0x8] sm:$0xf]
      %v594 = vld [vmem:[%s585 + $0xc] sm:$0xf]
      %v595 = vld [vmem:[%s585 + $0x10] sm:$0xf]
      %v596 = vld [vmem:[%s585 + $0x14] sm:$0xf]
      %v597 = vld [vmem:[%s585 + $0x18] sm:$0xf]
      %v598 = vld [vmem:[%s585 + $0x1c] sm:$0xf]
      %v599 = vld [vmem:[%s585 + $0x20] sm:$0xf]
      %v600 = vld [vmem:[%s585 + $0x24] sm:$0xf]
      %v601 = vld [vmem:[%s585 + $0x28] sm:$0xf]
      %v602 = vld [vmem:[%s585 + $0x2c] sm:$0xf]
      %v603 = vld [vmem:[%s585 + $0x30] sm:$0xf]
      %v604 = vld [vmem:[%s585 + $0x34] sm:$0xf]
      %v605 = vld [vmem:[%s585 + $0x38] sm:$0xf]
      %v606 = vld [vmem:[%s585 + $0x3c] sm:$0xf]
      %v607 = vld [vmem:[%s585 + $0x40] sm:$0xf]
      %v608 = vld [vmem:[%s585 + $0x44] sm:$0xf]
      %v609 = vld [vmem:[%s585 + $0x48] sm:$0xf]
      %v610 = vld [vmem:[%s585 + $0x4c] sm:$0xf]
      %v611 = vld [vmem:[%s585 + $0x50] sm:$0xf]
      %v612 = vld [vmem:[%s585 + $0x54] sm:$0xf]
      %v613 = vld [vmem:[%s585 + $0x58] sm:$0xf]
      %v614 = vld [vmem:[%s585 + $0x5c] sm:$0xf]
      %v615 = vld [vmem:[%s585 + $0x60] sm:$0xf]
      %v616 = vld [vmem:[%s585 + $0x64] sm:$0xf]
      %v617 = vld [vmem:[%s585 + $0x68] sm:$0xf]
      %v618 = vld [vmem:[%s585 + $0x6c] sm:$0xf]
      %v619 = vld [vmem:[%s585 + $0x70] sm:$0xf]
      %v620 = vld [vmem:[%s585 + $0x74] sm:$0xf]
      %v621 = vld [vmem:[%s585 + $0x78] sm:$0xf]
      %v622 = vld [vmem:[%s585 + $0x7c] sm:$0xf]
      %v623 = vld [vmem:[%s585 + $0x80] sm:$0xf]
      %v624 = vld [vmem:[%s585 + $0x84] sm:$0xf]
      %v625 = vld [vmem:[%s585 + $0x88] sm:$0xf]
      %v626 = vld [vmem:[%s585 + $0x8c] sm:$0xf]
      %vm627 = vsmask.f32 256
      %vm628 = vsmask.f32 4368
      %vm629 = vmor %vm627, %vm628
      %v631 = vshrl.u32 %v591, 16
      %v633 = vrot.slane %v631, 7
      %v634 = vshll.u32 %v591, 16
      %v636 = vor.u32 %v633, %v634
      %v637 = vrot.slane %v633, 4
      %v639 = vshrl.u32 %v592, 16
      %v641 = vrot.slane %v639, 7
      %v642 = vshll.u32 %v592, 16
      %v644 = vor.u32 %v641, %v642
      %v645 = vsel %vm629, %v637, %v644
      %v647 = vshrl.u32 %v593, 16
      %v649 = vrot.slane %v647, 7
      %v650 = vshll.u32 %v593, 16
      %v652 = vor.u32 %v649, %v650
      %v653 = vrot.slane %v649, 4
      %v655 = vshrl.u32 %v594, 16
      %v657 = vrot.slane %v655, 7
      %v658 = vshll.u32 %v594, 16
      %v660 = vor.u32 %v657, %v658
      %v661 = vsel %vm629, %v653, %v660
      %v663 = vshrl.u32 %v595, 16
      %v665 = vrot.slane %v663, 7
      %v666 = vshll.u32 %v595, 16
      %v668 = vor.u32 %v665, %v666
      %v669 = vrot.slane %v665, 4
      %v671 = vshrl.u32 %v596, 16
      %v673 = vrot.slane %v671, 7
      %v674 = vshll.u32 %v596, 16
      %v676 = vor.u32 %v673, %v674
      %v677 = vsel %vm629, %v669, %v676
      %v679 = vshrl.u32 %v597, 16
      %v681 = vrot.slane %v679, 7
      %v682 = vshll.u32 %v597, 16
      %v684 = vor.u32 %v681, %v682
      %v685 = vrot.slane %v681, 4
      %v687 = vshrl.u32 %v598, 16
      %v689 = vrot.slane %v687, 7
      %v690 = vshll.u32 %v598, 16
      %v692 = vor.u32 %v689, %v690
      %v693 = vsel %vm629, %v685, %v692
      %v695 = vshrl.u32 %v599, 16
      %v697 = vrot.slane %v695, 7
      %v698 = vshll.u32 %v599, 16
      %v700 = vor.u32 %v697, %v698
      %v701 = vrot.slane %v697, 4
      %v703 = vshrl.u32 %v600, 16
      %v705 = vrot.slane %v703, 7
      %v706 = vshll.u32 %v600, 16
      %v708 = vor.u32 %v705, %v706
      %v709 = vsel %vm629, %v701, %v708
      %v711 = vshrl.u32 %v601, 16
      %v713 = vrot.slane %v711, 7
      %v714 = vshll.u32 %v601, 16
      %v716 = vor.u32 %v713, %v714
      %v717 = vrot.slane %v713, 4
      %v719 = vshrl.u32 %v602, 16
      %v721 = vrot.slane %v719, 7
      %v722 = vshll.u32 %v602, 16
      %v724 = vor.u32 %v721, %v722
      %v725 = vsel %vm629, %v717, %v724
      %v727 = vshrl.u32 %v603, 16
      %v729 = vrot.slane %v727, 7
      %v730 = vshll.u32 %v603, 16
      %v732 = vor.u32 %v729, %v730
      %v733 = vrot.slane %v729, 4
      %v735 = vshrl.u32 %v604, 16
      %v737 = vrot.slane %v735, 7
      %v738 = vshll.u32 %v604, 16
      %v740 = vor.u32 %v737, %v738
      %v741 = vsel %vm629, %v733, %v740
      %v743 = vshrl.u32 %v605, 16
      %v745 = vrot.slane %v743, 7
      %v746 = vshll.u32 %v605, 16
      %v748 = vor.u32 %v745, %v746
      %v749 = vrot.slane %v745, 4
      %v751 = vshrl.u32 %v606, 16
      %v753 = vrot.slane %v751, 7
      %v754 = vshll.u32 %v606, 16
      %v756 = vor.u32 %v753, %v754
      %v757 = vsel %vm629, %v749, %v756
      %v759 = vshrl.u32 %v607, 16
      %v761 = vrot.slane %v759, 7
      %v762 = vshll.u32 %v607, 16
      %v764 = vor.u32 %v761, %v762
      %v765 = vrot.slane %v761, 4
      %v767 = vshrl.u32 %v608, 16
      %v769 = vrot.slane %v767, 7
      %v770 = vshll.u32 %v608, 16
      %v772 = vor.u32 %v769, %v770
      %v773 = vsel %vm629, %v765, %v772
      %v775 = vshrl.u32 %v609, 16
      %v777 = vrot.slane %v775, 7
      %v778 = vshll.u32 %v609, 16
      %v780 = vor.u32 %v777, %v778
      %v781 = vrot.slane %v777, 4
      %v783 = vshrl.u32 %v610, 16
      %v785 = vrot.slane %v783, 7
      %v786 = vshll.u32 %v610, 16
      %v788 = vor.u32 %v785, %v786
      %v789 = vsel %vm629, %v781, %v788
      %v791 = vshrl.u32 %v611, 16
      %v793 = vrot.slane %v791, 7
      %v794 = vshll.u32 %v611, 16
      %v796 = vor.u32 %v793, %v794
      %v797 = vrot.slane %v793, 4
      %v799 = vshrl.u32 %v612, 16
      %v801 = vrot.slane %v799, 7
      %v802 = vshll.u32 %v612, 16
      %v804 = vor.u32 %v801, %v802
      %v805 = vsel %vm629, %v797, %v804
      %v807 = vshrl.u32 %v613, 16
      %v809 = vrot.slane %v807, 7
      %v810 = vshll.u32 %v613, 16
      %v812 = vor.u32 %v809, %v810
      %v813 = vrot.slane %v809, 4
      %v815 = vshrl.u32 %v614, 16
      %v817 = vrot.slane %v815, 7
      %v818 = vshll.u32 %v614, 16
      %v820 = vor.u32 %v817, %v818
      %v821 = vsel %vm629, %v813, %v820
      %v823 = vshrl.u32 %v615, 16
      %v825 = vrot.slane %v823, 7
      %v826 = vshll.u32 %v615, 16
      %v828 = vor.u32 %v825, %v826
      %v829 = vrot.slane %v825, 4
      %v831 = vshrl.u32 %v616, 16
      %v833 = vrot.slane %v831, 7
      %v834 = vshll.u32 %v616, 16
      %v836 = vor.u32 %v833, %v834
      %v837 = vsel %vm629, %v829, %v836
      %v839 = vshrl.u32 %v617, 16
      %v841 = vrot.slane %v839, 7
      %v842 = vshll.u32 %v617, 16
      %v844 = vor.u32 %v841, %v842
      %v845 = vrot.slane %v841, 4
      %v847 = vshrl.u32 %v618, 16
      %v849 = vrot.slane %v847, 7
      %v850 = vshll.u32 %v618, 16
      %v852 = vor.u32 %v849, %v850
      %v853 = vsel %vm629, %v845, %v852
      %v855 = vshrl.u32 %v619, 16
      %v857 = vrot.slane %v855, 7
      %v858 = vshll.u32 %v619, 16
      %v860 = vor.u32 %v857, %v858
      %v861 = vrot.slane %v857, 4
      %v863 = vshrl.u32 %v620, 16
      %v865 = vrot.slane %v863, 7
      %v866 = vshll.u32 %v620, 16
      %v868 = vor.u32 %v865, %v866
      %v869 = vsel %vm629, %v861, %v868
      %v871 = vshrl.u32 %v621, 16
      %v873 = vrot.slane %v871, 7
      %v874 = vshll.u32 %v621, 16
      %v876 = vor.u32 %v873, %v874
      %v877 = vrot.slane %v873, 4
      %v879 = vshrl.u32 %v622, 16
      %v881 = vrot.slane %v879, 7
      %v882 = vshll.u32 %v622, 16
      %v884 = vor.u32 %v881, %v882
      %v885 = vsel %vm629, %v877, %v884
      %v887 = vshrl.u32 %v623, 16
      %v889 = vrot.slane %v887, 7
      %v890 = vshll.u32 %v623, 16
      %v892 = vor.u32 %v889, %v890
      %v893 = vrot.slane %v889, 4
      %v895 = vshrl.u32 %v624, 16
      %v897 = vrot.slane %v895, 7
      %v898 = vshll.u32 %v624, 16
      %v900 = vor.u32 %v897, %v898
      %v901 = vsel %vm629, %v893, %v900
      %v903 = vshrl.u32 %v625, 16
      %v905 = vrot.slane %v903, 7
      %v906 = vshll.u32 %v625, 16
      %v908 = vor.u32 %v905, %v906
      %v909 = vrot.slane %v905, 4
      %v911 = vshrl.u32 %v626, 16
      %v913 = vrot.slane %v911, 7
      %v914 = vshll.u32 %v626, 16
      %v916 = vor.u32 %v913, %v914
      %v917 = vsel %vm629, %v909, %v916
      %vm954 = vcmask 1043456
      %vm955 = vsmask.f32 7938
      %vm956 = vmand %vm954, %vm955
      %v957 = vld [vmem:[#allocation2] sm:$0xf]
      %v958 = vsel %vm956, %v636, %v957
      %959 = vst [vmem:[#allocation2] sm:$0xf] %v958
      %960 = vst [vmem:[#allocation2 + $0x4] sm:$0xf] %v645
      %v961 = vld [vmem:[#allocation2 + $0x8] sm:$0xf]
      %v962 = vsel %vm956, %v652, %v961
      %963 = vst [vmem:[#allocation2 + $0x8] sm:$0xf] %v962
      %964 = vst [vmem:[#allocation2 + $0xc] sm:$0xf] %v661
      %v965 = vld [vmem:[#allocation2 + $0x10] sm:$0xf]
      %v966 = vsel %vm956, %v668, %v965
      %967 = vst [vmem:[#allocation2 + $0x10] sm:$0xf] %v966
      %968 = vst [vmem:[#allocation2 + $0x14] sm:$0xf] %v677
      %v969 = vld [vmem:[#allocation2 + $0x18] sm:$0xf]
      %v970 = vsel %vm956, %v684, %v969
      %971 = vst [vmem:[#allocation2 + $0x18] sm:$0xf] %v970
      %972 = vst [vmem:[#allocation2 + $0x1c] sm:$0xf] %v693
      %v973 = vld [vmem:[#allocation2 + $0x20] sm:$0xf]
      %v974 = vsel %vm956, %v700, %v973
      %975 = vst [vmem:[#allocation2 + $0x20] sm:$0xf] %v974
      %976 = vst [vmem:[#allocation2 + $0x24] sm:$0xf] %v709
      %v977 = vld [vmem:[#allocation2 + $0x28] sm:$0xf]
      %v978 = vsel %vm956, %v716, %v977
      %979 = vst [vmem:[#allocation2 + $0x28] sm:$0xf] %v978
      %980 = vst [vmem:[#allocation2 + $0x2c] sm:$0xf] %v725
      %v981 = vld [vmem:[#allocation2 + $0x30] sm:$0xf]
      %v982 = vsel %vm956, %v732, %v981
      %983 = vst [vmem:[#allocation2 + $0x30] sm:$0xf] %v982
      %984 = vst [vmem:[#allocation2 + $0x34] sm:$0xf] %v741
      %v985 = vld [vmem:[#allocation2 + $0x38] sm:$0xf]
      %v986 = vsel %vm956, %v748, %v985
      %987 = vst [vmem:[#allocation2 + $0x38] sm:$0xf] %v986
      %988 = vst [vmem:[#allocation2 + $0x3c] sm:$0xf] %v757
      %v989 = vld [vmem:[#allocation2 + $0x40] sm:$0xf]
      %v990 = vsel %vm956, %v764, %v989
      %991 = vst [vmem:[#allocation2 + $0x40] sm:$0xf] %v990
      %992 = vst [vmem:[#allocation2 + $0x44] sm:$0xf] %v773
      %v993 = vld [vmem:[#allocation2 + $0x48] sm:$0xf]
      %v994 = vsel %vm956, %v780, %v993
      %995 = vst [vmem:[#allocation2 + $0x48] sm:$0xf] %v994
      %996 = vst [vmem:[#allocation2 + $0x4c] sm:$0xf] %v789
      %v997 = vld [vmem:[#allocation2 + $0x50] sm:$0xf]
      %v998 = vsel %vm956, %v796, %v997
      %999 = vst [vmem:[#allocation2 + $0x50] sm:$0xf] %v998
      %1000 = vst [vmem:[#allocation2 + $0x54] sm:$0xf] %v805
      %v1001 = vld [vmem:[#allocation2 + $0x58] sm:$0xf]
      %v1002 = vsel %vm956, %v812, %v1001
      %1003 = vst [vmem:[#allocation2 + $0x58] sm:$0xf] %v1002
      %1004 = vst [vmem:[#allocation2 + $0x5c] sm:$0xf] %v821
      %v1005 = vld [vmem:[#allocation2 + $0x60] sm:$0xf]
      %v1006 = vsel %vm956, %v828, %v1005
      %1007 = vst [vmem:[#allocation2 + $0x60] sm:$0xf] %v1006
      %1008 = vst [vmem:[#allocation2 + $0x64] sm:$0xf] %v837
      %v1009 = vld [vmem:[#allocation2 + $0x68] sm:$0xf]
      %v1010 = vsel %vm956, %v844, %v1009
      %1011 = vst [vmem:[#allocation2 + $0x68] sm:$0xf] %v1010
      %1012 = vst [vmem:[#allocation2 + $0x6c] sm:$0xf] %v853
      %v1013 = vld [vmem:[#allocation2 + $0x70] sm:$0xf]
      %v1014 = vsel %vm956, %v860, %v1013
      %1015 = vst [vmem:[#allocation2 + $0x70] sm:$0xf] %v1014
      %1016 = vst [vmem:[#allocation2 + $0x74] sm:$0xf] %v869
      %v1017 = vld [vmem:[#allocation2 + $0x78] sm:$0xf]
      %v1018 = vsel %vm956, %v876, %v1017
      %1019 = vst [vmem:[#allocation2 + $0x78] sm:$0xf] %v1018
      %1020 = vst [vmem:[#allocation2 + $0x7c] sm:$0xf] %v885
      %v1021 = vld [vmem:[#allocation2 + $0x80] sm:$0xf]
      %v1022 = vsel %vm956, %v892, %v1021
      %1023 = vst [vmem:[#allocation2 + $0x80] sm:$0xf] %v1022
      %1024 = vst [vmem:[#allocation2 + $0x84] sm:$0xf] %v901
      %v1025 = vld [vmem:[#allocation2 + $0x88] sm:$0xf]
      %v1026 = vsel %vm956, %v908, %v1025
      %1027 = vst [vmem:[#allocation2 + $0x88] sm:$0xf] %v1026
      %1028 = vst [vmem:[#allocation2 + $0x8c] sm:$0xf] %v917
      %vm1029 = vcmask 1040384
      %vm1030 = vmand %vm1029, %vm627
      %v1031 = vld [vmem:[#allocation2] sm:$0x1]
      %v1032 = vsel %vm1030, 0, %v1031
      %1033 = vst [vmem:[#allocation2] sm:$0x1] %v1032
      %v1034 = vld [vmem:[#allocation2 + $0x8] sm:$0x1]
      %v1035 = vsel %vm1030, 0, %v1034
      %1036 = vst [vmem:[#allocation2 + $0x8] sm:$0x1] %v1035
      %v1037 = vld [vmem:[#allocation2 + $0x10] sm:$0x1]
      %v1038 = vsel %vm1030, 0, %v1037
      %1039 = vst [vmem:[#allocation2 + $0x10] sm:$0x1] %v1038
      %v1040 = vld [vmem:[#allocation2 + $0x18] sm:$0x1]
      %v1041 = vsel %vm1030, 0, %v1040
      %1042 = vst [vmem:[#allocation2 + $0x18] sm:$0x1] %v1041
      %v1043 = vld [vmem:[#allocation2 + $0x20] sm:$0x1]
      %v1044 = vsel %vm1030, 0, %v1043
      %1045 = vst [vmem:[#allocation2 + $0x20] sm:$0x1] %v1044
      %v1046 = vld [vmem:[#allocation2 + $0x28] sm:$0x1]
      %v1047 = vsel %vm1030, 0, %v1046
      %1048 = vst [vmem:[#allocation2 + $0x28] sm:$0x1] %v1047
      %v1049 = vld [vmem:[#allocation2 + $0x30] sm:$0x1]
      %v1050 = vsel %vm1030, 0, %v1049
      %1051 = vst [vmem:[#allocation2 + $0x30] sm:$0x1] %v1050
      %v1052 = vld [vmem:[#allocation2 + $0x38] sm:$0x1]
      %v1053 = vsel %vm1030, 0, %v1052
      %1054 = vst [vmem:[#allocation2 + $0x38] sm:$0x1] %v1053
      %v1055 = vld [vmem:[#allocation2 + $0x40] sm:$0x1]
      %v1056 = vsel %vm1030, 0, %v1055
      %1057 = vst [vmem:[#allocation2 + $0x40] sm:$0x1] %v1056
      %v1058 = vld [vmem:[#allocation2 + $0x48] sm:$0x1]
      %v1059 = vsel %vm1030, 0, %v1058
      %1060 = vst [vmem:[#allocation2 + $0x48] sm:$0x1] %v1059
      %v1061 = vld [vmem:[#allocation2 + $0x50] sm:$0x1]
      %v1062 = vsel %vm1030, 0, %v1061
      %1063 = vst [vmem:[#allocation2 + $0x50] sm:$0x1] %v1062
      %v1064 = vld [vmem:[#allocation2 + $0x58] sm:$0x1]
      %v1065 = vsel %vm1030, 0, %v1064
      %1066 = vst [vmem:[#allocation2 + $0x58] sm:$0x1] %v1065
      %v1067 = vld [vmem:[#allocation2 + $0x60] sm:$0x1]
      %v1068 = vsel %vm1030, 0, %v1067
      %1069 = vst [vmem:[#allocation2 + $0x60] sm:$0x1] %v1068
      %v1070 = vld [vmem:[#allocation2 + $0x68] sm:$0x1]
      %v1071 = vsel %vm1030, 0, %v1070
      %1072 = vst [vmem:[#allocation2 + $0x68] sm:$0x1] %v1071
      %v1073 = vld [vmem:[#allocation2 + $0x70] sm:$0x1]
      %v1074 = vsel %vm1030, 0, %v1073
      %1075 = vst [vmem:[#allocation2 + $0x70] sm:$0x1] %v1074
      %v1076 = vld [vmem:[#allocation2 + $0x78] sm:$0x1]
      %v1077 = vsel %vm1030, 0, %v1076
      %1078 = vst [vmem:[#allocation2 + $0x78] sm:$0x1] %v1077
      %v1079 = vld [vmem:[#allocation2 + $0x80] sm:$0x1]
      %v1080 = vsel %vm1030, 0, %v1079
      %1081 = vst [vmem:[#allocation2 + $0x80] sm:$0x1] %v1080
      %v1082 = vld [vmem:[#allocation2 + $0x88] sm:$0x1]
      %v1083 = vsel %vm1030, 0, %v1082
      %1084 = vst [vmem:[#allocation2 + $0x88] sm:$0x1] %v1083
      %v1085 = vld [vmem:[%s585] sm:$0xf]
      %v1086 = vld [vmem:[%s585 + $0x4] sm:$0xf]
      %v1087 = vld [vmem:[%s585 + $0x8] sm:$0xf]
      %v1088 = vld [vmem:[%s585 + $0xc] sm:$0xf]
      %v1089 = vld [vmem:[%s585 + $0x10] sm:$0xf]
      %v1090 = vld [vmem:[%s585 + $0x14] sm:$0xf]
      %v1091 = vld [vmem:[%s585 + $0x18] sm:$0xf]
      %v1092 = vld [vmem:[%s585 + $0x1c] sm:$0xf]
      %v1093 = vld [vmem:[%s585 + $0x20] sm:$0xf]
      %v1094 = vld [vmem:[%s585 + $0x24] sm:$0xf]
      %v1095 = vld [vmem:[%s585 + $0x28] sm:$0xf]
      %v1096 = vld [vmem:[%s585 + $0x2c] sm:$0xf]
      %v1097 = vld [vmem:[%s585 + $0x30] sm:$0xf]
      %v1098 = vld [vmem:[%s585 + $0x34] sm:$0xf]
      %v1099 = vld [vmem:[%s585 + $0x38] sm:$0xf]
      %v1100 = vld [vmem:[%s585 + $0x3c] sm:$0xf]
      %v1101 = vld [vmem:[%s585 + $0x40] sm:$0xf]
      %v1102 = vld [vmem:[%s585 + $0x44] sm:$0xf]
      %v1103 = vld [vmem:[%s585 + $0x48] sm:$0xf]
      %v1104 = vld [vmem:[%s585 + $0x4c] sm:$0xf]
      %v1105 = vld [vmem:[%s585 + $0x50] sm:$0xf]
      %v1106 = vld [vmem:[%s585 + $0x54] sm:$0xf]
      %v1107 = vld [vmem:[%s585 + $0x58] sm:$0xf]
      %v1108 = vld [vmem:[%s585 + $0x5c] sm:$0xf]
      %v1109 = vld [vmem:[%s585 + $0x60] sm:$0xf]
      %v1110 = vld [vmem:[%s585 + $0x64] sm:$0xf]
      %v1111 = vld [vmem:[%s585 + $0x68] sm:$0xf]
      %v1112 = vld [vmem:[%s585 + $0x6c] sm:$0xf]
      %v1113 = vld [vmem:[%s585 + $0x70] sm:$0xf]
      %v1114 = vld [vmem:[%s585 + $0x74] sm:$0xf]
      %v1115 = vld [vmem:[%s585 + $0x78] sm:$0xf]
      %v1116 = vld [vmem:[%s585 + $0x7c] sm:$0xf]
      %v1117 = vld [vmem:[%s585 + $0x80] sm:$0xf]
      %v1118 = vld [vmem:[%s585 + $0x84] sm:$0xf]
      %v1119 = vld [vmem:[%s585 + $0x88] sm:$0xf]
      %v1120 = vld [vmem:[%s585 + $0x8c] sm:$0xf]
      %vm1121 = vsmask.f32 3328
      %vm1122 = vsmask.f32 7440
      %vm1123 = vmor %vm1121, %vm1122
      %v1125 = vshrl.u32 %v1085, 16
      %v1127 = vrot.slane %v1125, 4
      %v1128 = vshll.u32 %v1085, 16
      %v1130 = vrot.slane %v1128, 5
      %v1131 = vor.u32 %v1127, %v1130
      %v1132 = vrot.slane %v1131, 4
      %v1134 = vshll.u32 %v1086, 16
      %v1136 = vrot.slane %v1134, 5
      %v1137 = vsel %vm1123, %v1132, %v1136
      %v1138 = vshrl.u32 %v1086, 16
      %v1140 = vrot.slane %v1138, 4
      %v1141 = vor.u32 %v1140, %v1136
      %v1142 = vrot.slane %v1141, 4
      %v1144 = vshrl.u32 %v1087, 16
      %v1146 = vrot.slane %v1144, 4
      %v1147 = vshll.u32 %v1087, 16
      %v1149 = vrot.slane %v1147, 5
      %v1150 = vor.u32 %v1146, %v1149
      %v1151 = vrot.slane %v1150, 4
      %v1153 = vshll.u32 %v1088, 16
      %v1155 = vrot.slane %v1153, 5
      %v1156 = vsel %vm1123, %v1151, %v1155
      %v1157 = vshrl.u32 %v1088, 16
      %v1159 = vrot.slane %v1157, 4
      %v1160 = vor.u32 %v1159, %v1155
      %v1161 = vrot.slane %v1160, 4
      %v1163 = vshrl.u32 %v1089, 16
      %v1165 = vrot.slane %v1163, 4
      %v1166 = vshll.u32 %v1089, 16
      %v1168 = vrot.slane %v1166, 5
      %v1169 = vor.u32 %v1165, %v1168
      %v1170 = vrot.slane %v1169, 4
      %v1172 = vshll.u32 %v1090, 16
      %v1174 = vrot.slane %v1172, 5
      %v1175 = vsel %vm1123, %v1170, %v1174
      %v1176 = vshrl.u32 %v1090, 16
      %v1178 = vrot.slane %v1176, 4
      %v1179 = vor.u32 %v1178, %v1174
      %v1180 = vrot.slane %v1179, 4
      %v1182 = vshrl.u32 %v1091, 16
      %v1184 = vrot.slane %v1182, 4
      %v1185 = vshll.u32 %v1091, 16
      %v1187 = vrot.slane %v1185, 5
      %v1188 = vor.u32 %v1184, %v1187
      %v1189 = vrot.slane %v1188, 4
      %v1191 = vshll.u32 %v1092, 16
      %v1193 = vrot.slane %v1191, 5
      %v1194 = vsel %vm1123, %v1189, %v1193
      %v1195 = vshrl.u32 %v1092, 16
      %v1197 = vrot.slane %v1195, 4
      %v1198 = vor.u32 %v1197, %v1193
      %v1199 = vrot.slane %v1198, 4
      %v1201 = vshrl.u32 %v1093, 16
      %v1203 = vrot.slane %v1201, 4
      %v1204 = vshll.u32 %v1093, 16
      %v1206 = vrot.slane %v1204, 5
      %v1207 = vor.u32 %v1203, %v1206
      %v1208 = vrot.slane %v1207, 4
      %v1210 = vshll.u32 %v1094, 16
      %v1212 = vrot.slane %v1210, 5
      %v1213 = vsel %vm1123, %v1208, %v1212
      %v1214 = vshrl.u32 %v1094, 16
      %v1216 = vrot.slane %v1214, 4
      %v1217 = vor.u32 %v1216, %v1212
      %v1218 = vrot.slane %v1217, 4
      %v1220 = vshrl.u32 %v1095, 16
      %v1222 = vrot.slane %v1220, 4
      %v1223 = vshll.u32 %v1095, 16
      %v1225 = vrot.slane %v1223, 5
      %v1226 = vor.u32 %v1222, %v1225
      %v1227 = vrot.slane %v1226, 4
      %v1229 = vshll.u32 %v1096, 16
      %v1231 = vrot.slane %v1229, 5
      %v1232 = vsel %vm1123, %v1227, %v1231
      %v1233 = vshrl.u32 %v1096, 16
      %v1235 = vrot.slane %v1233, 4
      %v1236 = vor.u32 %v1235, %v1231
      %v1237 = vrot.slane %v1236, 4
      %v1239 = vshrl.u32 %v1097, 16
      %v1241 = vrot.slane %v1239, 4
      %v1242 = vshll.u32 %v1097, 16
      %v1244 = vrot.slane %v1242, 5
      %v1245 = vor.u32 %v1241, %v1244
      %v1246 = vrot.slane %v1245, 4
      %v1248 = vshll.u32 %v1098, 16
      %v1250 = vrot.slane %v1248, 5
      %v1251 = vsel %vm1123, %v1246, %v1250
      %v1252 = vshrl.u32 %v1098, 16
      %v1254 = vrot.slane %v1252, 4
      %v1255 = vor.u32 %v1254, %v1250
      %v1256 = vrot.slane %v1255, 4
      %v1258 = vshrl.u32 %v1099, 16
      %v1260 = vrot.slane %v1258, 4
      %v1261 = vshll.u32 %v1099, 16
      %v1263 = vrot.slane %v1261, 5
      %v1264 = vor.u32 %v1260, %v1263
      %v1265 = vrot.slane %v1264, 4
      %v1267 = vshll.u32 %v1100, 16
      %v1269 = vrot.slane %v1267, 5
      %v1270 = vsel %vm1123, %v1265, %v1269
      %v1271 = vshrl.u32 %v1100, 16
      %v1273 = vrot.slane %v1271, 4
      %v1274 = vor.u32 %v1273, %v1269
      %v1275 = vrot.slane %v1274, 4
      %v1277 = vshrl.u32 %v1101, 16
      %v1279 = vrot.slane %v1277, 4
      %v1280 = vshll.u32 %v1101, 16
      %v1282 = vrot.slane %v1280, 5
      %v1283 = vor.u32 %v1279, %v1282
      %v1284 = vrot.slane %v1283, 4
      %v1286 = vshll.u32 %v1102, 16
      %v1288 = vrot.slane %v1286, 5
      %v1289 = vsel %vm1123, %v1284, %v1288
      %v1290 = vshrl.u32 %v1102, 16
      %v1292 = vrot.slane %v1290, 4
      %v1293 = vor.u32 %v1292, %v1288
      %v1294 = vrot.slane %v1293, 4
      %v1296 = vshrl.u32 %v1103, 16
      %v1298 = vrot.slane %v1296, 4
      %v1299 = vshll.u32 %v1103, 16
      %v1301 = vrot.slane %v1299, 5
      %v1302 = vor.u32 %v1298, %v1301
      %v1303 = vrot.slane %v1302, 4
      %v1305 = vshll.u32 %v1104, 16
      %v1307 = vrot.slane %v1305, 5
      %v1308 = vsel %vm1123, %v1303, %v1307
      %v1309 = vshrl.u32 %v1104, 16
      %v1311 = vrot.slane %v1309, 4
      %v1312 = vor.u32 %v1311, %v1307
      %v1313 = vrot.slane %v1312, 4
      %v1315 = vshrl.u32 %v1105, 16
      %v1317 = vrot.slane %v1315, 4
      %v1318 = vshll.u32 %v1105, 16
      %v1320 = vrot.slane %v1318, 5
      %v1321 = vor.u32 %v1317, %v1320
      %v1322 = vrot.slane %v1321, 4
      %v1324 = vshll.u32 %v1106, 16
      %v1326 = vrot.slane %v1324, 5
      %v1327 = vsel %vm1123, %v1322, %v1326
      %v1328 = vshrl.u32 %v1106, 16
      %v1330 = vrot.slane %v1328, 4
      %v1331 = vor.u32 %v1330, %v1326
      %v1332 = vrot.slane %v1331, 4
      %v1334 = vshrl.u32 %v1107, 16
      %v1336 = vrot.slane %v1334, 4
      %v1337 = vshll.u32 %v1107, 16
      %v1339 = vrot.slane %v1337, 5
      %v1340 = vor.u32 %v1336, %v1339
      %v1341 = vrot.slane %v1340, 4
      %v1343 = vshll.u32 %v1108, 16
      %v1345 = vrot.slane %v1343, 5
      %v1346 = vsel %vm1123, %v1341, %v1345
      %v1347 = vshrl.u32 %v1108, 16
      %v1349 = vrot.slane %v1347, 4
      %v1350 = vor.u32 %v1349, %v1345
      %v1351 = vrot.slane %v1350, 4
      %v1353 = vshrl.u32 %v1109, 16
      %v1355 = vrot.slane %v1353, 4
      %v1356 = vshll.u32 %v1109, 16
      %v1358 = vrot.slane %v1356, 5
      %v1359 = vor.u32 %v1355, %v1358
      %v1360 = vrot.slane %v1359, 4
      %v1362 = vshll.u32 %v1110, 16
      %v1364 = vrot.slane %v1362, 5
      %v1365 = vsel %vm1123, %v1360, %v1364
      %v1366 = vshrl.u32 %v1110, 16
      %v1368 = vrot.slane %v1366, 4
      %v1369 = vor.u32 %v1368, %v1364
      %v1370 = vrot.slane %v1369, 4
      %v1372 = vshrl.u32 %v1111, 16
      %v1374 = vrot.slane %v1372, 4
      %v1375 = vshll.u32 %v1111, 16
      %v1377 = vrot.slane %v1375, 5
      %v1378 = vor.u32 %v1374, %v1377
      %v1379 = vrot.slane %v1378, 4
      %v1381 = vshll.u32 %v1112, 16
      %v1383 = vrot.slane %v1381, 5
      %v1384 = vsel %vm1123, %v1379, %v1383
      %v1385 = vshrl.u32 %v1112, 16
      %v1387 = vrot.slane %v1385, 4
      %v1388 = vor.u32 %v1387, %v1383
      %v1389 = vrot.slane %v1388, 4
      %v1391 = vshrl.u32 %v1113, 16
      %v1393 = vrot.slane %v1391, 4
      %v1394 = vshll.u32 %v1113, 16
      %v1396 = vrot.slane %v1394, 5
      %v1397 = vor.u32 %v1393, %v1396
      %v1398 = vrot.slane %v1397, 4
      %v1400 = vshll.u32 %v1114, 16
      %v1402 = vrot.slane %v1400, 5
      %v1403 = vsel %vm1123, %v1398, %v1402
      %v1404 = vshrl.u32 %v1114, 16
      %v1406 = vrot.slane %v1404, 4
      %v1407 = vor.u32 %v1406, %v1402
      %v1408 = vrot.slane %v1407, 4
      %v1410 = vshrl.u32 %v1115, 16
      %v1412 = vrot.slane %v1410, 4
      %v1413 = vshll.u32 %v1115, 16
      %v1415 = vrot.slane %v1413, 5
      %v1416 = vor.u32 %v1412, %v1415
      %v1417 = vrot.slane %v1416, 4
      %v1419 = vshll.u32 %v1116, 16
      %v1421 = vrot.slane %v1419, 5
      %v1422 = vsel %vm1123, %v1417, %v1421
      %v1423 = vshrl.u32 %v1116, 16
      %v1425 = vrot.slane %v1423, 4
      %v1426 = vor.u32 %v1425, %v1421
      %v1427 = vrot.slane %v1426, 4
      %v1429 = vshrl.u32 %v1117, 16
      %v1431 = vrot.slane %v1429, 4
      %v1432 = vshll.u32 %v1117, 16
      %v1434 = vrot.slane %v1432, 5
      %v1435 = vor.u32 %v1431, %v1434
      %v1436 = vrot.slane %v1435, 4
      %v1438 = vshll.u32 %v1118, 16
      %v1440 = vrot.slane %v1438, 5
      %v1441 = vsel %vm1123, %v1436, %v1440
      %v1442 = vshrl.u32 %v1118, 16
      %v1444 = vrot.slane %v1442, 4
      %v1445 = vor.u32 %v1444, %v1440
      %v1446 = vrot.slane %v1445, 4
      %v1448 = vshrl.u32 %v1119, 16
      %v1450 = vrot.slane %v1448, 4
      %v1451 = vshll.u32 %v1119, 16
      %v1453 = vrot.slane %v1451, 5
      %v1454 = vor.u32 %v1450, %v1453
      %v1455 = vrot.slane %v1454, 4
      %v1457 = vshll.u32 %v1120, 16
      %v1459 = vrot.slane %v1457, 5
      %v1460 = vsel %vm1123, %v1455, %v1459
      %v1461 = vshrl.u32 %v1120, 16
      %v1463 = vrot.slane %v1461, 4
      %v1464 = vor.u32 %v1463, %v1459
      %v1465 = vrot.slane %v1464, 4
      %s1502 = scalar_lea.vmem [#allocation2], 288
      %1503 = vst [vmem:[%s1502] sm:$0xf] %v1137
      %vm1504 = vmand %vm954, %vm1121
      %v1505 = vld [vmem:[%s1502 + $0x4] sm:$0xf]
      %v1506 = vsel %vm1504, %v1142, %v1505
      %1507 = vst [vmem:[%s1502 + $0x4] sm:$0xf] %v1506
      %1508 = vst [vmem:[%s1502 + $0x8] sm:$0xf] %v1156
      %v1509 = vld [vmem:[%s1502 + $0xc] sm:$0xf]
      %v1510 = vsel %vm1504, %v1161, %v1509
      %1511 = vst [vmem:[%s1502 + $0xc] sm:$0xf] %v1510
      %1512 = vst [vmem:[%s1502 + $0x10] sm:$0xf] %v1175
      %v1513 = vld [vmem:[%s1502 + $0x14] sm:$0xf]
      %v1514 = vsel %vm1504, %v1180, %v1513
      %1515 = vst [vmem:[%s1502 + $0x14] sm:$0xf] %v1514
      %1516 = vst [vmem:[%s1502 + $0x18] sm:$0xf] %v1194
      %v1517 = vld [vmem:[%s1502 + $0x1c] sm:$0xf]
      %v1518 = vsel %vm1504, %v1199, %v1517
      %1519 = vst [vmem:[%s1502 + $0x1c] sm:$0xf] %v1518
      %1520 = vst [vmem:[%s1502 + $0x20] sm:$0xf] %v1213
      %v1521 = vld [vmem:[%s1502 + $0x24] sm:$0xf]
      %v1522 = vsel %vm1504, %v1218, %v1521
      %1523 = vst [vmem:[%s1502 + $0x24] sm:$0xf] %v1522
      %1524 = vst [vmem:[%s1502 + $0x28] sm:$0xf] %v1232
      %v1525 = vld [vmem:[%s1502 + $0x2c] sm:$0xf]
      %v1526 = vsel %vm1504, %v1237, %v1525
      %1527 = vst [vmem:[%s1502 + $0x2c] sm:$0xf] %v1526
      %1528 = vst [vmem:[%s1502 + $0x30] sm:$0xf] %v1251
      %v1529 = vld [vmem:[%s1502 + $0x34] sm:$0xf]
      %v1530 = vsel %vm1504, %v1256, %v1529
      %1531 = vst [vmem:[%s1502 + $0x34] sm:$0xf] %v1530
      %1532 = vst [vmem:[%s1502 + $0x38] sm:$0xf] %v1270
      %v1533 = vld [vmem:[%s1502 + $0x3c] sm:$0xf]
      %v1534 = vsel %vm1504, %v1275, %v1533
      %1535 = vst [vmem:[%s1502 + $0x3c] sm:$0xf] %v1534
      %1536 = vst [vmem:[%s1502 + $0x40] sm:$0xf] %v1289
      %v1537 = vld [vmem:[%s1502 + $0x44] sm:$0xf]
      %v1538 = vsel %vm1504, %v1294, %v1537
      %1539 = vst [vmem:[%s1502 + $0x44] sm:$0xf] %v1538
      %1540 = vst [vmem:[%s1502 + $0x48] sm:$0xf] %v1308
      %v1541 = vld [vmem:[%s1502 + $0x4c] sm:$0xf]
      %v1542 = vsel %vm1504, %v1313, %v1541
      %1543 = vst [vmem:[%s1502 + $0x4c] sm:$0xf] %v1542
      %1544 = vst [vmem:[%s1502 + $0x50] sm:$0xf] %v1327
      %v1545 = vld [vmem:[%s1502 + $0x54] sm:$0xf]
      %v1546 = vsel %vm1504, %v1332, %v1545
      %1547 = vst [vmem:[%s1502 + $0x54] sm:$0xf] %v1546
      %1548 = vst [vmem:[%s1502 + $0x58] sm:$0xf] %v1346
      %v1549 = vld [vmem:[%s1502 + $0x5c] sm:$0xf]
      %v1550 = vsel %vm1504, %v1351, %v1549
      %1551 = vst [vmem:[%s1502 + $0x5c] sm:$0xf] %v1550
      %1552 = vst [vmem:[%s1502 + $0x60] sm:$0xf] %v1365
      %v1553 = vld [vmem:[%s1502 + $0x64] sm:$0xf]
      %v1554 = vsel %vm1504, %v1370, %v1553
      %1555 = vst [vmem:[%s1502 + $0x64] sm:$0xf] %v1554
      %1556 = vst [vmem:[%s1502 + $0x68] sm:$0xf] %v1384
      %v1557 = vld [vmem:[%s1502 + $0x6c] sm:$0xf]
      %v1558 = vsel %vm1504, %v1389, %v1557
      %1559 = vst [vmem:[%s1502 + $0x6c] sm:$0xf] %v1558
      %1560 = vst [vmem:[%s1502 + $0x70] sm:$0xf] %v1403
      %v1561 = vld [vmem:[%s1502 + $0x74] sm:$0xf]
      %v1562 = vsel %vm1504, %v1408, %v1561
      %1563 = vst [vmem:[%s1502 + $0x74] sm:$0xf] %v1562
      %1564 = vst [vmem:[%s1502 + $0x78] sm:$0xf] %v1422
      %v1565 = vld [vmem:[%s1502 + $0x7c] sm:$0xf]
      %v1566 = vsel %vm1504, %v1427, %v1565
      %1567 = vst [vmem:[%s1502 + $0x7c] sm:$0xf] %v1566
      %1568 = vst [vmem:[%s1502 + $0x80] sm:$0xf] %v1441
      %v1569 = vld [vmem:[%s1502 + $0x84] sm:$0xf]
      %v1570 = vsel %vm1504, %v1446, %v1569
      %1571 = vst [vmem:[%s1502 + $0x84] sm:$0xf] %v1570
      %1572 = vst [vmem:[%s1502 + $0x88] sm:$0xf] %v1460
      %v1573 = vld [vmem:[%s1502 + $0x8c] sm:$0xf]
      %v1574 = vsel %vm1504, %v1465, %v1573
      %1575 = vst [vmem:[%s1502 + $0x8c] sm:$0xf] %v1574
      %vm1576 = vcmask 1043459
      %vm1577 = vsmask.f32 7950
      %vm1578 = vmand %vm1576, %vm1577
      %v1579 = vld [vmem:[%s1502 + $0x4] sm:$0x8]
      %v1580 = vsel %vm1578, 0, %v1579
      %1581 = vst [vmem:[%s1502 + $0x4] sm:$0x8] %v1580
      %v1582 = vld [vmem:[%s1502 + $0xc] sm:$0x8]
      %v1583 = vsel %vm1578, 0, %v1582
      %1584 = vst [vmem:[%s1502 + $0xc] sm:$0x8] %v1583
      %v1585 = vld [vmem:[%s1502 + $0x14] sm:$0x8]
      %v1586 = vsel %vm1578, 0, %v1585
      %1587 = vst [vmem:[%s1502 + $0x14] sm:$0x8] %v1586
      %v1588 = vld [vmem:[%s1502 + $0x1c] sm:$0x8]
      %v1589 = vsel %vm1578, 0, %v1588
      %1590 = vst [vmem:[%s1502 + $0x1c] sm:$0x8] %v1589
      %v1591 = vld [vmem:[%s1502 + $0x24] sm:$0x8]
      %v1592 = vsel %vm1578, 0, %v1591
      %1593 = vst [vmem:[%s1502 + $0x24] sm:$0x8] %v1592
      %v1594 = vld [vmem:[%s1502 + $0x2c] sm:$0x8]
      %v1595 = vsel %vm1578, 0, %v1594
      %1596 = vst [vmem:[%s1502 + $0x2c] sm:$0x8] %v1595
      %v1597 = vld [vmem:[%s1502 + $0x34] sm:$0x8]
      %v1598 = vsel %vm1578, 0, %v1597
      %1599 = vst [vmem:[%s1502 + $0x34] sm:$0x8] %v1598
      %v1600 = vld [vmem:[%s1502 + $0x3c] sm:$0x8]
      %v1601 = vsel %vm1578, 0, %v1600
      %1602 = vst [vmem:[%s1502 + $0x3c] sm:$0x8] %v1601
      %v1603 = vld [vmem:[%s1502 + $0x44] sm:$0x8]
      %v1604 = vsel %vm1578, 0, %v1603
      %1605 = vst [vmem:[%s1502 + $0x44] sm:$0x8] %v1604
      %v1606 = vld [vmem:[%s1502 + $0x4c] sm:$0x8]
      %v1607 = vsel %vm1578, 0, %v1606
      %1608 = vst [vmem:[%s1502 + $0x4c] sm:$0x8] %v1607
      %v1609 = vld [vmem:[%s1502 + $0x54] sm:$0x8]
      %v1610 = vsel %vm1578, 0, %v1609
      %1611 = vst [vmem:[%s1502 + $0x54] sm:$0x8] %v1610
      %v1612 = vld [vmem:[%s1502 + $0x5c] sm:$0x8]
      %v1613 = vsel %vm1578, 0, %v1612
      %1614 = vst [vmem:[%s1502 + $0x5c] sm:$0x8] %v1613
      %v1615 = vld [vmem:[%s1502 + $0x64] sm:$0x8]
      %v1616 = vsel %vm1578, 0, %v1615
      %1617 = vst [vmem:[%s1502 + $0x64] sm:$0x8] %v1616
      %v1618 = vld [vmem:[%s1502 + $0x6c] sm:$0x8]
      %v1619 = vsel %vm1578, 0, %v1618
      %1620 = vst [vmem:[%s1502 + $0x6c] sm:$0x8] %v1619
      %v1621 = vld [vmem:[%s1502 + $0x74] sm:$0x8]
      %v1622 = vsel %vm1578, 0, %v1621
      %1623 = vst [vmem:[%s1502 + $0x74] sm:$0x8] %v1622
      %v1624 = vld [vmem:[%s1502 + $0x7c] sm:$0x8]
      %v1625 = vsel %vm1578, 0, %v1624
      %1626 = vst [vmem:[%s1502 + $0x7c] sm:$0x8] %v1625
      %v1627 = vld [vmem:[%s1502 + $0x84] sm:$0x8]
      %v1628 = vsel %vm1578, 0, %v1627
      %1629 = vst [vmem:[%s1502 + $0x84] sm:$0x8] %v1628
      %v1630 = vld [vmem:[%s1502 + $0x8c] sm:$0x8]
      %v1631 = vsel %vm1578, 0, %v1630
      %1632 = vst [vmem:[%s1502 + $0x8c] sm:$0x8] %v1631
      %v1633 = vld [vmem:[%s4] sm:$0x1]
      loop: start=0, step=1, limit=2
      $region48: #{plainnet_basic_block_forward.1} parent=39 // loop_pre_header
        _
      $region49: #{plainnet_basic_block_forward.1} parent=39 // loop_header
        %s1635 = sphi 0, %s1639
        %p1636 = scmp.ge.s32.totalorder %s1635, 2
      $region50: #{plainnet_basic_block_forward.1} parent=39 // loop_header_branch
        %1638 = sbr.rel (%p1636) target = $region54
      $region51: #{plainnet_basic_block_forward.1} parent=39 // loop_body
        %s1640 = smul.u32 %s1635, 8
        %v1642 = vlaneseq
        %v1643 = vshrl.u32 %v1642, 7
        %v1644 = vsub.s32 0, %v1643
        %v1645 = vrot.slane %v1633, %v1644
        %s1647 = smul.u32 %s1640, 2
        %s1648 = smul.addr %s1647, 4
        %s1649 = scalar_lea.vmem [#allocation2], %s1648
        %v1650 = vld [vmem:[%s1649] sm:$0xf]
        %v1651 = vld [vmem:[%s1649 + $0x4] sm:$0xf]
        %v1652 = vld [vmem:[%s1649 + $0x8] sm:$0xf]
        %v1653 = vld [vmem:[%s1649 + $0xc] sm:$0xf]
        %v1654 = vld [vmem:[%s1649 + $0x10] sm:$0xf]
        %v1655 = vld [vmem:[%s1649 + $0x14] sm:$0xf]
        %v1656 = vld [vmem:[%s1649 + $0x18] sm:$0xf]
        %v1657 = vld [vmem:[%s1649 + $0x1c] sm:$0xf]
        %v1658 = vld [vmem:[%s1649 + $0x20] sm:$0xf]
        %v1659 = vld [vmem:[%s1649 + $0x24] sm:$0xf]
        %v1660 = vld [vmem:[%s1649 + $0x28] sm:$0xf]
        %v1661 = vld [vmem:[%s1649 + $0x2c] sm:$0xf]
        %v1662 = vld [vmem:[%s1649 + $0x30] sm:$0xf]
        %v1663 = vld [vmem:[%s1649 + $0x34] sm:$0xf]
        %v1664 = vld [vmem:[%s1649 + $0x38] sm:$0xf]
        %v1665 = vld [vmem:[%s1649 + $0x3c] sm:$0xf]
        %v1666 = vld [vmem:[%s3] sm:$0xf]
        %v1667 = vld [vmem:[%s3 + $0x4] sm:$0xf]
        %v1668 = vld [vmem:[%s3 + $0x8] sm:$0xf]
        %v1669 = vld [vmem:[%s3 + $0xc] sm:$0xf]
        %v1670 = vld [vmem:[%s3 + $0x10] sm:$0xf]
        %v1671 = vld [vmem:[%s3 + $0x14] sm:$0xf]
        %v1672 = vld [vmem:[%s3 + $0x18] sm:$0xf]
        %v1673 = vld [vmem:[%s3 + $0x1c] sm:$0xf]
        %v1674 = vld [vmem:[%s3 + $0x20] sm:$0xf]
        %v1675 = vld [vmem:[%s3 + $0x24] sm:$0xf]
        %v1676 = vld [vmem:[%s3 + $0x28] sm:$0xf]
        %v1677 = vld [vmem:[%s3 + $0x2c] sm:$0xf]
        %v1678 = vld [vmem:[%s3 + $0x30] sm:$0xf]
        %v1679 = vld [vmem:[%s3 + $0x34] sm:$0xf]
        %v1680 = vld [vmem:[%s3 + $0x38] sm:$0xf]
        %v1681 = vld [vmem:[%s3 + $0x3c] sm:$0xf]
        %v1698 = vunpack.c.l.b16 %v1650
        %v1699 = vunpack.c.l.b16 %v1651
        %v1700 = vunpack.c.l.b16 %v1652
        %v1701 = vunpack.c.l.b16 %v1653
        %v1702 = vunpack.c.l.b16 %v1654
        %v1703 = vunpack.c.l.b16 %v1655
        %v1704 = vunpack.c.l.b16 %v1656
        %v1705 = vunpack.c.l.b16 %v1657
        %v1706 = vunpack.c.l.b16 %v1658
        %v1707 = vunpack.c.l.b16 %v1659
        %v1708 = vunpack.c.l.b16 %v1660
        %v1709 = vunpack.c.l.b16 %v1661
        %v1710 = vunpack.c.l.b16 %v1662
        %v1711 = vunpack.c.l.b16 %v1663
        %v1712 = vunpack.c.l.b16 %v1664
        %v1713 = vunpack.c.l.b16 %v1665
        %v1714 = vpack.c.b16 %v1699, %v1698
        %v1715 = vpack.c.b16 %v1701, %v1700
        %v1716 = vpack.c.b16 %v1703, %v1702
        %v1717 = vpack.c.b16 %v1705, %v1704
        %v1718 = vpack.c.b16 %v1707, %v1706
        %v1719 = vpack.c.b16 %v1709, %v1708
        %v1720 = vpack.c.b16 %v1711, %v1710
        %v1721 = vpack.c.b16 %v1713, %v1712
        %v1746 = vunpack.c.l.b16 %v1666
        %v1747 = vunpack.c.l.b16 %v1667
        %v1748 = vunpack.c.l.b16 %v1668
        %v1749 = vunpack.c.l.b16 %v1669
        %v1750 = vunpack.c.l.b16 %v1670
        %v1751 = vunpack.c.l.b16 %v1671
        %v1752 = vunpack.c.l.b16 %v1672
        %v1753 = vunpack.c.l.b16 %v1673
        %v1754 = vunpack.c.l.b16 %v1674
        %v1755 = vunpack.c.l.b16 %v1675
        %v1756 = vunpack.c.l.b16 %v1676
        %v1757 = vunpack.c.l.b16 %v1677
        %v1758 = vunpack.c.l.b16 %v1678
        %v1759 = vunpack.c.l.b16 %v1679
        %v1760 = vunpack.c.l.b16 %v1680
        %v1761 = vunpack.c.l.b16 %v1681
        %v1762 = vpack.c.b16 %v1747, %v1746
        %v1763 = vpack.c.b16 %v1749, %v1748
        %v1764 = vpack.c.b16 %v1751, %v1750
        %v1765 = vpack.c.b16 %v1753, %v1752
        %v1766 = vpack.c.b16 %v1755, %v1754
        %v1767 = vpack.c.b16 %v1757, %v1756
        %v1768 = vpack.c.b16 %v1759, %v1758
        %v1769 = vpack.c.b16 %v1761, %v1760
        %1778 = vmatprep.subr.bf16.mxu0 0
        %1779 = vmatpush1.bf16.msra.mxu0 %v1769
        %1780 = vmatprep.subr.bf16.mxu0 0
        %1781 = vmatpush1.bf16.msra.mxu0 %v1768
        %1782 = vmatprep.subr.bf16.mxu0 0
        %1783 = vmatpush1.bf16.msra.mxu0 %v1767
        %1784 = vmatprep.subr.bf16.mxu0 0
        %1785 = vmatpush1.bf16.msra.mxu0 %v1766
        %1786 = vmatprep.subr.bf16.mxu0 0
        %1787 = vmatpush1.bf16.msra.mxu0 %v1765
        %1788 = vmatprep.subr.bf16.mxu0 0
        %1789 = vmatpush1.bf16.msra.mxu0 %v1764
        %1790 = vmatprep.subr.bf16.mxu0 0
        %1791 = vmatpush1.bf16.msra.mxu0 %v1763
        %1792 = vmatprep.subr.bf16.mxu0 0
        %1793 = vmatpush1.bf16.msra.mxu0 %v1762
        %1794 = vmatprep.subr.bf16.mxu0 0
        %1795 = vmatpush2.bf16.msra.mxu0 0
        %1796 = vmatprep.subr.bf16.mxu0 0
        %1797 = vmatpush2.bf16.msra.mxu0 0
        %1798 = vmatprep.subr.bf16.mxu0 0
        %1799 = vmatpush2.bf16.msra.mxu0 0
        %1800 = vmatprep.subr.bf16.mxu0 0
        %1801 = vmatpush2.bf16.msra.mxu0 0
        %1802 = vmatprep.subr.bf16.mxu0 0
        %1803 = vmatpush2.bf16.msra.mxu0 0
        %1804 = vmatprep.subr.bf16.mxu0 0
        %1805 = vmatpush2.bf16.msra.mxu0 0
        %1806 = vmatprep.subr.bf16.mxu0 0
        %1807 = vmatpush2.bf16.msra.mxu0 0
        %1808 = vmatprep.subr.bf16.mxu0 0
        %1809 = vmatpush2.bf16.msra.mxu0 0
        %1810 = vmatprep.mubr.bf16.mxu0 0
        %1811 = vmatmul.mubr.bf16.gmra.mxu0 %v1714
        %v1812 = vpop.f32.mrf.mxu0
        %v1813 = vadd.f32 0.0, %v1812
        %v1814 = vpop.f32.mrf.mxu0
        %v1815 = vpop.f32.mrf.mxu0
        %v1816 = vadd.f32 0.0, %v1815
        %v1817 = vpop.f32.mrf.mxu0
        %1818 = vmatprep.mubr.bf16.mxu0 0
        %1819 = vmatmul.mubr.bf16.gmra.mxu0 %v1715
        %v1820 = vpop.f32.mrf.mxu0
        %v1821 = vadd.f32 0.0, %v1820
        %v1822 = vpop.f32.mrf.mxu0
        %v1823 = vpop.f32.mrf.mxu0
        %v1824 = vadd.f32 0.0, %v1823
        %v1825 = vpop.f32.mrf.mxu0
        %1826 = vmatprep.mubr.bf16.mxu0 0
        %1827 = vmatmul.mubr.bf16.gmra.mxu0 %v1716
        %v1828 = vpop.f32.mrf.mxu0
        %v1829 = vadd.f32 0.0, %v1828
        %v1830 = vpop.f32.mrf.mxu0
        %v1831 = vpop.f32.mrf.mxu0
        %v1832 = vadd.f32 0.0, %v1831
        %v1833 = vpop.f32.mrf.mxu0
        %1834 = vmatprep.mubr.bf16.mxu0 0
        %1835 = vmatmul.mubr.bf16.gmra.mxu0 %v1717
        %v1836 = vpop.f32.mrf.mxu0
        %v1837 = vadd.f32 0.0, %v1836
        %v1838 = vpop.f32.mrf.mxu0
        %v1839 = vpop.f32.mrf.mxu0
        %v1840 = vadd.f32 0.0, %v1839
        %v1841 = vpop.f32.mrf.mxu0
        %1842 = vmatprep.mubr.bf16.mxu0 0
        %1843 = vmatmul.mubr.bf16.gmra.mxu0 %v1718
        %v1844 = vpop.f32.mrf.mxu0
        %v1845 = vadd.f32 0.0, %v1844
        %v1846 = vpop.f32.mrf.mxu0
        %v1847 = vpop.f32.mrf.mxu0
        %v1848 = vadd.f32 0.0, %v1847
        %v1849 = vpop.f32.mrf.mxu0
        %1850 = vmatprep.mubr.bf16.mxu0 0
        %1851 = vmatmul.mubr.bf16.gmra.mxu0 %v1719
        %v1852 = vpop.f32.mrf.mxu0
        %v1853 = vadd.f32 0.0, %v1852
        %v1854 = vpop.f32.mrf.mxu0
        %v1855 = vpop.f32.mrf.mxu0
        %v1856 = vadd.f32 0.0, %v1855
        %v1857 = vpop.f32.mrf.mxu0
        %1858 = vmatprep.mubr.bf16.mxu0 0
        %1859 = vmatmul.mubr.bf16.gmra.mxu0 %v1720
        %v1860 = vpop.f32.mrf.mxu0
        %v1861 = vadd.f32 0.0, %v1860
        %v1862 = vpop.f32.mrf.mxu0
        %v1863 = vpop.f32.mrf.mxu0
        %v1864 = vadd.f32 0.0, %v1863
        %v1865 = vpop.f32.mrf.mxu0
        %1866 = vmatprep.mubr.bf16.mxu0 0
        %1867 = vmatmul.mubr.bf16.gmra.mxu0 %v1721
        %v1868 = vpop.f32.mrf.mxu0
        %v1869 = vadd.f32 0.0, %v1868
        %v1870 = vpop.f32.mrf.mxu0
        %v1871 = vpop.f32.mrf.mxu0
        %v1872 = vadd.f32 0.0, %v1871
        %v1873 = vpop.f32.mrf.mxu0
        %1874 = vdwg.mxu0
        %v1875 = vadd.f32 %v1645, %v1813
        %v1876 = vadd.f32 %v1645, %v1816
        %v1877 = vadd.f32 %v1645, %v1821
        %v1878 = vadd.f32 %v1645, %v1824
        %v1879 = vadd.f32 %v1645, %v1829
        %v1880 = vadd.f32 %v1645, %v1832
        %v1881 = vadd.f32 %v1645, %v1837
        %v1882 = vadd.f32 %v1645, %v1840
        %v1883 = vadd.f32 %v1645, %v1845
        %v1884 = vadd.f32 %v1645, %v1848
        %v1885 = vadd.f32 %v1645, %v1853
        %v1886 = vadd.f32 %v1645, %v1856
        %v1887 = vadd.f32 %v1645, %v1861
        %v1888 = vadd.f32 %v1645, %v1864
        %v1889 = vadd.f32 %v1645, %v1869
        %v1890 = vadd.f32 %v1645, %v1872
        %s1891 = sadd.s32 %s1647, 36
        %s1892 = smul.addr %s1891, 4
        %s1893 = scalar_lea.vmem [#allocation2], %s1892
        %v1894 = vld [vmem:[%s1893] sm:$0xf]
        %v1895 = vld [vmem:[%s1893 + $0x4] sm:$0xf]
        %v1896 = vld [vmem:[%s1893 + $0x8] sm:$0xf]
        %v1897 = vld [vmem:[%s1893 + $0xc] sm:$0xf]
        %v1898 = vld [vmem:[%s1893 + $0x10] sm:$0xf]
        %v1899 = vld [vmem:[%s1893 + $0x14] sm:$0xf]
        %v1900 = vld [vmem:[%s1893 + $0x18] sm:$0xf]
        %v1901 = vld [vmem:[%s1893 + $0x1c] sm:$0xf]
        %v1902 = vld [vmem:[%s1893 + $0x20] sm:$0xf]
        %v1903 = vld [vmem:[%s1893 + $0x24] sm:$0xf]
        %v1904 = vld [vmem:[%s1893 + $0x28] sm:$0xf]
        %v1905 = vld [vmem:[%s1893 + $0x2c] sm:$0xf]
        %v1906 = vld [vmem:[%s1893 + $0x30] sm:$0xf]
        %v1907 = vld [vmem:[%s1893 + $0x34] sm:$0xf]
        %v1908 = vld [vmem:[%s1893 + $0x38] sm:$0xf]
        %v1909 = vld [vmem:[%s1893 + $0x3c] sm:$0xf]
        %s1910 = scalar_lea.vmem %s3, 64
        %v1911 = vld [vmem:[%s1910] sm:$0xf]
        %v1912 = vld [vmem:[%s1910 + $0x4] sm:$0xf]
        %v1913 = vld [vmem:[%s1910 + $0x8] sm:$0xf]
        %v1914 = vld [vmem:[%s1910 + $0xc] sm:$0xf]
        %v1915 = vld [vmem:[%s1910 + $0x10] sm:$0xf]
        %v1916 = vld [vmem:[%s1910 + $0x14] sm:$0xf]
        %v1917 = vld [vmem:[%s1910 + $0x18] sm:$0xf]
        %v1918 = vld [vmem:[%s1910 + $0x1c] sm:$0xf]
        %v1919 = vld [vmem:[%s1910 + $0x20] sm:$0xf]
        %v1920 = vld [vmem:[%s1910 + $0x24] sm:$0xf]
        %v1921 = vld [vmem:[%s1910 + $0x28] sm:$0xf]
        %v1922 = vld [vmem:[%s1910 + $0x2c] sm:$0xf]
        %v1923 = vld [vmem:[%s1910 + $0x30] sm:$0xf]
        %v1924 = vld [vmem:[%s1910 + $0x34] sm:$0xf]
        %v1925 = vld [vmem:[%s1910 + $0x38] sm:$0xf]
        %v1926 = vld [vmem:[%s1910 + $0x3c] sm:$0xf]
        %v1943 = vunpack.c.l.b16 %v1894
        %v1944 = vunpack.c.l.b16 %v1895
        %v1945 = vunpack.c.l.b16 %v1896
        %v1946 = vunpack.c.l.b16 %v1897
        %v1947 = vunpack.c.l.b16 %v1898
        %v1948 = vunpack.c.l.b16 %v1899
        %v1949 = vunpack.c.l.b16 %v1900
        %v1950 = vunpack.c.l.b16 %v1901
        %v1951 = vunpack.c.l.b16 %v1902
        %v1952 = vunpack.c.l.b16 %v1903
        %v1953 = vunpack.c.l.b16 %v1904
        %v1954 = vunpack.c.l.b16 %v1905
        %v1955 = vunpack.c.l.b16 %v1906
        %v1956 = vunpack.c.l.b16 %v1907
        %v1957 = vunpack.c.l.b16 %v1908
        %v1958 = vunpack.c.l.b16 %v1909
        %v1959 = vpack.c.b16 %v1944, %v1943
        %v1960 = vpack.c.b16 %v1946, %v1945
        %v1961 = vpack.c.b16 %v1948, %v1947
        %v1962 = vpack.c.b16 %v1950, %v1949
        %v1963 = vpack.c.b16 %v1952, %v1951
        %v1964 = vpack.c.b16 %v1954, %v1953
        %v1965 = vpack.c.b16 %v1956, %v1955
        %v1966 = vpack.c.b16 %v1958, %v1957
        %v1991 = vunpack.c.l.b16 %v1911
        %v1992 = vunpack.c.l.b16 %v1912
        %v1993 = vunpack.c.l.b16 %v1913
        %v1994 = vunpack.c.l.b16 %v1914
        %v1995 = vunpack.c.l.b16 %v1915
        %v1996 = vunpack.c.l.b16 %v1916
        %v1997 = vunpack.c.l.b16 %v1917
        %v1998 = vunpack.c.l.b16 %v1918
        %v1999 = vunpack.c.l.b16 %v1919
        %v2000 = vunpack.c.l.b16 %v1920
        %v2001 = vunpack.c.l.b16 %v1921
        %v2002 = vunpack.c.l.b16 %v1922
        %v2003 = vunpack.c.l.b16 %v1923
        %v2004 = vunpack.c.l.b16 %v1924
        %v2005 = vunpack.c.l.b16 %v1925
        %v2006 = vunpack.c.l.b16 %v1926
        %v2007 = vpack.c.b16 %v1992, %v1991
        %v2008 = vpack.c.b16 %v1994, %v1993
        %v2009 = vpack.c.b16 %v1996, %v1995
        %v2010 = vpack.c.b16 %v1998, %v1997
        %v2011 = vpack.c.b16 %v2000, %v1999
        %v2012 = vpack.c.b16 %v2002, %v2001
        %v2013 = vpack.c.b16 %v2004, %v2003
        %v2014 = vpack.c.b16 %v2006, %v2005
        %2023 = vmatprep.subr.bf16.mxu0 0
        %2024 = vmatpush1.bf16.msra.mxu0 %v2014
        %2025 = vmatprep.subr.bf16.mxu0 0
        %2026 = vmatpush1.bf16.msra.mxu0 %v2013
        %2027 = vmatprep.subr.bf16.mxu0 0
        %2028 = vmatpush1.bf16.msra.mxu0 %v2012
        %2029 = vmatprep.subr.bf16.mxu0 0
        %2030 = vmatpush1.bf16.msra.mxu0 %v2011
        %2031 = vmatprep.subr.bf16.mxu0 0
        %2032 = vmatpush1.bf16.msra.mxu0 %v2010
        %2033 = vmatprep.subr.bf16.mxu0 0
        %2034 = vmatpush1.bf16.msra.mxu0 %v2009
        %2035 = vmatprep.subr.bf16.mxu0 0
        %2036 = vmatpush1.bf16.msra.mxu0 %v2008
        %2037 = vmatprep.subr.bf16.mxu0 0
        %2038 = vmatpush1.bf16.msra.mxu0 %v2007
        %2039 = vmatprep.subr.bf16.mxu0 0
        %2040 = vmatpush2.bf16.msra.mxu0 0
        %2041 = vmatprep.subr.bf16.mxu0 0
        %2042 = vmatpush2.bf16.msra.mxu0 0
        %2043 = vmatprep.subr.bf16.mxu0 0
        %2044 = vmatpush2.bf16.msra.mxu0 0
        %2045 = vmatprep.subr.bf16.mxu0 0
        %2046 = vmatpush2.bf16.msra.mxu0 0
        %2047 = vmatprep.subr.bf16.mxu0 0
        %2048 = vmatpush2.bf16.msra.mxu0 0
        %2049 = vmatprep.subr.bf16.mxu0 0
        %2050 = vmatpush2.bf16.msra.mxu0 0
        %2051 = vmatprep.subr.bf16.mxu0 0
        %2052 = vmatpush2.bf16.msra.mxu0 0
        %2053 = vmatprep.subr.bf16.mxu0 0
        %2054 = vmatpush2.bf16.msra.mxu0 0
        %2055 = vmatprep.mubr.bf16.mxu0 0
        %2056 = vmatmul.mubr.bf16.gmra.mxu0 %v1959
        %v2057 = vpop.f32.mrf.mxu0
        %v2058 = vadd.f32 0.0, %v2057
        %v2059 = vpop.f32.mrf.mxu0
        %v2060 = vpop.f32.mrf.mxu0
        %v2061 = vadd.f32 0.0, %v2060
        %v2062 = vpop.f32.mrf.mxu0
        %2063 = vmatprep.mubr.bf16.mxu0 0
        %2064 = vmatmul.mubr.bf16.gmra.mxu0 %v1960
        %v2065 = vpop.f32.mrf.mxu0
        %v2066 = vadd.f32 0.0, %v2065
        %v2067 = vpop.f32.mrf.mxu0
        %v2068 = vpop.f32.mrf.mxu0
        %v2069 = vadd.f32 0.0, %v2068
        %v2070 = vpop.f32.mrf.mxu0
        %2071 = vmatprep.mubr.bf16.mxu0 0
        %2072 = vmatmul.mubr.bf16.gmra.mxu0 %v1961
        %v2073 = vpop.f32.mrf.mxu0
        %v2074 = vadd.f32 0.0, %v2073
        %v2075 = vpop.f32.mrf.mxu0
        %v2076 = vpop.f32.mrf.mxu0
        %v2077 = vadd.f32 0.0, %v2076
        %v2078 = vpop.f32.mrf.mxu0
        %2079 = vmatprep.mubr.bf16.mxu0 0
        %2080 = vmatmul.mubr.bf16.gmra.mxu0 %v1962
        %v2081 = vpop.f32.mrf.mxu0
        %v2082 = vadd.f32 0.0, %v2081
        %v2083 = vpop.f32.mrf.mxu0
        %v2084 = vpop.f32.mrf.mxu0
        %v2085 = vadd.f32 0.0, %v2084
        %v2086 = vpop.f32.mrf.mxu0
        %2087 = vmatprep.mubr.bf16.mxu0 0
        %2088 = vmatmul.mubr.bf16.gmra.mxu0 %v1963
        %v2089 = vpop.f32.mrf.mxu0
        %v2090 = vadd.f32 0.0, %v2089
        %v2091 = vpop.f32.mrf.mxu0
        %v2092 = vpop.f32.mrf.mxu0
        %v2093 = vadd.f32 0.0, %v2092
        %v2094 = vpop.f32.mrf.mxu0
        %2095 = vmatprep.mubr.bf16.mxu0 0
        %2096 = vmatmul.mubr.bf16.gmra.mxu0 %v1964
        %v2097 = vpop.f32.mrf.mxu0
        %v2098 = vadd.f32 0.0, %v2097
        %v2099 = vpop.f32.mrf.mxu0
        %v2100 = vpop.f32.mrf.mxu0
        %v2101 = vadd.f32 0.0, %v2100
        %v2102 = vpop.f32.mrf.mxu0
        %2103 = vmatprep.mubr.bf16.mxu0 0
        %2104 = vmatmul.mubr.bf16.gmra.mxu0 %v1965
        %v2105 = vpop.f32.mrf.mxu0
        %v2106 = vadd.f32 0.0, %v2105
        %v2107 = vpop.f32.mrf.mxu0
        %v2108 = vpop.f32.mrf.mxu0
        %v2109 = vadd.f32 0.0, %v2108
        %v2110 = vpop.f32.mrf.mxu0
        %2111 = vmatprep.mubr.bf16.mxu0 0
        %2112 = vmatmul.mubr.bf16.gmra.mxu0 %v1966
        %v2113 = vpop.f32.mrf.mxu0
        %v2114 = vadd.f32 0.0, %v2113
        %v2115 = vpop.f32.mrf.mxu0
        %v2116 = vpop.f32.mrf.mxu0
        %v2117 = vadd.f32 0.0, %v2116
        %v2118 = vpop.f32.mrf.mxu0
        %2119 = vdwg.mxu0
        %v2120 = vadd.f32 %v1875, %v2058
        %v2121 = vadd.f32 %v1876, %v2061
        %v2122 = vadd.f32 %v1877, %v2066
        %v2123 = vadd.f32 %v1878, %v2069
        %v2124 = vadd.f32 %v1879, %v2074
        %v2125 = vadd.f32 %v1880, %v2077
        %v2126 = vadd.f32 %v1881, %v2082
        %v2127 = vadd.f32 %v1882, %v2085
        %v2128 = vadd.f32 %v1883, %v2090
        %v2129 = vadd.f32 %v1884, %v2093
        %v2130 = vadd.f32 %v1885, %v2098
        %v2131 = vadd.f32 %v1886, %v2101
        %v2132 = vadd.f32 %v1887, %v2106
        %v2133 = vadd.f32 %v1888, %v2109
        %v2134 = vadd.f32 %v1889, %v2114
        %v2135 = vadd.f32 %v1890, %v2117
        %s2136 = sadd.s32 %s1647, 72
        %s2137 = smul.addr %s2136, 4
        %s2138 = scalar_lea.vmem [#allocation2], %s2137
        %v2139 = vld [vmem:[%s2138] sm:$0xf]
        %v2140 = vld [vmem:[%s2138 + $0x4] sm:$0xf]
        %v2141 = vld [vmem:[%s2138 + $0x8] sm:$0xf]
        %v2142 = vld [vmem:[%s2138 + $0xc] sm:$0xf]
        %v2143 = vld [vmem:[%s2138 + $0x10] sm:$0xf]
        %v2144 = vld [vmem:[%s2138 + $0x14] sm:$0xf]
        %v2145 = vld [vmem:[%s2138 + $0x18] sm:$0xf]
        %v2146 = vld [vmem:[%s2138 + $0x1c] sm:$0xf]
        %v2147 = vld [vmem:[%s2138 + $0x20] sm:$0xf]
        %v2148 = vld [vmem:[%s2138 + $0x24] sm:$0xf]
        %v2149 = vld [vmem:[%s2138 + $0x28] sm:$0xf]
        %v2150 = vld [vmem:[%s2138 + $0x2c] sm:$0xf]
        %v2151 = vld [vmem:[%s2138 + $0x30] sm:$0xf]
        %v2152 = vld [vmem:[%s2138 + $0x34] sm:$0xf]
        %v2153 = vld [vmem:[%s2138 + $0x38] sm:$0xf]
        %v2154 = vld [vmem:[%s2138 + $0x3c] sm:$0xf]
        %s2155 = scalar_lea.vmem %s3, 128
        %v2156 = vld [vmem:[%s2155] sm:$0xf]
        %v2157 = vld [vmem:[%s2155 + $0x4] sm:$0xf]
        %v2158 = vld [vmem:[%s2155 + $0x8] sm:$0xf]
        %v2159 = vld [vmem:[%s2155 + $0xc] sm:$0xf]
        %v2160 = vld [vmem:[%s2155 + $0x10] sm:$0xf]
        %v2161 = vld [vmem:[%s2155 + $0x14] sm:$0xf]
        %v2162 = vld [vmem:[%s2155 + $0x18] sm:$0xf]
        %v2163 = vld [vmem:[%s2155 + $0x1c] sm:$0xf]
        %v2164 = vld [vmem:[%s2155 + $0x20] sm:$0xf]
        %v2165 = vld [vmem:[%s2155 + $0x24] sm:$0xf]
        %v2166 = vld [vmem:[%s2155 + $0x28] sm:$0xf]
        %v2167 = vld [vmem:[%s2155 + $0x2c] sm:$0xf]
        %v2168 = vld [vmem:[%s2155 + $0x30] sm:$0xf]
        %v2169 = vld [vmem:[%s2155 + $0x34] sm:$0xf]
        %v2170 = vld [vmem:[%s2155 + $0x38] sm:$0xf]
        %v2171 = vld [vmem:[%s2155 + $0x3c] sm:$0xf]
        %v2188 = vunpack.c.l.b16 %v2139
        %v2189 = vunpack.c.l.b16 %v2140
        %v2190 = vunpack.c.l.b16 %v2141
        %v2191 = vunpack.c.l.b16 %v2142
        %v2192 = vunpack.c.l.b16 %v2143
        %v2193 = vunpack.c.l.b16 %v2144
        %v2194 = vunpack.c.l.b16 %v2145
        %v2195 = vunpack.c.l.b16 %v2146
        %v2196 = vunpack.c.l.b16 %v2147
        %v2197 = vunpack.c.l.b16 %v2148
        %v2198 = vunpack.c.l.b16 %v2149
        %v2199 = vunpack.c.l.b16 %v2150
        %v2200 = vunpack.c.l.b16 %v2151
        %v2201 = vunpack.c.l.b16 %v2152
        %v2202 = vunpack.c.l.b16 %v2153
        %v2203 = vunpack.c.l.b16 %v2154
        %v2204 = vpack.c.b16 %v2189, %v2188
        %v2205 = vpack.c.b16 %v2191, %v2190
        %v2206 = vpack.c.b16 %v2193, %v2192
        %v2207 = vpack.c.b16 %v2195, %v2194
        %v2208 = vpack.c.b16 %v2197, %v2196
        %v2209 = vpack.c.b16 %v2199, %v2198
        %v2210 = vpack.c.b16 %v2201, %v2200
        %v2211 = vpack.c.b16 %v2203, %v2202
        %v2236 = vunpack.c.l.b16 %v2156
        %v2237 = vunpack.c.l.b16 %v2157
        %v2238 = vunpack.c.l.b16 %v2158
        %v2239 = vunpack.c.l.b16 %v2159
        %v2240 = vunpack.c.l.b16 %v2160
        %v2241 = vunpack.c.l.b16 %v2161
        %v2242 = vunpack.c.l.b16 %v2162
        %v2243 = vunpack.c.l.b16 %v2163
        %v2244 = vunpack.c.l.b16 %v2164
        %v2245 = vunpack.c.l.b16 %v2165
        %v2246 = vunpack.c.l.b16 %v2166
        %v2247 = vunpack.c.l.b16 %v2167
        %v2248 = vunpack.c.l.b16 %v2168
        %v2249 = vunpack.c.l.b16 %v2169
        %v2250 = vunpack.c.l.b16 %v2170
        %v2251 = vunpack.c.l.b16 %v2171
        %v2252 = vpack.c.b16 %v2237, %v2236
        %v2253 = vpack.c.b16 %v2239, %v2238
        %v2254 = vpack.c.b16 %v2241, %v2240
        %v2255 = vpack.c.b16 %v2243, %v2242
        %v2256 = vpack.c.b16 %v2245, %v2244
        %v2257 = vpack.c.b16 %v2247, %v2246
        %v2258 = vpack.c.b16 %v2249, %v2248
        %v2259 = vpack.c.b16 %v2251, %v2250
        %2268 = vmatprep.subr.bf16.mxu0 0
        %2269 = vmatpush1.bf16.msra.mxu0 %v2259
        %2270 = vmatprep.subr.bf16.mxu0 0
        %2271 = vmatpush1.bf16.msra.mxu0 %v2258
        %2272 = vmatprep.subr.bf16.mxu0 0
        %2273 = vmatpush1.bf16.msra.mxu0 %v2257
        %2274 = vmatprep.subr.bf16.mxu0 0
        %2275 = vmatpush1.bf16.msra.mxu0 %v2256
        %2276 = vmatprep.subr.bf16.mxu0 0
        %2277 = vmatpush1.bf16.msra.mxu0 %v2255
        %2278 = vmatprep.subr.bf16.mxu0 0
        %2279 = vmatpush1.bf16.msra.mxu0 %v2254
        %2280 = vmatprep.subr.bf16.mxu0 0
        %2281 = vmatpush1.bf16.msra.mxu0 %v2253
        %2282 = vmatprep.subr.bf16.mxu0 0
        %2283 = vmatpush1.bf16.msra.mxu0 %v2252
        %2284 = vmatprep.subr.bf16.mxu0 0
        %2285 = vmatpush2.bf16.msra.mxu0 0
        %2286 = vmatprep.subr.bf16.mxu0 0
        %2287 = vmatpush2.bf16.msra.mxu0 0
        %2288 = vmatprep.subr.bf16.mxu0 0
        %2289 = vmatpush2.bf16.msra.mxu0 0
        %2290 = vmatprep.subr.bf16.mxu0 0
        %2291 = vmatpush2.bf16.msra.mxu0 0
        %2292 = vmatprep.subr.bf16.mxu0 0
        %2293 = vmatpush2.bf16.msra.mxu0 0
        %2294 = vmatprep.subr.bf16.mxu0 0
        %2295 = vmatpush2.bf16.msra.mxu0 0
        %2296 = vmatprep.subr.bf16.mxu0 0
        %2297 = vmatpush2.bf16.msra.mxu0 0
        %2298 = vmatprep.subr.bf16.mxu0 0
        %2299 = vmatpush2.bf16.msra.mxu0 0
        %2300 = vmatprep.mubr.bf16.mxu0 0
        %2301 = vmatmul.mubr.bf16.gmra.mxu0 %v2204
        %v2302 = vpop.f32.mrf.mxu0
        %v2303 = vadd.f32 0.0, %v2302
        %v2304 = vpop.f32.mrf.mxu0
        %v2305 = vpop.f32.mrf.mxu0
        %v2306 = vadd.f32 0.0, %v2305
        %v2307 = vpop.f32.mrf.mxu0
        %2308 = vmatprep.mubr.bf16.mxu0 0
        %2309 = vmatmul.mubr.bf16.gmra.mxu0 %v2205
        %v2310 = vpop.f32.mrf.mxu0
        %v2311 = vadd.f32 0.0, %v2310
        %v2312 = vpop.f32.mrf.mxu0
        %v2313 = vpop.f32.mrf.mxu0
        %v2314 = vadd.f32 0.0, %v2313
        %v2315 = vpop.f32.mrf.mxu0
        %2316 = vmatprep.mubr.bf16.mxu0 0
        %2317 = vmatmul.mubr.bf16.gmra.mxu0 %v2206
        %v2318 = vpop.f32.mrf.mxu0
        %v2319 = vadd.f32 0.0, %v2318
        %v2320 = vpop.f32.mrf.mxu0
        %v2321 = vpop.f32.mrf.mxu0
        %v2322 = vadd.f32 0.0, %v2321
        %v2323 = vpop.f32.mrf.mxu0
        %2324 = vmatprep.mubr.bf16.mxu0 0
        %2325 = vmatmul.mubr.bf16.gmra.mxu0 %v2207
        %v2326 = vpop.f32.mrf.mxu0
        %v2327 = vadd.f32 0.0, %v2326
        %v2328 = vpop.f32.mrf.mxu0
        %v2329 = vpop.f32.mrf.mxu0
        %v2330 = vadd.f32 0.0, %v2329
        %v2331 = vpop.f32.mrf.mxu0
        %2332 = vmatprep.mubr.bf16.mxu0 0
        %2333 = vmatmul.mubr.bf16.gmra.mxu0 %v2208
        %v2334 = vpop.f32.mrf.mxu0
        %v2335 = vadd.f32 0.0, %v2334
        %v2336 = vpop.f32.mrf.mxu0
        %v2337 = vpop.f32.mrf.mxu0
        %v2338 = vadd.f32 0.0, %v2337
        %v2339 = vpop.f32.mrf.mxu0
        %2340 = vmatprep.mubr.bf16.mxu0 0
        %2341 = vmatmul.mubr.bf16.gmra.mxu0 %v2209
        %v2342 = vpop.f32.mrf.mxu0
        %v2343 = vadd.f32 0.0, %v2342
        %v2344 = vpop.f32.mrf.mxu0
        %v2345 = vpop.f32.mrf.mxu0
        %v2346 = vadd.f32 0.0, %v2345
        %v2347 = vpop.f32.mrf.mxu0
        %2348 = vmatprep.mubr.bf16.mxu0 0
        %2349 = vmatmul.mubr.bf16.gmra.mxu0 %v2210
        %v2350 = vpop.f32.mrf.mxu0
        %v2351 = vadd.f32 0.0, %v2350
        %v2352 = vpop.f32.mrf.mxu0
        %v2353 = vpop.f32.mrf.mxu0
        %v2354 = vadd.f32 0.0, %v2353
        %v2355 = vpop.f32.mrf.mxu0
        %2356 = vmatprep.mubr.bf16.mxu0 0
        %2357 = vmatmul.mubr.bf16.gmra.mxu0 %v2211
        %v2358 = vpop.f32.mrf.mxu0
        %v2359 = vadd.f32 0.0, %v2358
        %v2360 = vpop.f32.mrf.mxu0
        %v2361 = vpop.f32.mrf.mxu0
        %v2362 = vadd.f32 0.0, %v2361
        %v2363 = vpop.f32.mrf.mxu0
        %2364 = vdwg.mxu0
        %v2365 = vadd.f32 %v2120, %v2303
        %v2366 = vadd.f32 %v2121, %v2306
        %v2367 = vadd.f32 %v2122, %v2311
        %v2368 = vadd.f32 %v2123, %v2314
        %v2369 = vadd.f32 %v2124, %v2319
        %v2370 = vadd.f32 %v2125, %v2322
        %v2371 = vadd.f32 %v2126, %v2327
        %v2372 = vadd.f32 %v2127, %v2330
        %v2373 = vadd.f32 %v2128, %v2335
        %v2374 = vadd.f32 %v2129, %v2338
        %v2375 = vadd.f32 %v2130, %v2343
        %v2376 = vadd.f32 %v2131, %v2346
        %v2377 = vadd.f32 %v2132, %v2351
        %v2378 = vadd.f32 %v2133, %v2354
        %v2379 = vadd.f32 %v2134, %v2359
        %v2380 = vadd.f32 %v2135, %v2362
        %s2381 = sadd.s32 %s1640, 1
        %s2382 = smul.u32 %s2381, 2
        %s2383 = smul.addr %s2382, 4
        %s2384 = scalar_lea.vmem [#allocation2], %s2383
        %v2385 = vld [vmem:[%s2384] sm:$0xf]
        %v2386 = vld [vmem:[%s2384 + $0x4] sm:$0xf]
        %v2387 = vld [vmem:[%s2384 + $0x8] sm:$0xf]
        %v2388 = vld [vmem:[%s2384 + $0xc] sm:$0xf]
        %v2389 = vld [vmem:[%s2384 + $0x10] sm:$0xf]
        %v2390 = vld [vmem:[%s2384 + $0x14] sm:$0xf]
        %v2391 = vld [vmem:[%s2384 + $0x18] sm:$0xf]
        %v2392 = vld [vmem:[%s2384 + $0x1c] sm:$0xf]
        %v2393 = vld [vmem:[%s2384 + $0x20] sm:$0xf]
        %v2394 = vld [vmem:[%s2384 + $0x24] sm:$0xf]
        %v2395 = vld [vmem:[%s2384 + $0x28] sm:$0xf]
        %v2396 = vld [vmem:[%s2384 + $0x2c] sm:$0xf]
        %v2397 = vld [vmem:[%s2384 + $0x30] sm:$0xf]
        %v2398 = vld [vmem:[%s2384 + $0x34] sm:$0xf]
        %v2399 = vld [vmem:[%s2384 + $0x38] sm:$0xf]
        %v2400 = vld [vmem:[%s2384 + $0x3c] sm:$0xf]
        %s2401 = scalar_lea.vmem %s3, 192
        %v2402 = vld [vmem:[%s2401] sm:$0xf]
        %v2403 = vld [vmem:[%s2401 + $0x4] sm:$0xf]
        %v2404 = vld [vmem:[%s2401 + $0x8] sm:$0xf]
        %v2405 = vld [vmem:[%s2401 + $0xc] sm:$0xf]
        %v2406 = vld [vmem:[%s2401 + $0x10] sm:$0xf]
        %v2407 = vld [vmem:[%s2401 + $0x14] sm:$0xf]
        %v2408 = vld [vmem:[%s2401 + $0x18] sm:$0xf]
        %v2409 = vld [vmem:[%s2401 + $0x1c] sm:$0xf]
        %v2410 = vld [vmem:[%s2401 + $0x20] sm:$0xf]
        %v2411 = vld [vmem:[%s2401 + $0x24] sm:$0xf]
        %v2412 = vld [vmem:[%s2401 + $0x28] sm:$0xf]
        %v2413 = vld [vmem:[%s2401 + $0x2c] sm:$0xf]
        %v2414 = vld [vmem:[%s2401 + $0x30] sm:$0xf]
        %v2415 = vld [vmem:[%s2401 + $0x34] sm:$0xf]
        %v2416 = vld [vmem:[%s2401 + $0x38] sm:$0xf]
        %v2417 = vld [vmem:[%s2401 + $0x3c] sm:$0xf]
        %v2434 = vunpack.c.l.b16 %v2385
        %v2435 = vunpack.c.l.b16 %v2386
        %v2436 = vunpack.c.l.b16 %v2387
        %v2437 = vunpack.c.l.b16 %v2388
        %v2438 = vunpack.c.l.b16 %v2389
        %v2439 = vunpack.c.l.b16 %v2390
        %v2440 = vunpack.c.l.b16 %v2391
        %v2441 = vunpack.c.l.b16 %v2392
        %v2442 = vunpack.c.l.b16 %v2393
        %v2443 = vunpack.c.l.b16 %v2394
        %v2444 = vunpack.c.l.b16 %v2395
        %v2445 = vunpack.c.l.b16 %v2396
        %v2446 = vunpack.c.l.b16 %v2397
        %v2447 = vunpack.c.l.b16 %v2398
        %v2448 = vunpack.c.l.b16 %v2399
        %v2449 = vunpack.c.l.b16 %v2400
        %v2450 = vpack.c.b16 %v2435, %v2434
        %v2451 = vpack.c.b16 %v2437, %v2436
        %v2452 = vpack.c.b16 %v2439, %v2438
        %v2453 = vpack.c.b16 %v2441, %v2440
        %v2454 = vpack.c.b16 %v2443, %v2442
        %v2455 = vpack.c.b16 %v2445, %v2444
        %v2456 = vpack.c.b16 %v2447, %v2446
        %v2457 = vpack.c.b16 %v2449, %v2448
        %v2482 = vunpack.c.l.b16 %v2402
        %v2483 = vunpack.c.l.b16 %v2403
        %v2484 = vunpack.c.l.b16 %v2404
        %v2485 = vunpack.c.l.b16 %v2405
        %v2486 = vunpack.c.l.b16 %v2406
        %v2487 = vunpack.c.l.b16 %v2407
        %v2488 = vunpack.c.l.b16 %v2408
        %v2489 = vunpack.c.l.b16 %v2409
        %v2490 = vunpack.c.l.b16 %v2410
        %v2491 = vunpack.c.l.b16 %v2411
        %v2492 = vunpack.c.l.b16 %v2412
        %v2493 = vunpack.c.l.b16 %v2413
        %v2494 = vunpack.c.l.b16 %v2414
        %v2495 = vunpack.c.l.b16 %v2415
        %v2496 = vunpack.c.l.b16 %v2416
        %v2497 = vunpack.c.l.b16 %v2417
        %v2498 = vpack.c.b16 %v2483, %v2482
        %v2499 = vpack.c.b16 %v2485, %v2484
        %v2500 = vpack.c.b16 %v2487, %v2486
        %v2501 = vpack.c.b16 %v2489, %v2488
        %v2502 = vpack.c.b16 %v2491, %v2490
        %v2503 = vpack.c.b16 %v2493, %v2492
        %v2504 = vpack.c.b16 %v2495, %v2494
        %v2505 = vpack.c.b16 %v2497, %v2496
        %2514 = vmatprep.subr.bf16.mxu0 0
        %2515 = vmatpush1.bf16.msra.mxu0 %v2505
        %2516 = vmatprep.subr.bf16.mxu0 0
        %2517 = vmatpush1.bf16.msra.mxu0 %v2504
        %2518 = vmatprep.subr.bf16.mxu0 0
        %2519 = vmatpush1.bf16.msra.mxu0 %v2503
        %2520 = vmatprep.subr.bf16.mxu0 0
        %2521 = vmatpush1.bf16.msra.mxu0 %v2502
        %2522 = vmatprep.subr.bf16.mxu0 0
        %2523 = vmatpush1.bf16.msra.mxu0 %v2501
        %2524 = vmatprep.subr.bf16.mxu0 0
        %2525 = vmatpush1.bf16.msra.mxu0 %v2500
        %2526 = vmatprep.subr.bf16.mxu0 0
        %2527 = vmatpush1.bf16.msra.mxu0 %v2499
        %2528 = vmatprep.subr.bf16.mxu0 0
        %2529 = vmatpush1.bf16.msra.mxu0 %v2498
        %2530 = vmatprep.subr.bf16.mxu0 0
        %2531 = vmatpush2.bf16.msra.mxu0 0
        %2532 = vmatprep.subr.bf16.mxu0 0
        %2533 = vmatpush2.bf16.msra.mxu0 0
        %2534 = vmatprep.subr.bf16.mxu0 0
        %2535 = vmatpush2.bf16.msra.mxu0 0
        %2536 = vmatprep.subr.bf16.mxu0 0
        %2537 = vmatpush2.bf16.msra.mxu0 0
        %2538 = vmatprep.subr.bf16.mxu0 0
        %2539 = vmatpush2.bf16.msra.mxu0 0
        %2540 = vmatprep.subr.bf16.mxu0 0
        %2541 = vmatpush2.bf16.msra.mxu0 0
        %2542 = vmatprep.subr.bf16.mxu0 0
        %2543 = vmatpush2.bf16.msra.mxu0 0
        %2544 = vmatprep.subr.bf16.mxu0 0
        %2545 = vmatpush2.bf16.msra.mxu0 0
        %2546 = vmatprep.mubr.bf16.mxu0 0
        %2547 = vmatmul.mubr.bf16.gmra.mxu0 %v2450
        %v2548 = vpop.f32.mrf.mxu0
        %v2549 = vadd.f32 0.0, %v2548
        %v2550 = vpop.f32.mrf.mxu0
        %v2551 = vpop.f32.mrf.mxu0
        %v2552 = vadd.f32 0.0, %v2551
        %v2553 = vpop.f32.mrf.mxu0
        %2554 = vmatprep.mubr.bf16.mxu0 0
        %2555 = vmatmul.mubr.bf16.gmra.mxu0 %v2451
        %v2556 = vpop.f32.mrf.mxu0
        %v2557 = vadd.f32 0.0, %v2556
        %v2558 = vpop.f32.mrf.mxu0
        %v2559 = vpop.f32.mrf.mxu0
        %v2560 = vadd.f32 0.0, %v2559
        %v2561 = vpop.f32.mrf.mxu0
        %2562 = vmatprep.mubr.bf16.mxu0 0
        %2563 = vmatmul.mubr.bf16.gmra.mxu0 %v2452
        %v2564 = vpop.f32.mrf.mxu0
        %v2565 = vadd.f32 0.0, %v2564
        %v2566 = vpop.f32.mrf.mxu0
        %v2567 = vpop.f32.mrf.mxu0
        %v2568 = vadd.f32 0.0, %v2567
        %v2569 = vpop.f32.mrf.mxu0
        %2570 = vmatprep.mubr.bf16.mxu0 0
        %2571 = vmatmul.mubr.bf16.gmra.mxu0 %v2453
        %v2572 = vpop.f32.mrf.mxu0
        %v2573 = vadd.f32 0.0, %v2572
        %v2574 = vpop.f32.mrf.mxu0
        %v2575 = vpop.f32.mrf.mxu0
        %v2576 = vadd.f32 0.0, %v2575
        %v2577 = vpop.f32.mrf.mxu0
        %2578 = vmatprep.mubr.bf16.mxu0 0
        %2579 = vmatmul.mubr.bf16.gmra.mxu0 %v2454
        %v2580 = vpop.f32.mrf.mxu0
        %v2581 = vadd.f32 0.0, %v2580
        %v2582 = vpop.f32.mrf.mxu0
        %v2583 = vpop.f32.mrf.mxu0
        %v2584 = vadd.f32 0.0, %v2583
        %v2585 = vpop.f32.mrf.mxu0
        %2586 = vmatprep.mubr.bf16.mxu0 0
        %2587 = vmatmul.mubr.bf16.gmra.mxu0 %v2455
        %v2588 = vpop.f32.mrf.mxu0
        %v2589 = vadd.f32 0.0, %v2588
        %v2590 = vpop.f32.mrf.mxu0
        %v2591 = vpop.f32.mrf.mxu0
        %v2592 = vadd.f32 0.0, %v2591
        %v2593 = vpop.f32.mrf.mxu0
        %2594 = vmatprep.mubr.bf16.mxu0 0
        %2595 = vmatmul.mubr.bf16.gmra.mxu0 %v2456
        %v2596 = vpop.f32.mrf.mxu0
        %v2597 = vadd.f32 0.0, %v2596
        %v2598 = vpop.f32.mrf.mxu0
        %v2599 = vpop.f32.mrf.mxu0
        %v2600 = vadd.f32 0.0, %v2599
        %v2601 = vpop.f32.mrf.mxu0
        %2602 = vmatprep.mubr.bf16.mxu0 0
        %2603 = vmatmul.mubr.bf16.gmra.mxu0 %v2457
        %v2604 = vpop.f32.mrf.mxu0
        %v2605 = vadd.f32 0.0, %v2604
        %v2606 = vpop.f32.mrf.mxu0
        %v2607 = vpop.f32.mrf.mxu0
        %v2608 = vadd.f32 0.0, %v2607
        %v2609 = vpop.f32.mrf.mxu0
        %2610 = vdwg.mxu0
        %v2611 = vadd.f32 %v2365, %v2549
        %v2612 = vadd.f32 %v2366, %v2552
        %v2613 = vadd.f32 %v2367, %v2557
        %v2614 = vadd.f32 %v2368, %v2560
        %v2615 = vadd.f32 %v2369, %v2565
        %v2616 = vadd.f32 %v2370, %v2568
        %v2617 = vadd.f32 %v2371, %v2573
        %v2618 = vadd.f32 %v2372, %v2576
        %v2619 = vadd.f32 %v2373, %v2581
        %v2620 = vadd.f32 %v2374, %v2584
        %v2621 = vadd.f32 %v2375, %v2589
        %v2622 = vadd.f32 %v2376, %v2592
        %v2623 = vadd.f32 %v2377, %v2597
        %v2624 = vadd.f32 %v2378, %v2600
        %v2625 = vadd.f32 %v2379, %v2605
        %v2626 = vadd.f32 %v2380, %v2608
        %s2627 = sadd.s32 %s2382, 36
        %s2628 = smul.addr %s2627, 4
        %s2629 = scalar_lea.vmem [#allocation2], %s2628
        %v2630 = vld [vmem:[%s2629] sm:$0xf]
        %v2631 = vld [vmem:[%s2629 + $0x4] sm:$0xf]
        %v2632 = vld [vmem:[%s2629 + $0x8] sm:$0xf]
        %v2633 = vld [vmem:[%s2629 + $0xc] sm:$0xf]
        %v2634 = vld [vmem:[%s2629 + $0x10] sm:$0xf]
        %v2635 = vld [vmem:[%s2629 + $0x14] sm:$0xf]
        %v2636 = vld [vmem:[%s2629 + $0x18] sm:$0xf]
        %v2637 = vld [vmem:[%s2629 + $0x1c] sm:$0xf]
        %v2638 = vld [vmem:[%s2629 + $0x20] sm:$0xf]
        %v2639 = vld [vmem:[%s2629 + $0x24] sm:$0xf]
        %v2640 = vld [vmem:[%s2629 + $0x28] sm:$0xf]
        %v2641 = vld [vmem:[%s2629 + $0x2c] sm:$0xf]
        %v2642 = vld [vmem:[%s2629 + $0x30] sm:$0xf]
        %v2643 = vld [vmem:[%s2629 + $0x34] sm:$0xf]
        %v2644 = vld [vmem:[%s2629 + $0x38] sm:$0xf]
        %v2645 = vld [vmem:[%s2629 + $0x3c] sm:$0xf]
        %s2646 = scalar_lea.vmem %s3, 256
        %v2647 = vld [vmem:[%s2646] sm:$0xf]
        %v2648 = vld [vmem:[%s2646 + $0x4] sm:$0xf]
        %v2649 = vld [vmem:[%s2646 + $0x8] sm:$0xf]
        %v2650 = vld [vmem:[%s2646 + $0xc] sm:$0xf]
        %v2651 = vld [vmem:[%s2646 + $0x10] sm:$0xf]
        %v2652 = vld [vmem:[%s2646 + $0x14] sm:$0xf]
        %v2653 = vld [vmem:[%s2646 + $0x18] sm:$0xf]
        %v2654 = vld [vmem:[%s2646 + $0x1c] sm:$0xf]
        %v2655 = vld [vmem:[%s2646 + $0x20] sm:$0xf]
        %v2656 = vld [vmem:[%s2646 + $0x24] sm:$0xf]
        %v2657 = vld [vmem:[%s2646 + $0x28] sm:$0xf]
        %v2658 = vld [vmem:[%s2646 + $0x2c] sm:$0xf]
        %v2659 = vld [vmem:[%s2646 + $0x30] sm:$0xf]
        %v2660 = vld [vmem:[%s2646 + $0x34] sm:$0xf]
        %v2661 = vld [vmem:[%s2646 + $0x38] sm:$0xf]
        %v2662 = vld [vmem:[%s2646 + $0x3c] sm:$0xf]
        %v2679 = vunpack.c.l.b16 %v2630
        %v2680 = vunpack.c.l.b16 %v2631
        %v2681 = vunpack.c.l.b16 %v2632
        %v2682 = vunpack.c.l.b16 %v2633
        %v2683 = vunpack.c.l.b16 %v2634
        %v2684 = vunpack.c.l.b16 %v2635
        %v2685 = vunpack.c.l.b16 %v2636
        %v2686 = vunpack.c.l.b16 %v2637
        %v2687 = vunpack.c.l.b16 %v2638
        %v2688 = vunpack.c.l.b16 %v2639
        %v2689 = vunpack.c.l.b16 %v2640
        %v2690 = vunpack.c.l.b16 %v2641
        %v2691 = vunpack.c.l.b16 %v2642
        %v2692 = vunpack.c.l.b16 %v2643
        %v2693 = vunpack.c.l.b16 %v2644
        %v2694 = vunpack.c.l.b16 %v2645
        %v2695 = vpack.c.b16 %v2680, %v2679
        %v2696 = vpack.c.b16 %v2682, %v2681
        %v2697 = vpack.c.b16 %v2684, %v2683
        %v2698 = vpack.c.b16 %v2686, %v2685
        %v2699 = vpack.c.b16 %v2688, %v2687
        %v2700 = vpack.c.b16 %v2690, %v2689
        %v2701 = vpack.c.b16 %v2692, %v2691
        %v2702 = vpack.c.b16 %v2694, %v2693
        %v2727 = vunpack.c.l.b16 %v2647
        %v2728 = vunpack.c.l.b16 %v2648
        %v2729 = vunpack.c.l.b16 %v2649
        %v2730 = vunpack.c.l.b16 %v2650
        %v2731 = vunpack.c.l.b16 %v2651
        %v2732 = vunpack.c.l.b16 %v2652
        %v2733 = vunpack.c.l.b16 %v2653
        %v2734 = vunpack.c.l.b16 %v2654
        %v2735 = vunpack.c.l.b16 %v2655
        %v2736 = vunpack.c.l.b16 %v2656
        %v2737 = vunpack.c.l.b16 %v2657
        %v2738 = vunpack.c.l.b16 %v2658
        %v2739 = vunpack.c.l.b16 %v2659
        %v2740 = vunpack.c.l.b16 %v2660
        %v2741 = vunpack.c.l.b16 %v2661
        %v2742 = vunpack.c.l.b16 %v2662
        %v2743 = vpack.c.b16 %v2728, %v2727
        %v2744 = vpack.c.b16 %v2730, %v2729
        %v2745 = vpack.c.b16 %v2732, %v2731
        %v2746 = vpack.c.b16 %v2734, %v2733
        %v2747 = vpack.c.b16 %v2736, %v2735
        %v2748 = vpack.c.b16 %v2738, %v2737
        %v2749 = vpack.c.b16 %v2740, %v2739
        %v2750 = vpack.c.b16 %v2742, %v2741
        %2759 = vmatprep.subr.bf16.mxu0 0
        %2760 = vmatpush1.bf16.msra.mxu0 %v2750
        %2761 = vmatprep.subr.bf16.mxu0 0
        %2762 = vmatpush1.bf16.msra.mxu0 %v2749
        %2763 = vmatprep.subr.bf16.mxu0 0
        %2764 = vmatpush1.bf16.msra.mxu0 %v2748
        %2765 = vmatprep.subr.bf16.mxu0 0
        %2766 = vmatpush1.bf16.msra.mxu0 %v2747
        %2767 = vmatprep.subr.bf16.mxu0 0
        %2768 = vmatpush1.bf16.msra.mxu0 %v2746
        %2769 = vmatprep.subr.bf16.mxu0 0
        %2770 = vmatpush1.bf16.msra.mxu0 %v2745
        %2771 = vmatprep.subr.bf16.mxu0 0
        %2772 = vmatpush1.bf16.msra.mxu0 %v2744
        %2773 = vmatprep.subr.bf16.mxu0 0
        %2774 = vmatpush1.bf16.msra.mxu0 %v2743
        %2775 = vmatprep.subr.bf16.mxu0 0
        %2776 = vmatpush2.bf16.msra.mxu0 0
        %2777 = vmatprep.subr.bf16.mxu0 0
        %2778 = vmatpush2.bf16.msra.mxu0 0
        %2779 = vmatprep.subr.bf16.mxu0 0
        %2780 = vmatpush2.bf16.msra.mxu0 0
        %2781 = vmatprep.subr.bf16.mxu0 0
        %2782 = vmatpush2.bf16.msra.mxu0 0
        %2783 = vmatprep.subr.bf16.mxu0 0
        %2784 = vmatpush2.bf16.msra.mxu0 0
        %2785 = vmatprep.subr.bf16.mxu0 0
        %2786 = vmatpush2.bf16.msra.mxu0 0
        %2787 = vmatprep.subr.bf16.mxu0 0
        %2788 = vmatpush2.bf16.msra.mxu0 0
        %2789 = vmatprep.subr.bf16.mxu0 0
        %2790 = vmatpush2.bf16.msra.mxu0 0
        %2791 = vmatprep.mubr.bf16.mxu0 0
        %2792 = vmatmul.mubr.bf16.gmra.mxu0 %v2695
        %v2793 = vpop.f32.mrf.mxu0
        %v2794 = vadd.f32 0.0, %v2793
        %v2795 = vpop.f32.mrf.mxu0
        %v2796 = vpop.f32.mrf.mxu0
        %v2797 = vadd.f32 0.0, %v2796
        %v2798 = vpop.f32.mrf.mxu0
        %2799 = vmatprep.mubr.bf16.mxu0 0
        %2800 = vmatmul.mubr.bf16.gmra.mxu0 %v2696
        %v2801 = vpop.f32.mrf.mxu0
        %v2802 = vadd.f32 0.0, %v2801
        %v2803 = vpop.f32.mrf.mxu0
        %v2804 = vpop.f32.mrf.mxu0
        %v2805 = vadd.f32 0.0, %v2804
        %v2806 = vpop.f32.mrf.mxu0
        %2807 = vmatprep.mubr.bf16.mxu0 0
        %2808 = vmatmul.mubr.bf16.gmra.mxu0 %v2697
        %v2809 = vpop.f32.mrf.mxu0
        %v2810 = vadd.f32 0.0, %v2809
        %v2811 = vpop.f32.mrf.mxu0
        %v2812 = vpop.f32.mrf.mxu0
        %v2813 = vadd.f32 0.0, %v2812
        %v2814 = vpop.f32.mrf.mxu0
        %2815 = vmatprep.mubr.bf16.mxu0 0
        %2816 = vmatmul.mubr.bf16.gmra.mxu0 %v2698
        %v2817 = vpop.f32.mrf.mxu0
        %v2818 = vadd.f32 0.0, %v2817
        %v2819 = vpop.f32.mrf.mxu0
        %v2820 = vpop.f32.mrf.mxu0
        %v2821 = vadd.f32 0.0, %v2820
        %v2822 = vpop.f32.mrf.mxu0
        %2823 = vmatprep.mubr.bf16.mxu0 0
        %2824 = vmatmul.mubr.bf16.gmra.mxu0 %v2699
        %v2825 = vpop.f32.mrf.mxu0
        %v2826 = vadd.f32 0.0, %v2825
        %v2827 = vpop.f32.mrf.mxu0
        %v2828 = vpop.f32.mrf.mxu0
        %v2829 = vadd.f32 0.0, %v2828
        %v2830 = vpop.f32.mrf.mxu0
        %2831 = vmatprep.mubr.bf16.mxu0 0
        %2832 = vmatmul.mubr.bf16.gmra.mxu0 %v2700
        %v2833 = vpop.f32.mrf.mxu0
        %v2834 = vadd.f32 0.0, %v2833
        %v2835 = vpop.f32.mrf.mxu0
        %v2836 = vpop.f32.mrf.mxu0
        %v2837 = vadd.f32 0.0, %v2836
        %v2838 = vpop.f32.mrf.mxu0
        %2839 = vmatprep.mubr.bf16.mxu0 0
        %2840 = vmatmul.mubr.bf16.gmra.mxu0 %v2701
        %v2841 = vpop.f32.mrf.mxu0
        %v2842 = vadd.f32 0.0, %v2841
        %v2843 = vpop.f32.mrf.mxu0
        %v2844 = vpop.f32.mrf.mxu0
        %v2845 = vadd.f32 0.0, %v2844
        %v2846 = vpop.f32.mrf.mxu0
        %2847 = vmatprep.mubr.bf16.mxu0 0
        %2848 = vmatmul.mubr.bf16.gmra.mxu0 %v2702
        %v2849 = vpop.f32.mrf.mxu0
        %v2850 = vadd.f32 0.0, %v2849
        %v2851 = vpop.f32.mrf.mxu0
        %v2852 = vpop.f32.mrf.mxu0
        %v2853 = vadd.f32 0.0, %v2852
        %v2854 = vpop.f32.mrf.mxu0
        %2855 = vdwg.mxu0
        %v2856 = vadd.f32 %v2611, %v2794
        %v2857 = vadd.f32 %v2612, %v2797
        %v2858 = vadd.f32 %v2613, %v2802
        %v2859 = vadd.f32 %v2614, %v2805
        %v2860 = vadd.f32 %v2615, %v2810
        %v2861 = vadd.f32 %v2616, %v2813
        %v2862 = vadd.f32 %v2617, %v2818
        %v2863 = vadd.f32 %v2618, %v2821
        %v2864 = vadd.f32 %v2619, %v2826
        %v2865 = vadd.f32 %v2620, %v2829
        %v2866 = vadd.f32 %v2621, %v2834
        %v2867 = vadd.f32 %v2622, %v2837
        %v2868 = vadd.f32 %v2623, %v2842
        %v2869 = vadd.f32 %v2624, %v2845
        %v2870 = vadd.f32 %v2625, %v2850
        %v2871 = vadd.f32 %v2626, %v2853
        %s2872 = sadd.s32 %s2382, 72
        %s2873 = smul.addr %s2872, 4
        %s2874 = scalar_lea.vmem [#allocation2], %s2873
        %v2875 = vld [vmem:[%s2874] sm:$0xf]
        %v2876 = vld [vmem:[%s2874 + $0x4] sm:$0xf]
        %v2877 = vld [vmem:[%s2874 + $0x8] sm:$0xf]
        %v2878 = vld [vmem:[%s2874 + $0xc] sm:$0xf]
        %v2879 = vld [vmem:[%s2874 + $0x10] sm:$0xf]
        %v2880 = vld [vmem:[%s2874 + $0x14] sm:$0xf]
        %v2881 = vld [vmem:[%s2874 + $0x18] sm:$0xf]
        %v2882 = vld [vmem:[%s2874 + $0x1c] sm:$0xf]
        %v2883 = vld [vmem:[%s2874 + $0x20] sm:$0xf]
        %v2884 = vld [vmem:[%s2874 + $0x24] sm:$0xf]
        %v2885 = vld [vmem:[%s2874 + $0x28] sm:$0xf]
        %v2886 = vld [vmem:[%s2874 + $0x2c] sm:$0xf]
        %v2887 = vld [vmem:[%s2874 + $0x30] sm:$0xf]
        %v2888 = vld [vmem:[%s2874 + $0x34] sm:$0xf]
        %v2889 = vld [vmem:[%s2874 + $0x38] sm:$0xf]
        %v2890 = vld [vmem:[%s2874 + $0x3c] sm:$0xf]
        %s2891 = scalar_lea.vmem %s3, 320
        %v2892 = vld [vmem:[%s2891] sm:$0xf]
        %v2893 = vld [vmem:[%s2891 + $0x4] sm:$0xf]
        %v2894 = vld [vmem:[%s2891 + $0x8] sm:$0xf]
        %v2895 = vld [vmem:[%s2891 + $0xc] sm:$0xf]
        %v2896 = vld [vmem:[%s2891 + $0x10] sm:$0xf]
        %v2897 = vld [vmem:[%s2891 + $0x14] sm:$0xf]
        %v2898 = vld [vmem:[%s2891 + $0x18] sm:$0xf]
        %v2899 = vld [vmem:[%s2891 + $0x1c] sm:$0xf]
        %v2900 = vld [vmem:[%s2891 + $0x20] sm:$0xf]
        %v2901 = vld [vmem:[%s2891 + $0x24] sm:$0xf]
        %v2902 = vld [vmem:[%s2891 + $0x28] sm:$0xf]
        %v2903 = vld [vmem:[%s2891 + $0x2c] sm:$0xf]
        %v2904 = vld [vmem:[%s2891 + $0x30] sm:$0xf]
        %v2905 = vld [vmem:[%s2891 + $0x34] sm:$0xf]
        %v2906 = vld [vmem:[%s2891 + $0x38] sm:$0xf]
        %v2907 = vld [vmem:[%s2891 + $0x3c] sm:$0xf]
        %v2924 = vunpack.c.l.b16 %v2875
        %v2925 = vunpack.c.l.b16 %v2876
        %v2926 = vunpack.c.l.b16 %v2877
        %v2927 = vunpack.c.l.b16 %v2878
        %v2928 = vunpack.c.l.b16 %v2879
        %v2929 = vunpack.c.l.b16 %v2880
        %v2930 = vunpack.c.l.b16 %v2881
        %v2931 = vunpack.c.l.b16 %v2882
        %v2932 = vunpack.c.l.b16 %v2883
        %v2933 = vunpack.c.l.b16 %v2884
        %v2934 = vunpack.c.l.b16 %v2885
        %v2935 = vunpack.c.l.b16 %v2886
        %v2936 = vunpack.c.l.b16 %v2887
        %v2937 = vunpack.c.l.b16 %v2888
        %v2938 = vunpack.c.l.b16 %v2889
        %v2939 = vunpack.c.l.b16 %v2890
        %v2940 = vpack.c.b16 %v2925, %v2924
        %v2941 = vpack.c.b16 %v2927, %v2926
        %v2942 = vpack.c.b16 %v2929, %v2928
        %v2943 = vpack.c.b16 %v2931, %v2930
        %v2944 = vpack.c.b16 %v2933, %v2932
        %v2945 = vpack.c.b16 %v2935, %v2934
        %v2946 = vpack.c.b16 %v2937, %v2936
        %v2947 = vpack.c.b16 %v2939, %v2938
        %v2972 = vunpack.c.l.b16 %v2892
        %v2973 = vunpack.c.l.b16 %v2893
        %v2974 = vunpack.c.l.b16 %v2894
        %v2975 = vunpack.c.l.b16 %v2895
        %v2976 = vunpack.c.l.b16 %v2896
        %v2977 = vunpack.c.l.b16 %v2897
        %v2978 = vunpack.c.l.b16 %v2898
        %v2979 = vunpack.c.l.b16 %v2899
        %v2980 = vunpack.c.l.b16 %v2900
        %v2981 = vunpack.c.l.b16 %v2901
        %v2982 = vunpack.c.l.b16 %v2902
        %v2983 = vunpack.c.l.b16 %v2903
        %v2984 = vunpack.c.l.b16 %v2904
        %v2985 = vunpack.c.l.b16 %v2905
        %v2986 = vunpack.c.l.b16 %v2906
        %v2987 = vunpack.c.l.b16 %v2907
        %v2988 = vpack.c.b16 %v2973, %v2972
        %v2989 = vpack.c.b16 %v2975, %v2974
        %v2990 = vpack.c.b16 %v2977, %v2976
        %v2991 = vpack.c.b16 %v2979, %v2978
        %v2992 = vpack.c.b16 %v2981, %v2980
        %v2993 = vpack.c.b16 %v2983, %v2982
        %v2994 = vpack.c.b16 %v2985, %v2984
        %v2995 = vpack.c.b16 %v2987, %v2986
        %3004 = vmatprep.subr.bf16.mxu0 0
        %3005 = vmatpush1.bf16.msra.mxu0 %v2995
        %3006 = vmatprep.subr.bf16.mxu0 0
        %3007 = vmatpush1.bf16.msra.mxu0 %v2994
        %3008 = vmatprep.subr.bf16.mxu0 0
        %3009 = vmatpush1.bf16.msra.mxu0 %v2993
        %3010 = vmatprep.subr.bf16.mxu0 0
        %3011 = vmatpush1.bf16.msra.mxu0 %v2992
        %3012 = vmatprep.subr.bf16.mxu0 0
        %3013 = vmatpush1.bf16.msra.mxu0 %v2991
        %3014 = vmatprep.subr.bf16.mxu0 0
        %3015 = vmatpush1.bf16.msra.mxu0 %v2990
        %3016 = vmatprep.subr.bf16.mxu0 0
        %3017 = vmatpush1.bf16.msra.mxu0 %v2989
        %3018 = vmatprep.subr.bf16.mxu0 0
        %3019 = vmatpush1.bf16.msra.mxu0 %v2988
        %3020 = vmatprep.subr.bf16.mxu0 0
        %3021 = vmatpush2.bf16.msra.mxu0 0
        %3022 = vmatprep.subr.bf16.mxu0 0
        %3023 = vmatpush2.bf16.msra.mxu0 0
        %3024 = vmatprep.subr.bf16.mxu0 0
        %3025 = vmatpush2.bf16.msra.mxu0 0
        %3026 = vmatprep.subr.bf16.mxu0 0
        %3027 = vmatpush2.bf16.msra.mxu0 0
        %3028 = vmatprep.subr.bf16.mxu0 0
        %3029 = vmatpush2.bf16.msra.mxu0 0
        %3030 = vmatprep.subr.bf16.mxu0 0
        %3031 = vmatpush2.bf16.msra.mxu0 0
        %3032 = vmatprep.subr.bf16.mxu0 0
        %3033 = vmatpush2.bf16.msra.mxu0 0
        %3034 = vmatprep.subr.bf16.mxu0 0
        %3035 = vmatpush2.bf16.msra.mxu0 0
        %3036 = vmatprep.mubr.bf16.mxu0 0
        %3037 = vmatmul.mubr.bf16.gmra.mxu0 %v2940
        %v3038 = vpop.f32.mrf.mxu0
        %v3039 = vadd.f32 0.0, %v3038
        %v3040 = vpop.f32.mrf.mxu0
        %v3041 = vpop.f32.mrf.mxu0
        %v3042 = vadd.f32 0.0, %v3041
        %v3043 = vpop.f32.mrf.mxu0
        %3044 = vmatprep.mubr.bf16.mxu0 0
        %3045 = vmatmul.mubr.bf16.gmra.mxu0 %v2941
        %v3046 = vpop.f32.mrf.mxu0
        %v3047 = vadd.f32 0.0, %v3046
        %v3048 = vpop.f32.mrf.mxu0
        %v3049 = vpop.f32.mrf.mxu0
        %v3050 = vadd.f32 0.0, %v3049
        %v3051 = vpop.f32.mrf.mxu0
        %3052 = vmatprep.mubr.bf16.mxu0 0
        %3053 = vmatmul.mubr.bf16.gmra.mxu0 %v2942
        %v3054 = vpop.f32.mrf.mxu0
        %v3055 = vadd.f32 0.0, %v3054
        %v3056 = vpop.f32.mrf.mxu0
        %v3057 = vpop.f32.mrf.mxu0
        %v3058 = vadd.f32 0.0, %v3057
        %v3059 = vpop.f32.mrf.mxu0
        %3060 = vmatprep.mubr.bf16.mxu0 0
        %3061 = vmatmul.mubr.bf16.gmra.mxu0 %v2943
        %v3062 = vpop.f32.mrf.mxu0
        %v3063 = vadd.f32 0.0, %v3062
        %v3064 = vpop.f32.mrf.mxu0
        %v3065 = vpop.f32.mrf.mxu0
        %v3066 = vadd.f32 0.0, %v3065
        %v3067 = vpop.f32.mrf.mxu0
        %3068 = vmatprep.mubr.bf16.mxu0 0
        %3069 = vmatmul.mubr.bf16.gmra.mxu0 %v2944
        %v3070 = vpop.f32.mrf.mxu0
        %v3071 = vadd.f32 0.0, %v3070
        %v3072 = vpop.f32.mrf.mxu0
        %v3073 = vpop.f32.mrf.mxu0
        %v3074 = vadd.f32 0.0, %v3073
        %v3075 = vpop.f32.mrf.mxu0
        %3076 = vmatprep.mubr.bf16.mxu0 0
        %3077 = vmatmul.mubr.bf16.gmra.mxu0 %v2945
        %v3078 = vpop.f32.mrf.mxu0
        %v3079 = vadd.f32 0.0, %v3078
        %v3080 = vpop.f32.mrf.mxu0
        %v3081 = vpop.f32.mrf.mxu0
        %v3082 = vadd.f32 0.0, %v3081
        %v3083 = vpop.f32.mrf.mxu0
        %3084 = vmatprep.mubr.bf16.mxu0 0
        %3085 = vmatmul.mubr.bf16.gmra.mxu0 %v2946
        %v3086 = vpop.f32.mrf.mxu0
        %v3087 = vadd.f32 0.0, %v3086
        %v3088 = vpop.f32.mrf.mxu0
        %v3089 = vpop.f32.mrf.mxu0
        %v3090 = vadd.f32 0.0, %v3089
        %v3091 = vpop.f32.mrf.mxu0
        %3092 = vmatprep.mubr.bf16.mxu0 0
        %3093 = vmatmul.mubr.bf16.gmra.mxu0 %v2947
        %v3094 = vpop.f32.mrf.mxu0
        %v3095 = vadd.f32 0.0, %v3094
        %v3096 = vpop.f32.mrf.mxu0
        %v3097 = vpop.f32.mrf.mxu0
        %v3098 = vadd.f32 0.0, %v3097
        %v3099 = vpop.f32.mrf.mxu0
        %3100 = vdwg.mxu0
        %v3101 = vadd.f32 %v2856, %v3039
        %v3102 = vadd.f32 %v2857, %v3042
        %v3103 = vadd.f32 %v2858, %v3047
        %v3104 = vadd.f32 %v2859, %v3050
        %v3105 = vadd.f32 %v2860, %v3055
        %v3106 = vadd.f32 %v2861, %v3058
        %v3107 = vadd.f32 %v2862, %v3063
        %v3108 = vadd.f32 %v2863, %v3066
        %v3109 = vadd.f32 %v2864, %v3071
        %v3110 = vadd.f32 %v2865, %v3074
        %v3111 = vadd.f32 %v2866, %v3079
        %v3112 = vadd.f32 %v2867, %v3082
        %v3113 = vadd.f32 %v2868, %v3087
        %v3114 = vadd.f32 %v2869, %v3090
        %v3115 = vadd.f32 %v2870, %v3095
        %v3116 = vadd.f32 %v2871, %v3098
        %s3117 = sadd.s32 %s1640, 2
        %s3118 = smul.u32 %s3117, 2
        %s3119 = smul.addr %s3118, 4
        %s3120 = scalar_lea.vmem [#allocation2], %s3119
        %v3121 = vld [vmem:[%s3120] sm:$0xf]
        %v3122 = vld [vmem:[%s3120 + $0x4] sm:$0xf]
        %v3123 = vld [vmem:[%s3120 + $0x8] sm:$0xf]
        %v3124 = vld [vmem:[%s3120 + $0xc] sm:$0xf]
        %v3125 = vld [vmem:[%s3120 + $0x10] sm:$0xf]
        %v3126 = vld [vmem:[%s3120 + $0x14] sm:$0xf]
        %v3127 = vld [vmem:[%s3120 + $0x18] sm:$0xf]
        %v3128 = vld [vmem:[%s3120 + $0x1c] sm:$0xf]
        %v3129 = vld [vmem:[%s3120 + $0x20] sm:$0xf]
        %v3130 = vld [vmem:[%s3120 + $0x24] sm:$0xf]
        %v3131 = vld [vmem:[%s3120 + $0x28] sm:$0xf]
        %v3132 = vld [vmem:[%s3120 + $0x2c] sm:$0xf]
        %v3133 = vld [vmem:[%s3120 + $0x30] sm:$0xf]
        %v3134 = vld [vmem:[%s3120 + $0x34] sm:$0xf]
        %v3135 = vld [vmem:[%s3120 + $0x38] sm:$0xf]
        %v3136 = vld [vmem:[%s3120 + $0x3c] sm:$0xf]
        %s3137 = scalar_lea.vmem %s3, 384
        %v3138 = vld [vmem:[%s3137] sm:$0xf]
        %v3139 = vld [vmem:[%s3137 + $0x4] sm:$0xf]
        %v3140 = vld [vmem:[%s3137 + $0x8] sm:$0xf]
        %v3141 = vld [vmem:[%s3137 + $0xc] sm:$0xf]
        %v3142 = vld [vmem:[%s3137 + $0x10] sm:$0xf]
        %v3143 = vld [vmem:[%s3137 + $0x14] sm:$0xf]
        %v3144 = vld [vmem:[%s3137 + $0x18] sm:$0xf]
        %v3145 = vld [vmem:[%s3137 + $0x1c] sm:$0xf]
        %v3146 = vld [vmem:[%s3137 + $0x20] sm:$0xf]
        %v3147 = vld [vmem:[%s3137 + $0x24] sm:$0xf]
        %v3148 = vld [vmem:[%s3137 + $0x28] sm:$0xf]
        %v3149 = vld [vmem:[%s3137 + $0x2c] sm:$0xf]
        %v3150 = vld [vmem:[%s3137 + $0x30] sm:$0xf]
        %v3151 = vld [vmem:[%s3137 + $0x34] sm:$0xf]
        %v3152 = vld [vmem:[%s3137 + $0x38] sm:$0xf]
        %v3153 = vld [vmem:[%s3137 + $0x3c] sm:$0xf]
        %v3170 = vunpack.c.l.b16 %v3121
        %v3171 = vunpack.c.l.b16 %v3122
        %v3172 = vunpack.c.l.b16 %v3123
        %v3173 = vunpack.c.l.b16 %v3124
        %v3174 = vunpack.c.l.b16 %v3125
        %v3175 = vunpack.c.l.b16 %v3126
        %v3176 = vunpack.c.l.b16 %v3127
        %v3177 = vunpack.c.l.b16 %v3128
        %v3178 = vunpack.c.l.b16 %v3129
        %v3179 = vunpack.c.l.b16 %v3130
        %v3180 = vunpack.c.l.b16 %v3131
        %v3181 = vunpack.c.l.b16 %v3132
        %v3182 = vunpack.c.l.b16 %v3133
        %v3183 = vunpack.c.l.b16 %v3134
        %v3184 = vunpack.c.l.b16 %v3135
        %v3185 = vunpack.c.l.b16 %v3136
        %v3186 = vpack.c.b16 %v3171, %v3170
        %v3187 = vpack.c.b16 %v3173, %v3172
        %v3188 = vpack.c.b16 %v3175, %v3174
        %v3189 = vpack.c.b16 %v3177, %v3176
        %v3190 = vpack.c.b16 %v3179, %v3178
        %v3191 = vpack.c.b16 %v3181, %v3180
        %v3192 = vpack.c.b16 %v3183, %v3182
        %v3193 = vpack.c.b16 %v3185, %v3184
        %v3218 = vunpack.c.l.b16 %v3138
        %v3219 = vunpack.c.l.b16 %v3139
        %v3220 = vunpack.c.l.b16 %v3140
        %v3221 = vunpack.c.l.b16 %v3141
        %v3222 = vunpack.c.l.b16 %v3142
        %v3223 = vunpack.c.l.b16 %v3143
        %v3224 = vunpack.c.l.b16 %v3144
        %v3225 = vunpack.c.l.b16 %v3145
        %v3226 = vunpack.c.l.b16 %v3146
        %v3227 = vunpack.c.l.b16 %v3147
        %v3228 = vunpack.c.l.b16 %v3148
        %v3229 = vunpack.c.l.b16 %v3149
        %v3230 = vunpack.c.l.b16 %v3150
        %v3231 = vunpack.c.l.b16 %v3151
        %v3232 = vunpack.c.l.b16 %v3152
        %v3233 = vunpack.c.l.b16 %v3153
        %v3234 = vpack.c.b16 %v3219, %v3218
        %v3235 = vpack.c.b16 %v3221, %v3220
        %v3236 = vpack.c.b16 %v3223, %v3222
        %v3237 = vpack.c.b16 %v3225, %v3224
        %v3238 = vpack.c.b16 %v3227, %v3226
        %v3239 = vpack.c.b16 %v3229, %v3228
        %v3240 = vpack.c.b16 %v3231, %v3230
        %v3241 = vpack.c.b16 %v3233, %v3232
        %3250 = vmatprep.subr.bf16.mxu0 0
        %3251 = vmatpush1.bf16.msra.mxu0 %v3241
        %3252 = vmatprep.subr.bf16.mxu0 0
        %3253 = vmatpush1.bf16.msra.mxu0 %v3240
        %3254 = vmatprep.subr.bf16.mxu0 0
        %3255 = vmatpush1.bf16.msra.mxu0 %v3239
        %3256 = vmatprep.subr.bf16.mxu0 0
        %3257 = vmatpush1.bf16.msra.mxu0 %v3238
        %3258 = vmatprep.subr.bf16.mxu0 0
        %3259 = vmatpush1.bf16.msra.mxu0 %v3237
        %3260 = vmatprep.subr.bf16.mxu0 0
        %3261 = vmatpush1.bf16.msra.mxu0 %v3236
        %3262 = vmatprep.subr.bf16.mxu0 0
        %3263 = vmatpush1.bf16.msra.mxu0 %v3235
        %3264 = vmatprep.subr.bf16.mxu0 0
        %3265 = vmatpush1.bf16.msra.mxu0 %v3234
        %3266 = vmatprep.subr.bf16.mxu0 0
        %3267 = vmatpush2.bf16.msra.mxu0 0
        %3268 = vmatprep.subr.bf16.mxu0 0
        %3269 = vmatpush2.bf16.msra.mxu0 0
        %3270 = vmatprep.subr.bf16.mxu0 0
        %3271 = vmatpush2.bf16.msra.mxu0 0
        %3272 = vmatprep.subr.bf16.mxu0 0
        %3273 = vmatpush2.bf16.msra.mxu0 0
        %3274 = vmatprep.subr.bf16.mxu0 0
        %3275 = vmatpush2.bf16.msra.mxu0 0
        %3276 = vmatprep.subr.bf16.mxu0 0
        %3277 = vmatpush2.bf16.msra.mxu0 0
        %3278 = vmatprep.subr.bf16.mxu0 0
        %3279 = vmatpush2.bf16.msra.mxu0 0
        %3280 = vmatprep.subr.bf16.mxu0 0
        %3281 = vmatpush2.bf16.msra.mxu0 0
        %3282 = vmatprep.mubr.bf16.mxu0 0
        %3283 = vmatmul.mubr.bf16.gmra.mxu0 %v3186
        %v3284 = vpop.f32.mrf.mxu0
        %v3285 = vadd.f32 0.0, %v3284
        %v3286 = vpop.f32.mrf.mxu0
        %v3287 = vpop.f32.mrf.mxu0
        %v3288 = vadd.f32 0.0, %v3287
        %v3289 = vpop.f32.mrf.mxu0
        %3290 = vmatprep.mubr.bf16.mxu0 0
        %3291 = vmatmul.mubr.bf16.gmra.mxu0 %v3187
        %v3292 = vpop.f32.mrf.mxu0
        %v3293 = vadd.f32 0.0, %v3292
        %v3294 = vpop.f32.mrf.mxu0
        %v3295 = vpop.f32.mrf.mxu0
        %v3296 = vadd.f32 0.0, %v3295
        %v3297 = vpop.f32.mrf.mxu0
        %3298 = vmatprep.mubr.bf16.mxu0 0
        %3299 = vmatmul.mubr.bf16.gmra.mxu0 %v3188
        %v3300 = vpop.f32.mrf.mxu0
        %v3301 = vadd.f32 0.0, %v3300
        %v3302 = vpop.f32.mrf.mxu0
        %v3303 = vpop.f32.mrf.mxu0
        %v3304 = vadd.f32 0.0, %v3303
        %v3305 = vpop.f32.mrf.mxu0
        %3306 = vmatprep.mubr.bf16.mxu0 0
        %3307 = vmatmul.mubr.bf16.gmra.mxu0 %v3189
        %v3308 = vpop.f32.mrf.mxu0
        %v3309 = vadd.f32 0.0, %v3308
        %v3310 = vpop.f32.mrf.mxu0
        %v3311 = vpop.f32.mrf.mxu0
        %v3312 = vadd.f32 0.0, %v3311
        %v3313 = vpop.f32.mrf.mxu0
        %3314 = vmatprep.mubr.bf16.mxu0 0
        %3315 = vmatmul.mubr.bf16.gmra.mxu0 %v3190
        %v3316 = vpop.f32.mrf.mxu0
        %v3317 = vadd.f32 0.0, %v3316
        %v3318 = vpop.f32.mrf.mxu0
        %v3319 = vpop.f32.mrf.mxu0
        %v3320 = vadd.f32 0.0, %v3319
        %v3321 = vpop.f32.mrf.mxu0
        %3322 = vmatprep.mubr.bf16.mxu0 0
        %3323 = vmatmul.mubr.bf16.gmra.mxu0 %v3191
        %v3324 = vpop.f32.mrf.mxu0
        %v3325 = vadd.f32 0.0, %v3324
        %v3326 = vpop.f32.mrf.mxu0
        %v3327 = vpop.f32.mrf.mxu0
        %v3328 = vadd.f32 0.0, %v3327
        %v3329 = vpop.f32.mrf.mxu0
        %3330 = vmatprep.mubr.bf16.mxu0 0
        %3331 = vmatmul.mubr.bf16.gmra.mxu0 %v3192
        %v3332 = vpop.f32.mrf.mxu0
        %v3333 = vadd.f32 0.0, %v3332
        %v3334 = vpop.f32.mrf.mxu0
        %v3335 = vpop.f32.mrf.mxu0
        %v3336 = vadd.f32 0.0, %v3335
        %v3337 = vpop.f32.mrf.mxu0
        %3338 = vmatprep.mubr.bf16.mxu0 0
        %3339 = vmatmul.mubr.bf16.gmra.mxu0 %v3193
        %v3340 = vpop.f32.mrf.mxu0
        %v3341 = vadd.f32 0.0, %v3340
        %v3342 = vpop.f32.mrf.mxu0
        %v3343 = vpop.f32.mrf.mxu0
        %v3344 = vadd.f32 0.0, %v3343
        %v3345 = vpop.f32.mrf.mxu0
        %3346 = vdwg.mxu0
        %v3347 = vadd.f32 %v3101, %v3285
        %v3348 = vadd.f32 %v3102, %v3288
        %v3349 = vadd.f32 %v3103, %v3293
        %v3350 = vadd.f32 %v3104, %v3296
        %v3351 = vadd.f32 %v3105, %v3301
        %v3352 = vadd.f32 %v3106, %v3304
        %v3353 = vadd.f32 %v3107, %v3309
        %v3354 = vadd.f32 %v3108, %v3312
        %v3355 = vadd.f32 %v3109, %v3317
        %v3356 = vadd.f32 %v3110, %v3320
        %v3357 = vadd.f32 %v3111, %v3325
        %v3358 = vadd.f32 %v3112, %v3328
        %v3359 = vadd.f32 %v3113, %v3333
        %v3360 = vadd.f32 %v3114, %v3336
        %v3361 = vadd.f32 %v3115, %v3341
        %v3362 = vadd.f32 %v3116, %v3344
        %s3363 = sadd.s32 %s3118, 36
        %s3364 = smul.addr %s3363, 4
        %s3365 = scalar_lea.vmem [#allocation2], %s3364
        %v3366 = vld [vmem:[%s3365] sm:$0xf]
        %v3367 = vld [vmem:[%s3365 + $0x4] sm:$0xf]
        %v3368 = vld [vmem:[%s3365 + $0x8] sm:$0xf]
        %v3369 = vld [vmem:[%s3365 + $0xc] sm:$0xf]
        %v3370 = vld [vmem:[%s3365 + $0x10] sm:$0xf]
        %v3371 = vld [vmem:[%s3365 + $0x14] sm:$0xf]
        %v3372 = vld [vmem:[%s3365 + $0x18] sm:$0xf]
        %v3373 = vld [vmem:[%s3365 + $0x1c] sm:$0xf]
        %v3374 = vld [vmem:[%s3365 + $0x20] sm:$0xf]
        %v3375 = vld [vmem:[%s3365 + $0x24] sm:$0xf]
        %v3376 = vld [vmem:[%s3365 + $0x28] sm:$0xf]
        %v3377 = vld [vmem:[%s3365 + $0x2c] sm:$0xf]
        %v3378 = vld [vmem:[%s3365 + $0x30] sm:$0xf]
        %v3379 = vld [vmem:[%s3365 + $0x34] sm:$0xf]
        %v3380 = vld [vmem:[%s3365 + $0x38] sm:$0xf]
        %v3381 = vld [vmem:[%s3365 + $0x3c] sm:$0xf]
        %s3382 = scalar_lea.vmem %s3, 448
        %v3383 = vld [vmem:[%s3382] sm:$0xf]
        %v3384 = vld [vmem:[%s3382 + $0x4] sm:$0xf]
        %v3385 = vld [vmem:[%s3382 + $0x8] sm:$0xf]
        %v3386 = vld [vmem:[%s3382 + $0xc] sm:$0xf]
        %v3387 = vld [vmem:[%s3382 + $0x10] sm:$0xf]
        %v3388 = vld [vmem:[%s3382 + $0x14] sm:$0xf]
        %v3389 = vld [vmem:[%s3382 + $0x18] sm:$0xf]
        %v3390 = vld [vmem:[%s3382 + $0x1c] sm:$0xf]
        %v3391 = vld [vmem:[%s3382 + $0x20] sm:$0xf]
        %v3392 = vld [vmem:[%s3382 + $0x24] sm:$0xf]
        %v3393 = vld [vmem:[%s3382 + $0x28] sm:$0xf]
        %v3394 = vld [vmem:[%s3382 + $0x2c] sm:$0xf]
        %v3395 = vld [vmem:[%s3382 + $0x30] sm:$0xf]
        %v3396 = vld [vmem:[%s3382 + $0x34] sm:$0xf]
        %v3397 = vld [vmem:[%s3382 + $0x38] sm:$0xf]
        %v3398 = vld [vmem:[%s3382 + $0x3c] sm:$0xf]
        %v3415 = vunpack.c.l.b16 %v3366
        %v3416 = vunpack.c.l.b16 %v3367
        %v3417 = vunpack.c.l.b16 %v3368
        %v3418 = vunpack.c.l.b16 %v3369
        %v3419 = vunpack.c.l.b16 %v3370
        %v3420 = vunpack.c.l.b16 %v3371
        %v3421 = vunpack.c.l.b16 %v3372
        %v3422 = vunpack.c.l.b16 %v3373
        %v3423 = vunpack.c.l.b16 %v3374
        %v3424 = vunpack.c.l.b16 %v3375
        %v3425 = vunpack.c.l.b16 %v3376
        %v3426 = vunpack.c.l.b16 %v3377
        %v3427 = vunpack.c.l.b16 %v3378
        %v3428 = vunpack.c.l.b16 %v3379
        %v3429 = vunpack.c.l.b16 %v3380
        %v3430 = vunpack.c.l.b16 %v3381
        %v3431 = vpack.c.b16 %v3416, %v3415
        %v3432 = vpack.c.b16 %v3418, %v3417
        %v3433 = vpack.c.b16 %v3420, %v3419
        %v3434 = vpack.c.b16 %v3422, %v3421
        %v3435 = vpack.c.b16 %v3424, %v3423
        %v3436 = vpack.c.b16 %v3426, %v3425
        %v3437 = vpack.c.b16 %v3428, %v3427
        %v3438 = vpack.c.b16 %v3430, %v3429
        %v3463 = vunpack.c.l.b16 %v3383
        %v3464 = vunpack.c.l.b16 %v3384
        %v3465 = vunpack.c.l.b16 %v3385
        %v3466 = vunpack.c.l.b16 %v3386
        %v3467 = vunpack.c.l.b16 %v3387
        %v3468 = vunpack.c.l.b16 %v3388
        %v3469 = vunpack.c.l.b16 %v3389
        %v3470 = vunpack.c.l.b16 %v3390
        %v3471 = vunpack.c.l.b16 %v3391
        %v3472 = vunpack.c.l.b16 %v3392
        %v3473 = vunpack.c.l.b16 %v3393
        %v3474 = vunpack.c.l.b16 %v3394
        %v3475 = vunpack.c.l.b16 %v3395
        %v3476 = vunpack.c.l.b16 %v3396
        %v3477 = vunpack.c.l.b16 %v3397
        %v3478 = vunpack.c.l.b16 %v3398
        %v3479 = vpack.c.b16 %v3464, %v3463
        %v3480 = vpack.c.b16 %v3466, %v3465
        %v3481 = vpack.c.b16 %v3468, %v3467
        %v3482 = vpack.c.b16 %v3470, %v3469
        %v3483 = vpack.c.b16 %v3472, %v3471
        %v3484 = vpack.c.b16 %v3474, %v3473
        %v3485 = vpack.c.b16 %v3476, %v3475
        %v3486 = vpack.c.b16 %v3478, %v3477
        %3495 = vmatprep.subr.bf16.mxu0 0
        %3496 = vmatpush1.bf16.msra.mxu0 %v3486
        %3497 = vmatprep.subr.bf16.mxu0 0
        %3498 = vmatpush1.bf16.msra.mxu0 %v3485
        %3499 = vmatprep.subr.bf16.mxu0 0
        %3500 = vmatpush1.bf16.msra.mxu0 %v3484
        %3501 = vmatprep.subr.bf16.mxu0 0
        %3502 = vmatpush1.bf16.msra.mxu0 %v3483
        %3503 = vmatprep.subr.bf16.mxu0 0
        %3504 = vmatpush1.bf16.msra.mxu0 %v3482
        %3505 = vmatprep.subr.bf16.mxu0 0
        %3506 = vmatpush1.bf16.msra.mxu0 %v3481
        %3507 = vmatprep.subr.bf16.mxu0 0
        %3508 = vmatpush1.bf16.msra.mxu0 %v3480
        %3509 = vmatprep.subr.bf16.mxu0 0
        %3510 = vmatpush1.bf16.msra.mxu0 %v3479
        %3511 = vmatprep.subr.bf16.mxu0 0
        %3512 = vmatpush2.bf16.msra.mxu0 0
        %3513 = vmatprep.subr.bf16.mxu0 0
        %3514 = vmatpush2.bf16.msra.mxu0 0
        %3515 = vmatprep.subr.bf16.mxu0 0
        %3516 = vmatpush2.bf16.msra.mxu0 0
        %3517 = vmatprep.subr.bf16.mxu0 0
        %3518 = vmatpush2.bf16.msra.mxu0 0
        %3519 = vmatprep.subr.bf16.mxu0 0
        %3520 = vmatpush2.bf16.msra.mxu0 0
        %3521 = vmatprep.subr.bf16.mxu0 0
        %3522 = vmatpush2.bf16.msra.mxu0 0
        %3523 = vmatprep.subr.bf16.mxu0 0
        %3524 = vmatpush2.bf16.msra.mxu0 0
        %3525 = vmatprep.subr.bf16.mxu0 0
        %3526 = vmatpush2.bf16.msra.mxu0 0
        %3527 = vmatprep.mubr.bf16.mxu0 0
        %3528 = vmatmul.mubr.bf16.gmra.mxu0 %v3431
        %v3529 = vpop.f32.mrf.mxu0
        %v3530 = vadd.f32 0.0, %v3529
        %v3531 = vpop.f32.mrf.mxu0
        %v3532 = vpop.f32.mrf.mxu0
        %v3533 = vadd.f32 0.0, %v3532
        %v3534 = vpop.f32.mrf.mxu0
        %3535 = vmatprep.mubr.bf16.mxu0 0
        %3536 = vmatmul.mubr.bf16.gmra.mxu0 %v3432
        %v3537 = vpop.f32.mrf.mxu0
        %v3538 = vadd.f32 0.0, %v3537
        %v3539 = vpop.f32.mrf.mxu0
        %v3540 = vpop.f32.mrf.mxu0
        %v3541 = vadd.f32 0.0, %v3540
        %v3542 = vpop.f32.mrf.mxu0
        %3543 = vmatprep.mubr.bf16.mxu0 0
        %3544 = vmatmul.mubr.bf16.gmra.mxu0 %v3433
        %v3545 = vpop.f32.mrf.mxu0
        %v3546 = vadd.f32 0.0, %v3545
        %v3547 = vpop.f32.mrf.mxu0
        %v3548 = vpop.f32.mrf.mxu0
        %v3549 = vadd.f32 0.0, %v3548
        %v3550 = vpop.f32.mrf.mxu0
        %3551 = vmatprep.mubr.bf16.mxu0 0
        %3552 = vmatmul.mubr.bf16.gmra.mxu0 %v3434
        %v3553 = vpop.f32.mrf.mxu0
        %v3554 = vadd.f32 0.0, %v3553
        %v3555 = vpop.f32.mrf.mxu0
        %v3556 = vpop.f32.mrf.mxu0
        %v3557 = vadd.f32 0.0, %v3556
        %v3558 = vpop.f32.mrf.mxu0
        %3559 = vmatprep.mubr.bf16.mxu0 0
        %3560 = vmatmul.mubr.bf16.gmra.mxu0 %v3435
        %v3561 = vpop.f32.mrf.mxu0
        %v3562 = vadd.f32 0.0, %v3561
        %v3563 = vpop.f32.mrf.mxu0
        %v3564 = vpop.f32.mrf.mxu0
        %v3565 = vadd.f32 0.0, %v3564
        %v3566 = vpop.f32.mrf.mxu0
        %3567 = vmatprep.mubr.bf16.mxu0 0
        %3568 = vmatmul.mubr.bf16.gmra.mxu0 %v3436
        %v3569 = vpop.f32.mrf.mxu0
        %v3570 = vadd.f32 0.0, %v3569
        %v3571 = vpop.f32.mrf.mxu0
        %v3572 = vpop.f32.mrf.mxu0
        %v3573 = vadd.f32 0.0, %v3572
        %v3574 = vpop.f32.mrf.mxu0
        %3575 = vmatprep.mubr.bf16.mxu0 0
        %3576 = vmatmul.mubr.bf16.gmra.mxu0 %v3437
        %v3577 = vpop.f32.mrf.mxu0
        %v3578 = vadd.f32 0.0, %v3577
        %v3579 = vpop.f32.mrf.mxu0
        %v3580 = vpop.f32.mrf.mxu0
        %v3581 = vadd.f32 0.0, %v3580
        %v3582 = vpop.f32.mrf.mxu0
        %3583 = vmatprep.mubr.bf16.mxu0 0
        %3584 = vmatmul.mubr.bf16.gmra.mxu0 %v3438
        %v3585 = vpop.f32.mrf.mxu0
        %v3586 = vadd.f32 0.0, %v3585
        %v3587 = vpop.f32.mrf.mxu0
        %v3588 = vpop.f32.mrf.mxu0
        %v3589 = vadd.f32 0.0, %v3588
        %v3590 = vpop.f32.mrf.mxu0
        %3591 = vdwg.mxu0
        %v3592 = vadd.f32 %v3347, %v3530
        %v3593 = vadd.f32 %v3348, %v3533
        %v3594 = vadd.f32 %v3349, %v3538
        %v3595 = vadd.f32 %v3350, %v3541
        %v3596 = vadd.f32 %v3351, %v3546
        %v3597 = vadd.f32 %v3352, %v3549
        %v3598 = vadd.f32 %v3353, %v3554
        %v3599 = vadd.f32 %v3354, %v3557
        %v3600 = vadd.f32 %v3355, %v3562
        %v3601 = vadd.f32 %v3356, %v3565
        %v3602 = vadd.f32 %v3357, %v3570
        %v3603 = vadd.f32 %v3358, %v3573
        %v3604 = vadd.f32 %v3359, %v3578
        %v3605 = vadd.f32 %v3360, %v3581
        %v3606 = vadd.f32 %v3361, %v3586
        %v3607 = vadd.f32 %v3362, %v3589
        %s3608 = sadd.s32 %s3118, 72
        %s3609 = smul.addr %s3608, 4
        %s3610 = scalar_lea.vmem [#allocation2], %s3609
        %v3611 = vld [vmem:[%s3610] sm:$0xf]
        %v3612 = vld [vmem:[%s3610 + $0x4] sm:$0xf]
        %v3613 = vld [vmem:[%s3610 + $0x8] sm:$0xf]
        %v3614 = vld [vmem:[%s3610 + $0xc] sm:$0xf]
        %v3615 = vld [vmem:[%s3610 + $0x10] sm:$0xf]
        %v3616 = vld [vmem:[%s3610 + $0x14] sm:$0xf]
        %v3617 = vld [vmem:[%s3610 + $0x18] sm:$0xf]
        %v3618 = vld [vmem:[%s3610 + $0x1c] sm:$0xf]
        %v3619 = vld [vmem:[%s3610 + $0x20] sm:$0xf]
        %v3620 = vld [vmem:[%s3610 + $0x24] sm:$0xf]
        %v3621 = vld [vmem:[%s3610 + $0x28] sm:$0xf]
        %v3622 = vld [vmem:[%s3610 + $0x2c] sm:$0xf]
        %v3623 = vld [vmem:[%s3610 + $0x30] sm:$0xf]
        %v3624 = vld [vmem:[%s3610 + $0x34] sm:$0xf]
        %v3625 = vld [vmem:[%s3610 + $0x38] sm:$0xf]
        %v3626 = vld [vmem:[%s3610 + $0x3c] sm:$0xf]
        %s3627 = scalar_lea.vmem %s3, 512
        %v3628 = vld [vmem:[%s3627] sm:$0xf]
        %v3629 = vld [vmem:[%s3627 + $0x4] sm:$0xf]
        %v3630 = vld [vmem:[%s3627 + $0x8] sm:$0xf]
        %v3631 = vld [vmem:[%s3627 + $0xc] sm:$0xf]
        %v3632 = vld [vmem:[%s3627 + $0x10] sm:$0xf]
        %v3633 = vld [vmem:[%s3627 + $0x14] sm:$0xf]
        %v3634 = vld [vmem:[%s3627 + $0x18] sm:$0xf]
        %v3635 = vld [vmem:[%s3627 + $0x1c] sm:$0xf]
        %v3636 = vld [vmem:[%s3627 + $0x20] sm:$0xf]
        %v3637 = vld [vmem:[%s3627 + $0x24] sm:$0xf]
        %v3638 = vld [vmem:[%s3627 + $0x28] sm:$0xf]
        %v3639 = vld [vmem:[%s3627 + $0x2c] sm:$0xf]
        %v3640 = vld [vmem:[%s3627 + $0x30] sm:$0xf]
        %v3641 = vld [vmem:[%s3627 + $0x34] sm:$0xf]
        %v3642 = vld [vmem:[%s3627 + $0x38] sm:$0xf]
        %v3643 = vld [vmem:[%s3627 + $0x3c] sm:$0xf]
        %v3660 = vunpack.c.l.b16 %v3611
        %v3661 = vunpack.c.l.b16 %v3612
        %v3662 = vunpack.c.l.b16 %v3613
        %v3663 = vunpack.c.l.b16 %v3614
        %v3664 = vunpack.c.l.b16 %v3615
        %v3665 = vunpack.c.l.b16 %v3616
        %v3666 = vunpack.c.l.b16 %v3617
        %v3667 = vunpack.c.l.b16 %v3618
        %v3668 = vunpack.c.l.b16 %v3619
        %v3669 = vunpack.c.l.b16 %v3620
        %v3670 = vunpack.c.l.b16 %v3621
        %v3671 = vunpack.c.l.b16 %v3622
        %v3672 = vunpack.c.l.b16 %v3623
        %v3673 = vunpack.c.l.b16 %v3624
        %v3674 = vunpack.c.l.b16 %v3625
        %v3675 = vunpack.c.l.b16 %v3626
        %v3676 = vpack.c.b16 %v3661, %v3660
        %v3677 = vpack.c.b16 %v3663, %v3662
        %v3678 = vpack.c.b16 %v3665, %v3664
        %v3679 = vpack.c.b16 %v3667, %v3666
        %v3680 = vpack.c.b16 %v3669, %v3668
        %v3681 = vpack.c.b16 %v3671, %v3670
        %v3682 = vpack.c.b16 %v3673, %v3672
        %v3683 = vpack.c.b16 %v3675, %v3674
        %v3708 = vunpack.c.l.b16 %v3628
        %v3709 = vunpack.c.l.b16 %v3629
        %v3710 = vunpack.c.l.b16 %v3630
        %v3711 = vunpack.c.l.b16 %v3631
        %v3712 = vunpack.c.l.b16 %v3632
        %v3713 = vunpack.c.l.b16 %v3633
        %v3714 = vunpack.c.l.b16 %v3634
        %v3715 = vunpack.c.l.b16 %v3635
        %v3716 = vunpack.c.l.b16 %v3636
        %v3717 = vunpack.c.l.b16 %v3637
        %v3718 = vunpack.c.l.b16 %v3638
        %v3719 = vunpack.c.l.b16 %v3639
        %v3720 = vunpack.c.l.b16 %v3640
        %v3721 = vunpack.c.l.b16 %v3641
        %v3722 = vunpack.c.l.b16 %v3642
        %v3723 = vunpack.c.l.b16 %v3643
        %v3724 = vpack.c.b16 %v3709, %v3708
        %v3725 = vpack.c.b16 %v3711, %v3710
        %v3726 = vpack.c.b16 %v3713, %v3712
        %v3727 = vpack.c.b16 %v3715, %v3714
        %v3728 = vpack.c.b16 %v3717, %v3716
        %v3729 = vpack.c.b16 %v3719, %v3718
        %v3730 = vpack.c.b16 %v3721, %v3720
        %v3731 = vpack.c.b16 %v3723, %v3722
        %3740 = vmatprep.subr.bf16.mxu0 0
        %3741 = vmatpush1.bf16.msra.mxu0 %v3731
        %3742 = vmatprep.subr.bf16.mxu0 0
        %3743 = vmatpush1.bf16.msra.mxu0 %v3730
        %3744 = vmatprep.subr.bf16.mxu0 0
        %3745 = vmatpush1.bf16.msra.mxu0 %v3729
        %3746 = vmatprep.subr.bf16.mxu0 0
        %3747 = vmatpush1.bf16.msra.mxu0 %v3728
        %3748 = vmatprep.subr.bf16.mxu0 0
        %3749 = vmatpush1.bf16.msra.mxu0 %v3727
        %3750 = vmatprep.subr.bf16.mxu0 0
        %3751 = vmatpush1.bf16.msra.mxu0 %v3726
        %3752 = vmatprep.subr.bf16.mxu0 0
        %3753 = vmatpush1.bf16.msra.mxu0 %v3725
        %3754 = vmatprep.subr.bf16.mxu0 0
        %3755 = vmatpush1.bf16.msra.mxu0 %v3724
        %3756 = vmatprep.subr.bf16.mxu0 0
        %3757 = vmatpush2.bf16.msra.mxu0 0
        %3758 = vmatprep.subr.bf16.mxu0 0
        %3759 = vmatpush2.bf16.msra.mxu0 0
        %3760 = vmatprep.subr.bf16.mxu0 0
        %3761 = vmatpush2.bf16.msra.mxu0 0
        %3762 = vmatprep.subr.bf16.mxu0 0
        %3763 = vmatpush2.bf16.msra.mxu0 0
        %3764 = vmatprep.subr.bf16.mxu0 0
        %3765 = vmatpush2.bf16.msra.mxu0 0
        %3766 = vmatprep.subr.bf16.mxu0 0
        %3767 = vmatpush2.bf16.msra.mxu0 0
        %3768 = vmatprep.subr.bf16.mxu0 0
        %3769 = vmatpush2.bf16.msra.mxu0 0
        %3770 = vmatprep.subr.bf16.mxu0 0
        %3771 = vmatpush2.bf16.msra.mxu0 0
        %3772 = vmatprep.mubr.bf16.mxu0 0
        %3773 = vmatmul.mubr.bf16.gmra.mxu0 %v3676
        %v3774 = vpop.f32.mrf.mxu0
        %v3775 = vadd.f32 0.0, %v3774
        %v3776 = vpop.f32.mrf.mxu0
        %v3777 = vpop.f32.mrf.mxu0
        %v3778 = vadd.f32 0.0, %v3777
        %v3779 = vpop.f32.mrf.mxu0
        %3780 = vmatprep.mubr.bf16.mxu0 0
        %3781 = vmatmul.mubr.bf16.gmra.mxu0 %v3677
        %v3782 = vpop.f32.mrf.mxu0
        %v3783 = vadd.f32 0.0, %v3782
        %v3784 = vpop.f32.mrf.mxu0
        %v3785 = vpop.f32.mrf.mxu0
        %v3786 = vadd.f32 0.0, %v3785
        %v3787 = vpop.f32.mrf.mxu0
        %3788 = vmatprep.mubr.bf16.mxu0 0
        %3789 = vmatmul.mubr.bf16.gmra.mxu0 %v3678
        %v3790 = vpop.f32.mrf.mxu0
        %v3791 = vadd.f32 0.0, %v3790
        %v3792 = vpop.f32.mrf.mxu0
        %v3793 = vpop.f32.mrf.mxu0
        %v3794 = vadd.f32 0.0, %v3793
        %v3795 = vpop.f32.mrf.mxu0
        %3796 = vmatprep.mubr.bf16.mxu0 0
        %3797 = vmatmul.mubr.bf16.gmra.mxu0 %v3679
        %v3798 = vpop.f32.mrf.mxu0
        %v3799 = vadd.f32 0.0, %v3798
        %v3800 = vpop.f32.mrf.mxu0
        %v3801 = vpop.f32.mrf.mxu0
        %v3802 = vadd.f32 0.0, %v3801
        %v3803 = vpop.f32.mrf.mxu0
        %3804 = vmatprep.mubr.bf16.mxu0 0
        %3805 = vmatmul.mubr.bf16.gmra.mxu0 %v3680
        %v3806 = vpop.f32.mrf.mxu0
        %v3807 = vadd.f32 0.0, %v3806
        %v3808 = vpop.f32.mrf.mxu0
        %v3809 = vpop.f32.mrf.mxu0
        %v3810 = vadd.f32 0.0, %v3809
        %v3811 = vpop.f32.mrf.mxu0
        %3812 = vmatprep.mubr.bf16.mxu0 0
        %3813 = vmatmul.mubr.bf16.gmra.mxu0 %v3681
        %v3814 = vpop.f32.mrf.mxu0
        %v3815 = vadd.f32 0.0, %v3814
        %v3816 = vpop.f32.mrf.mxu0
        %v3817 = vpop.f32.mrf.mxu0
        %v3818 = vadd.f32 0.0, %v3817
        %v3819 = vpop.f32.mrf.mxu0
        %3820 = vmatprep.mubr.bf16.mxu0 0
        %3821 = vmatmul.mubr.bf16.gmra.mxu0 %v3682
        %v3822 = vpop.f32.mrf.mxu0
        %v3823 = vadd.f32 0.0, %v3822
        %v3824 = vpop.f32.mrf.mxu0
        %v3825 = vpop.f32.mrf.mxu0
        %v3826 = vadd.f32 0.0, %v3825
        %v3827 = vpop.f32.mrf.mxu0
        %3828 = vmatprep.mubr.bf16.mxu0 0
        %3829 = vmatmul.mubr.bf16.gmra.mxu0 %v3683
        %v3830 = vpop.f32.mrf.mxu0
        %v3831 = vadd.f32 0.0, %v3830
        %v3832 = vpop.f32.mrf.mxu0
        %v3833 = vpop.f32.mrf.mxu0
        %v3834 = vadd.f32 0.0, %v3833
        %v3835 = vpop.f32.mrf.mxu0
        %3836 = vdwg.mxu0
        %v3837 = vadd.f32 %v3592, %v3775
        %v3838 = vadd.f32 %v3593, %v3778
        %v3839 = vadd.f32 %v3594, %v3783
        %v3840 = vadd.f32 %v3595, %v3786
        %v3841 = vadd.f32 %v3596, %v3791
        %v3842 = vadd.f32 %v3597, %v3794
        %v3843 = vadd.f32 %v3598, %v3799
        %v3844 = vadd.f32 %v3599, %v3802
        %v3845 = vadd.f32 %v3600, %v3807
        %v3846 = vadd.f32 %v3601, %v3810
        %v3847 = vadd.f32 %v3602, %v3815
        %v3848 = vadd.f32 %v3603, %v3818
        %v3849 = vadd.f32 %v3604, %v3823
        %v3850 = vadd.f32 %v3605, %v3826
        %v3851 = vadd.f32 %v3606, %v3831
        %v3852 = vadd.f32 %v3607, %v3834
        %v3853 = vmax.f32 %v3837, 0.0
        %v3854 = vmax.f32 %v3838, 0.0
        %v3855 = vmax.f32 %v3839, 0.0
        %v3856 = vmax.f32 %v3840, 0.0
        %v3857 = vmax.f32 %v3841, 0.0
        %v3858 = vmax.f32 %v3842, 0.0
        %v3859 = vmax.f32 %v3843, 0.0
        %v3860 = vmax.f32 %v3844, 0.0
        %v3861 = vmax.f32 %v3845, 0.0
        %v3862 = vmax.f32 %v3846, 0.0
        %v3863 = vmax.f32 %v3847, 0.0
        %v3864 = vmax.f32 %v3848, 0.0
        %v3865 = vmax.f32 %v3849, 0.0
        %v3866 = vmax.f32 %v3850, 0.0
        %v3867 = vmax.f32 %v3851, 0.0
        %v3868 = vmax.f32 %v3852, 0.0
        %s3869 = smul.u32 %s1640, 16
        %s3870 = scalar_lea.vmem %s224, %s3869
        %3871 = vst [vmem:[%s3870] sm:$0xff] %v3853
        %3872 = vst [vmem:[%s3870 + $0x8] sm:$0xff] %v3854
        %3873 = vst [vmem:[%s3870 + $0x10] sm:$0xff] %v3855
        %3874 = vst [vmem:[%s3870 + $0x18] sm:$0xff] %v3856
        %3875 = vst [vmem:[%s3870 + $0x20] sm:$0xff] %v3857
        %3876 = vst [vmem:[%s3870 + $0x28] sm:$0xff] %v3858
        %3877 = vst [vmem:[%s3870 + $0x30] sm:$0xff] %v3859
        %3878 = vst [vmem:[%s3870 + $0x38] sm:$0xff] %v3860
        %3879 = vst [vmem:[%s3870 + $0x40] sm:$0xff] %v3861
        %3880 = vst [vmem:[%s3870 + $0x48] sm:$0xff] %v3862
        %3881 = vst [vmem:[%s3870 + $0x50] sm:$0xff] %v3863
        %3882 = vst [vmem:[%s3870 + $0x58] sm:$0xff] %v3864
        %3883 = vst [vmem:[%s3870 + $0x60] sm:$0xff] %v3865
        %3884 = vst [vmem:[%s3870 + $0x68] sm:$0xff] %v3866
        %3885 = vst [vmem:[%s3870 + $0x70] sm:$0xff] %v3867
        %3886 = vst [vmem:[%s3870 + $0x78] sm:$0xff] %v3868
      $region52: #{plainnet_basic_block_forward.1} parent=39 // loop_footer
        %s1639 = sadd.s32 1, %s1635
      $region53: #{plainnet_basic_block_forward.1} parent=39 // loop_footer_branch
        %1634 = sbr.rel target = $region49
      $region54: #{plainnet_basic_block_forward.1} parent=39 // loop_exit
        _
      %p3887 = scmp.lt.s32.totalorder %s16, 1
      %s3888 = scalar_select %p3887, %s16, 1
      %s3889 = smul.addr %s3888, 32
      %s3890 = smul.addr %s3889, 8
      %s3891 = scalar_lea.vmem %s5, %s3890
      // Predicated region
      $region55: #{plainnet_basic_block_forward.1} parent=39 // pred_check
        %p3892 = pneg %p144
      $region56: #{plainnet_basic_block_forward.1} parent=39 // pred_check_branch
        %3894 = sbr.rel (%p3892) target = $region58
      $region57: #{plainnet_basic_block_forward.1} parent=39 // pred_region
        _
      $region58: #{plainnet_basic_block_forward.1} parent=39 // pred_fallthru
        _
    $region40: #{plainnet_basic_block_forward.1} parent=5 // pred_fallthru
      _
    %p3895 = scmp.le.s32.totalorder 2, %s11
    // Predicated region
    $region59: #{plainnet_basic_block_forward.1} parent=5 // pred_check
      %p3896 = pneg %p3895
    $region60: #{plainnet_basic_block_forward.1} parent=5 // pred_check_branch
      %3898 = sbr.rel (%p3896) target = $region62
    $region61: #{plainnet_basic_block_forward.1} parent=5 // pred_region
      %s3899 = ssub.s32 %s11, 2
      // Predicated region
      $region63: #{plainnet_basic_block_forward.1} parent=61 // pred_check
        %p3900 = pneg %p150
      $region64: #{plainnet_basic_block_forward.1} parent=61 // pred_check_branch
        %3902 = sbr.rel (%p3900) target = $region66
      $region65: #{plainnet_basic_block_forward.1} parent=61 // pred_region
        %p3903 = scmp.lt.s32.totalorder %s17, 1
        %s3904 = scalar_select %p3903, %s17, 1
        %s3905 = smul.addr %s3904, 32
        %s3906 = smul.addr %s3905, 8
        %s3907 = scalar_lea.vmem %s5, %s3906
      $region66: #{plainnet_basic_block_forward.1} parent=61 // pred_fallthru
        _
    $region62: #{plainnet_basic_block_forward.1} parent=5 // pred_fallthru
      _
  $region6: #{plainnet_basic_block_forward.1} parent=0 // loop_footer
    %s15 = sadd.s32 1, %s11
  $region7: #{plainnet_basic_block_forward.1} parent=0 // loop_footer_branch
    %10 = sbr.rel target = $region3
  $region8: #{plainnet_basic_block_forward.1} parent=0 // loop_exit
    _

</llo_original>
